<compile_context>
chip_gen: v6e
topology: v6e:2x2x1
jax: 0.10.0
libtpu: 0.0.40
codegen_flags: <defaults>
</compile_context>

<pallas_src>
import functools

import jax
import jax.numpy as jnp
import numpy as np
from jax.experimental import pallas as pl
from jax.experimental.pallas import tpu as pltpu


# ----------------------------------------------------------------------------
# Fused whole-model kernel (one grid step == one batch element).
# ----------------------------------------------------------------------------
def _add_layernorm(x, y, gamma, beta, eps):
    # LayerNorm(x + y) over the last dim (PyTorch: biased var, eps inside rsqrt)
    z = x + y
    mu = jnp.mean(z, axis=-1, keepdims=True)
    zc = z - mu
    var = jnp.mean(zc * zc, axis=-1, keepdims=True)
    return zc * jax.lax.rsqrt(var + eps) * gamma + beta


def _encoder_kernel(src_ref, pe_ref, wi_ref, bi_ref,
                    inw_ref, inb_ref, outw_ref, outb_ref,
                    f1w_ref, f1b_ref, f2w_ref, f2b_ref,
                    ln1g_ref, ln1b_ref, ln2g_ref, ln2b_ref,
                    out_ref, *, num_layers, num_heads, head_dim,
                    embed_scale, attn_scale, eps):
    embed_dim = num_heads * head_dim

    x0 = src_ref[0]                                              # (S, In)

    # input_proj(src) * sqrt(E) + positional encoding
    # TODO(synk): reference PositionalEncoding defines no forward(); the
    # canonical `x + pe[:seq_len]` behavior is implemented here.
    x = jnp.dot(x0, wi_ref[...], preferred_element_type=jnp.float32)
    x = (x + bi_ref[...]) * embed_scale + pe_ref[...]            # (S, E)

    for li in range(num_layers):                                 # unrolled
        # ---------------- self-attention block (post-norm) ----------------
        inw = inw_ref[li]                                        # (E, 3E)
        inb = inb_ref[li]                                        # (1, 3E)
        outw = outw_ref[li]                                      # (E, E)
        outb = outb_ref[li]                                      # (1, E)

        qkv = jnp.dot(x, inw, preferred_element_type=jnp.float32) + inb  # (S, 3E)

        attn_out = None
        for h in range(num_heads):                               # unrolled
            lo = h * head_dim
            hi = lo + head_dim
            qh = qkv[:, lo:hi]                                   # (S, Dh)
            kh = qkv[:, embed_dim + lo:embed_dim + hi]           # (S, Dh)
            vh = qkv[:, 2 * embed_dim + lo:2 * embed_dim + hi]   # (S, Dh)

            # scores = qh @ kh.T (contract over Dh), stable softmax
            s = jax.lax.dot_general(
                qh, kh, (((1,), (1,)), ((), ())),
                preferred_element_type=jnp.float32) * attn_scale  # (S, S)
            m = jnp.max(s, axis=-1, keepdims=True)
            p = jnp.exp(s - m)
            p = p * pl.reciprocal(jnp.sum(p, axis=-1, keepdims=True), approx=True)

            oh = jnp.dot(p, vh, preferred_element_type=jnp.float32)  # (S, Dh)
            # fold output projection into the head loop:
            # concat(heads) @ Wout == sum_h head_h @ Wout[h*Dh:(h+1)*Dh, :]
            contrib = jnp.dot(oh, outw[lo:hi, :],
                              preferred_element_type=jnp.float32)    # (S, E)
            attn_out = contrib if attn_out is None else attn_out + contrib

        attn_out = attn_out + outb
        x = _add_layernorm(x, attn_out, ln1g_ref[li], ln1b_ref[li], eps)

        # ---------------------- feed-forward block -------------------------
        hdn = jnp.dot(x, f1w_ref[li], preferred_element_type=jnp.float32) + f1b_ref[li]
        hdn = jnp.maximum(hdn, 0.0)
        ff = jnp.dot(hdn, f2w_ref[li], preferred_element_type=jnp.float32) + f2b_ref[li]
        x = _add_layernorm(x, ff, ln2g_ref[li], ln2b_ref[li], eps)

    # mean over seq (== permute + AdaptiveAvgPool1d(1) + squeeze)
    pooled = jnp.mean(x, axis=0, keepdims=True)                  # (1, E)
    out_ref[...] = pooled.reshape(1, 1, pooled.shape[-1])


def transformers_encoder_forward(src, params):
    B, S, In = src.shape
    E = int(params["embed_dim"])
    H = int(params["num_heads"])
    L = int(params["num_layers"])
    Dh = E // H
    Hid = int(params["ff1_w"].shape[-1])

    pe = params["pe"][:S]                                        # (S, E)

    kernel = functools.partial(
        _encoder_kernel,
        num_layers=L, num_heads=H, head_dim=Dh,
        embed_scale=float(E) ** 0.5,
        attn_scale=1.0 / float(Dh) ** 0.5,
        eps=1e-5)

    def const_spec(shape):
        nd = len(shape)
        return pl.BlockSpec(shape, lambda b, _nd=nd: (0,) * _nd)

    in_specs = [
        pl.BlockSpec((1, S, In), lambda b: (b, 0, 0)),           # src (per batch)
        const_spec((S, E)),                                      # positional enc
        const_spec((In, E)), const_spec((1, E)),                 # input proj
        const_spec((L, E, 3 * E)), const_spec((L, 1, 3 * E)),    # qkv in-proj
        const_spec((L, E, E)), const_spec((L, 1, E)),            # attn out-proj
        const_spec((L, E, Hid)), const_spec((L, 1, Hid)),        # ff1
        const_spec((L, Hid, E)), const_spec((L, 1, E)),          # ff2
        const_spec((L, 1, E)), const_spec((L, 1, E)),            # ln1 gamma/beta
        const_spec((L, 1, E)), const_spec((L, 1, E)),            # ln2 gamma/beta
    ]

    out3 = pl.pallas_call(
        kernel,
        out_shape=jax.ShapeDtypeStruct((B, 1, E), jnp.float32),
        grid_spec=pltpu.PrefetchScalarGridSpec(
            num_scalar_prefetch=0,
            grid=(B,),
            in_specs=in_specs,
            out_specs=pl.BlockSpec((1, 1, E), lambda b: (b, 0, 0)),
        ),
        compiler_params=pltpu.CompilerParams(
            dimension_semantics=("parallel",)),
    )(src, pe,
      params["input_proj_w"], params["input_proj_b"],
      params["in_proj_w"], params["in_proj_b"],
      params["out_proj_w"], params["out_proj_b"],
      params["ff1_w"], params["ff1_b"],
      params["ff2_w"], params["ff2_b"],
      params["ln1_g"], params["ln1_b"],
      params["ln2_g"], params["ln2_b"])

    return out3[:, 0, :]                                         # (B, E)


# ----------------------------------------------------------------------------
# Parameter construction (deterministic synthetic init; shapes match module).
# ----------------------------------------------------------------------------
def make_positional_encoding(embed_dim, max_len):
    pos = np.arange(0, max_len, dtype=np.float32)[:, None]
    div = np.exp(np.arange(0, embed_dim, 2, dtype=np.float32)
                 * (-np.log(10000.0) / embed_dim))
    pe = np.zeros((max_len, embed_dim), dtype=np.float32)
    pe[:, 0::2] = np.sin(pos * div)
    if embed_dim % 2 == 1:
        pe[:, 1::2] = np.cos(pos * div[:-1])
    else:
        pe[:, 1::2] = np.cos(pos * div)
    return jnp.asarray(pe)


def init_linear_params(key, fan_in, fan_out):
    kw, kb = jax.random.split(key)
    w = jax.random.normal(kw, (fan_in, fan_out), jnp.float32) / np.sqrt(fan_in)
    b = 0.01 * jax.random.normal(kb, (1, fan_out), jnp.float32)
    return w, b


def init_params(key, input_dim, embed_dim, num_heads, hidden_dim, num_layers,
                max_len=5000):
    keys = jax.random.split(key, 1 + num_layers)
    params = {
        "embed_dim": embed_dim,
        "num_heads": num_heads,
        "num_layers": num_layers,
        "pe": make_positional_encoding(embed_dim, max_len),
    }
    params["input_proj_w"], params["input_proj_b"] = init_linear_params(
        keys[0], input_dim, embed_dim)

    names = ["in_proj_w", "in_proj_b", "out_proj_w", "out_proj_b",
             "ff1_w", "ff1_b", "ff2_w", "ff2_b",
             "ln1_g", "ln1_b", "ln2_g", "ln2_b"]
    stacks = {n: [] for n in names}
    for li in range(num_layers):
        lk = jax.random.split(keys[1 + li], 4)
        in_w, in_b = init_linear_params(lk[0], embed_dim, 3 * embed_dim)
        out_w, out_b = init_linear_params(lk[1], embed_dim, embed_dim)
        f1_w, f1_b = init_linear_params(lk[2], embed_dim, hidden_dim)
        f2_w, f2_b = init_linear_params(lk[3], hidden_dim, embed_dim)
        stacks["in_proj_w"].append(in_w);  stacks["in_proj_b"].append(in_b)
        stacks["out_proj_w"].append(out_w); stacks["out_proj_b"].append(out_b)
        stacks["ff1_w"].append(f1_w);      stacks["ff1_b"].append(f1_b)
        stacks["ff2_w"].append(f2_w);      stacks["ff2_b"].append(f2_b)
        stacks["ln1_g"].append(jnp.ones((1, embed_dim), jnp.float32))
        stacks["ln1_b"].append(jnp.zeros((1, embed_dim), jnp.float32))
        stacks["ln2_g"].append(jnp.ones((1, embed_dim), jnp.float32))
        stacks["ln2_b"].append(jnp.zeros((1, embed_dim), jnp.float32))
    for n in names:
        params[n] = jnp.stack(stacks[n], axis=0)   # leading layer axis
    return params


if __name__ == "__main__":
    # Small shapes consistent with the module's forward.
    batch, seq, input_dim = 2, 8, 16
    embed_dim, num_heads, hidden_dim, num_layers = 32, 4, 64, 2

    root = jax.random.PRNGKey(0)
    k_x, k_p = jax.random.split(root)
    src = jax.random.normal(k_x, (batch, seq, input_dim), jnp.float32)
    params = init_params(k_p, input_dim, embed_dim, num_heads, hidden_dim,
                         num_layers, max_len=5000)

    out = transformers_encoder_forward(src, params)
    jax.block_until_ready(out)
    assert out.shape == (batch, embed_dim)
    assert bool(jnp.all(jnp.isfinite(out)))
    print("KERNEL_OK")
</pallas_src>

<mosaic_0001>
module attributes {stable_mosaic.version = 11 : i64} {
  func.func @_encoder_kernel(%arg0: i32, %arg1: memref<1x8x16xf32, #tpu.memory_space<vmem>>, %arg2: memref<8x32xf32, #tpu.memory_space<vmem>>, %arg3: memref<16x32xf32, #tpu.memory_space<vmem>>, %arg4: memref<1x32xf32, #tpu.memory_space<vmem>>, %arg5: memref<2x32x96xf32, #tpu.memory_space<vmem>>, %arg6: memref<2x1x96xf32, #tpu.memory_space<vmem>>, %arg7: memref<2x32x32xf32, #tpu.memory_space<vmem>>, %arg8: memref<2x1x32xf32, #tpu.memory_space<vmem>>, %arg9: memref<2x32x64xf32, #tpu.memory_space<vmem>>, %arg10: memref<2x1x64xf32, #tpu.memory_space<vmem>>, %arg11: memref<2x64x32xf32, #tpu.memory_space<vmem>>, %arg12: memref<2x1x32xf32, #tpu.memory_space<vmem>>, %arg13: memref<2x1x32xf32, #tpu.memory_space<vmem>>, %arg14: memref<2x1x32xf32, #tpu.memory_space<vmem>>, %arg15: memref<2x1x32xf32, #tpu.memory_space<vmem>>, %arg16: memref<2x1x32xf32, #tpu.memory_space<vmem>>, %arg17: memref<1x1x32xf32, #tpu.memory_space<vmem>>) attributes {dimension_semantics = [#tpu.dimension_semantics<parallel>], iteration_bounds = array<i64: 2>, scalar_prefetch = 0 : i64, scratch_operands = 0 : i64, tpu.core_type = #tpu.core_type<tc>, window_params = [{transform_indices = @transform_0, window_bounds = array<i64: 1, 8, 16>}, {pipeline_mode = #tpu.pipeline_mode<synchronous>, transform_indices = @transform_1, window_bounds = array<i64: 8, 32>}, {pipeline_mode = #tpu.pipeline_mode<synchronous>, transform_indices = @transform_2, window_bounds = array<i64: 16, 32>}, {pipeline_mode = #tpu.pipeline_mode<synchronous>, transform_indices = @transform_3, window_bounds = array<i64: 1, 32>}, {pipeline_mode = #tpu.pipeline_mode<synchronous>, transform_indices = @transform_4, window_bounds = array<i64: 2, 32, 96>}, {pipeline_mode = #tpu.pipeline_mode<synchronous>, transform_indices = @transform_5, window_bounds = array<i64: 2, 1, 96>}, {pipeline_mode = #tpu.pipeline_mode<synchronous>, transform_indices = @transform_6, window_bounds = array<i64: 2, 32, 32>}, {pipeline_mode = #tpu.pipeline_mode<synchronous>, transform_indices = @transform_7, window_bounds = array<i64: 2, 1, 32>}, {pipeline_mode = #tpu.pipeline_mode<synchronous>, transform_indices = @transform_8, window_bounds = array<i64: 2, 32, 64>}, {pipeline_mode = #tpu.pipeline_mode<synchronous>, transform_indices = @transform_9, window_bounds = array<i64: 2, 1, 64>}, {pipeline_mode = #tpu.pipeline_mode<synchronous>, transform_indices = @transform_10, window_bounds = array<i64: 2, 64, 32>}, {pipeline_mode = #tpu.pipeline_mode<synchronous>, transform_indices = @transform_11, window_bounds = array<i64: 2, 1, 32>}, {pipeline_mode = #tpu.pipeline_mode<synchronous>, transform_indices = @transform_12, window_bounds = array<i64: 2, 1, 32>}, {pipeline_mode = #tpu.pipeline_mode<synchronous>, transform_indices = @transform_13, window_bounds = array<i64: 2, 1, 32>}, {pipeline_mode = #tpu.pipeline_mode<synchronous>, transform_indices = @transform_14, window_bounds = array<i64: 2, 1, 32>}, {pipeline_mode = #tpu.pipeline_mode<synchronous>, transform_indices = @transform_15, window_bounds = array<i64: 2, 1, 32>}, {transform_indices = @transform_16, window_bounds = array<i64: 1, 1, 32>}]} {
    %c0 = arith.constant 0 : index
    %c0_0 = arith.constant 0 : index
    %c0_1 = arith.constant 0 : index
    %0 = vector.load %arg1[%c0, %c0_0, %c0_1] : memref<1x8x16xf32, #tpu.memory_space<vmem>>, vector<1x8x16xf32>
    %1 = vector.shape_cast %0 : vector<1x8x16xf32> to vector<8x16xf32>
    %c0_2 = arith.constant 0 : index
    %c0_3 = arith.constant 0 : index
    %2 = vector.load %arg3[%c0_2, %c0_3] : memref<16x32xf32, #tpu.memory_space<vmem>>, vector<16x32xf32>
    %cst = arith.constant dense<0.000000e+00> : vector<8x32xf32>
    %3 = tpu.matmul %1, %2, %cst {dimension_numbers = #tpu.dot_dimension_numbers<[1], [0], [0], [1], [0, 0, 1, 1], [], []>} : vector<8x16xf32>, vector<16x32xf32>, vector<8x32xf32> -> vector<8x32xf32>
    %c0_4 = arith.constant 0 : index
    %c0_5 = arith.constant 0 : index
    %4 = vector.load %arg4[%c0_4, %c0_5] : memref<1x32xf32, #tpu.memory_space<vmem>>, vector<1x32xf32>
    %5 = vector.broadcast %4 : vector<1x32xf32> to vector<8x32xf32>
    %6 = arith.addf %3, %5 : vector<8x32xf32>
    %cst_6 = arith.constant 5.65685415 : f32
    %7 = vector.broadcast %cst_6 : f32 to vector<8x32xf32>
    %8 = arith.mulf %6, %7 : vector<8x32xf32>
    %c0_7 = arith.constant 0 : index
    %c0_8 = arith.constant 0 : index
    %9 = vector.load %arg2[%c0_7, %c0_8] : memref<8x32xf32, #tpu.memory_space<vmem>>, vector<8x32xf32>
    %10 = arith.addf %8, %9 : vector<8x32xf32>
    %c0_9 = arith.constant 0 : index
    %c0_10 = arith.constant 0 : index
    %c0_11 = arith.constant 0 : index
    %11 = vector.load %arg5[%c0_9, %c0_10, %c0_11] : memref<2x32x96xf32, #tpu.memory_space<vmem>>, vector<1x32x96xf32>
    %12 = vector.shape_cast %11 : vector<1x32x96xf32> to vector<32x96xf32>
    %c0_12 = arith.constant 0 : index
    %c0_13 = arith.constant 0 : index
    %c0_14 = arith.constant 0 : index
    %13 = vector.load %arg6[%c0_12, %c0_13, %c0_14] : memref<2x1x96xf32, #tpu.memory_space<vmem>>, vector<1x1x96xf32>
    %14 = vector.shape_cast %13 : vector<1x1x96xf32> to vector<1x96xf32>
    %c0_15 = arith.constant 0 : index
    %c0_16 = arith.constant 0 : index
    %c0_17 = arith.constant 0 : index
    %15 = vector.load %arg7[%c0_15, %c0_16, %c0_17] : memref<2x32x32xf32, #tpu.memory_space<vmem>>, vector<1x32x32xf32>
    %16 = vector.shape_cast %15 : vector<1x32x32xf32> to vector<32x32xf32>
    %c0_18 = arith.constant 0 : index
    %c0_19 = arith.constant 0 : index
    %c0_20 = arith.constant 0 : index
    %17 = vector.load %arg8[%c0_18, %c0_19, %c0_20] : memref<2x1x32xf32, #tpu.memory_space<vmem>>, vector<1x1x32xf32>
    %18 = vector.shape_cast %17 : vector<1x1x32xf32> to vector<1x32xf32>
    %cst_21 = arith.constant dense<0.000000e+00> : vector<8x96xf32>
    %19 = tpu.matmul %10, %12, %cst_21 {dimension_numbers = #tpu.dot_dimension_numbers<[1], [0], [0], [1], [0, 0, 1, 1], [], []>} : vector<8x32xf32>, vector<32x96xf32>, vector<8x96xf32> -> vector<8x96xf32>
    %20 = vector.broadcast %14 : vector<1x96xf32> to vector<8x96xf32>
    %21 = arith.addf %19, %20 : vector<8x96xf32>
    %22 = vector.extract_strided_slice %21 {offsets = [0, 0], sizes = [8, 8], strides = [1, 1]} : vector<8x96xf32> to vector<8x8xf32>
    %23 = vector.extract_strided_slice %21 {offsets = [0, 32], sizes = [8, 8], strides = [1, 1]} : vector<8x96xf32> to vector<8x8xf32>
    %24 = vector.extract_strided_slice %21 {offsets = [0, 64], sizes = [8, 8], strides = [1, 1]} : vector<8x96xf32> to vector<8x8xf32>
    %cst_22 = arith.constant dense<0.000000e+00> : vector<8x8xf32>
    %25 = tpu.matmul %22, %23, %cst_22 {dimension_numbers = #tpu.dot_dimension_numbers<[1], [1], [0], [0], [0, 0, 1, 0], [], []>} : vector<8x8xf32>, vector<8x8xf32>, vector<8x8xf32> -> vector<8x8xf32>
    %cst_23 = arith.constant 0.353553385 : f32
    %26 = vector.broadcast %cst_23 : f32 to vector<8x8xf32>
    %27 = arith.mulf %25, %26 : vector<8x8xf32>
    %cst_24 = arith.constant dense<0xFF800000> : vector<8xf32>
    %28 = vector.multi_reduction <maximumf>, %27, %cst_24 [1] : vector<8x8xf32> to vector<8xf32>
    %29 = vector.shape_cast %28 : vector<8xf32> to vector<8x1xf32>
    %30 = vector.broadcast %29 : vector<8x1xf32> to vector<8x8xf32>
    %31 = arith.subf %27, %30 : vector<8x8xf32>
    %32 = math.exp %31 : vector<8x8xf32>
    %cst_25 = arith.constant dense<0.000000e+00> : vector<8xf32>
    %33 = vector.multi_reduction <add>, %32, %cst_25 [1] : vector<8x8xf32> to vector<8xf32>
    %34 = vector.shape_cast %33 : vector<8xf32> to vector<8x1xf32>
    %35 = tpu.reciprocal %34 {approx = true} : vector<8x1xf32> -> vector<8x1xf32>
    %36 = vector.broadcast %35 : vector<8x1xf32> to vector<8x8xf32>
    %37 = arith.mulf %32, %36 : vector<8x8xf32>
    %cst_26 = arith.constant dense<0.000000e+00> : vector<8x8xf32>
    %38 = tpu.matmul %37, %24, %cst_26 {dimension_numbers = #tpu.dot_dimension_numbers<[1], [0], [0], [1], [0, 0, 1, 1], [], []>} : vector<8x8xf32>, vector<8x8xf32>, vector<8x8xf32> -> vector<8x8xf32>
    %39 = vector.extract_strided_slice %16 {offsets = [0, 0], sizes = [8, 32], strides = [1, 1]} : vector<32x32xf32> to vector<8x32xf32>
    %cst_27 = arith.constant dense<0.000000e+00> : vector<8x32xf32>
    %40 = tpu.matmul %38, %39, %cst_27 {dimension_numbers = #tpu.dot_dimension_numbers<[1], [0], [0], [1], [0, 0, 1, 1], [], []>} : vector<8x8xf32>, vector<8x32xf32>, vector<8x32xf32> -> vector<8x32xf32>
    %41 = vector.extract_strided_slice %21 {offsets = [0, 8], sizes = [8, 8], strides = [1, 1]} : vector<8x96xf32> to vector<8x8xf32>
    %42 = vector.extract_strided_slice %21 {offsets = [0, 40], sizes = [8, 8], strides = [1, 1]} : vector<8x96xf32> to vector<8x8xf32>
    %43 = vector.extract_strided_slice %21 {offsets = [0, 72], sizes = [8, 8], strides = [1, 1]} : vector<8x96xf32> to vector<8x8xf32>
    %cst_28 = arith.constant dense<0.000000e+00> : vector<8x8xf32>
    %44 = tpu.matmul %41, %42, %cst_28 {dimension_numbers = #tpu.dot_dimension_numbers<[1], [1], [0], [0], [0, 0, 1, 0], [], []>} : vector<8x8xf32>, vector<8x8xf32>, vector<8x8xf32> -> vector<8x8xf32>
    %cst_29 = arith.constant 0.353553385 : f32
    %45 = vector.broadcast %cst_29 : f32 to vector<8x8xf32>
    %46 = arith.mulf %44, %45 : vector<8x8xf32>
    %cst_30 = arith.constant dense<0xFF800000> : vector<8xf32>
    %47 = vector.multi_reduction <maximumf>, %46, %cst_30 [1] : vector<8x8xf32> to vector<8xf32>
    %48 = vector.shape_cast %47 : vector<8xf32> to vector<8x1xf32>
    %49 = vector.broadcast %48 : vector<8x1xf32> to vector<8x8xf32>
    %50 = arith.subf %46, %49 : vector<8x8xf32>
    %51 = math.exp %50 : vector<8x8xf32>
    %cst_31 = arith.constant dense<0.000000e+00> : vector<8xf32>
    %52 = vector.multi_reduction <add>, %51, %cst_31 [1] : vector<8x8xf32> to vector<8xf32>
    %53 = vector.shape_cast %52 : vector<8xf32> to vector<8x1xf32>
    %54 = tpu.reciprocal %53 {approx = true} : vector<8x1xf32> -> vector<8x1xf32>
    %55 = vector.broadcast %54 : vector<8x1xf32> to vector<8x8xf32>
    %56 = arith.mulf %51, %55 : vector<8x8xf32>
    %cst_32 = arith.constant dense<0.000000e+00> : vector<8x8xf32>
    %57 = tpu.matmul %56, %43, %cst_32 {dimension_numbers = #tpu.dot_dimension_numbers<[1], [0], [0], [1], [0, 0, 1, 1], [], []>} : vector<8x8xf32>, vector<8x8xf32>, vector<8x8xf32> -> vector<8x8xf32>
    %58 = vector.extract_strided_slice %16 {offsets = [8, 0], sizes = [8, 32], strides = [1, 1]} : vector<32x32xf32> to vector<8x32xf32>
    %cst_33 = arith.constant dense<0.000000e+00> : vector<8x32xf32>
    %59 = tpu.matmul %57, %58, %cst_33 {dimension_numbers = #tpu.dot_dimension_numbers<[1], [0], [0], [1], [0, 0, 1, 1], [], []>} : vector<8x8xf32>, vector<8x32xf32>, vector<8x32xf32> -> vector<8x32xf32>
    %60 = arith.addf %40, %59 : vector<8x32xf32>
    %61 = vector.extract_strided_slice %21 {offsets = [0, 16], sizes = [8, 8], strides = [1, 1]} : vector<8x96xf32> to vector<8x8xf32>
    %62 = vector.extract_strided_slice %21 {offsets = [0, 48], sizes = [8, 8], strides = [1, 1]} : vector<8x96xf32> to vector<8x8xf32>
    %63 = vector.extract_strided_slice %21 {offsets = [0, 80], sizes = [8, 8], strides = [1, 1]} : vector<8x96xf32> to vector<8x8xf32>
    %cst_34 = arith.constant dense<0.000000e+00> : vector<8x8xf32>
    %64 = tpu.matmul %61, %62, %cst_34 {dimension_numbers = #tpu.dot_dimension_numbers<[1], [1], [0], [0], [0, 0, 1, 0], [], []>} : vector<8x8xf32>, vector<8x8xf32>, vector<8x8xf32> -> vector<8x8xf32>
    %cst_35 = arith.constant 0.353553385 : f32
    %65 = vector.broadcast %cst_35 : f32 to vector<8x8xf32>
    %66 = arith.mulf %64, %65 : vector<8x8xf32>
    %cst_36 = arith.constant dense<0xFF800000> : vector<8xf32>
    %67 = vector.multi_reduction <maximumf>, %66, %cst_36 [1] : vector<8x8xf32> to vector<8xf32>
    %68 = vector.shape_cast %67 : vector<8xf32> to vector<8x1xf32>
    %69 = vector.broadcast %68 : vector<8x1xf32> to vector<8x8xf32>
    %70 = arith.subf %66, %69 : vector<8x8xf32>
    %71 = math.exp %70 : vector<8x8xf32>
    %cst_37 = arith.constant dense<0.000000e+00> : vector<8xf32>
    %72 = vector.multi_reduction <add>, %71, %cst_37 [1] : vector<8x8xf32> to vector<8xf32>
    %73 = vector.shape_cast %72 : vector<8xf32> to vector<8x1xf32>
    %74 = tpu.reciprocal %73 {approx = true} : vector<8x1xf32> -> vector<8x1xf32>
    %75 = vector.broadcast %74 : vector<8x1xf32> to vector<8x8xf32>
    %76 = arith.mulf %71, %75 : vector<8x8xf32>
    %cst_38 = arith.constant dense<0.000000e+00> : vector<8x8xf32>
    %77 = tpu.matmul %76, %63, %cst_38 {dimension_numbers = #tpu.dot_dimension_numbers<[1], [0], [0], [1], [0, 0, 1, 1], [], []>} : vector<8x8xf32>, vector<8x8xf32>, vector<8x8xf32> -> vector<8x8xf32>
    %78 = vector.extract_strided_slice %16 {offsets = [16, 0], sizes = [8, 32], strides = [1, 1]} : vector<32x32xf32> to vector<8x32xf32>
    %cst_39 = arith.constant dense<0.000000e+00> : vector<8x32xf32>
    %79 = tpu.matmul %77, %78, %cst_39 {dimension_numbers = #tpu.dot_dimension_numbers<[1], [0], [0], [1], [0, 0, 1, 1], [], []>} : vector<8x8xf32>, vector<8x32xf32>, vector<8x32xf32> -> vector<8x32xf32>
    %80 = arith.addf %60, %79 : vector<8x32xf32>
    %81 = vector.extract_strided_slice %21 {offsets = [0, 24], sizes = [8, 8], strides = [1, 1]} : vector<8x96xf32> to vector<8x8xf32>
    %82 = vector.extract_strided_slice %21 {offsets = [0, 56], sizes = [8, 8], strides = [1, 1]} : vector<8x96xf32> to vector<8x8xf32>
    %83 = vector.extract_strided_slice %21 {offsets = [0, 88], sizes = [8, 8], strides = [1, 1]} : vector<8x96xf32> to vector<8x8xf32>
    %cst_40 = arith.constant dense<0.000000e+00> : vector<8x8xf32>
    %84 = tpu.matmul %81, %82, %cst_40 {dimension_numbers = #tpu.dot_dimension_numbers<[1], [1], [0], [0], [0, 0, 1, 0], [], []>} : vector<8x8xf32>, vector<8x8xf32>, vector<8x8xf32> -> vector<8x8xf32>
    %cst_41 = arith.constant 0.353553385 : f32
    %85 = vector.broadcast %cst_41 : f32 to vector<8x8xf32>
    %86 = arith.mulf %84, %85 : vector<8x8xf32>
    %cst_42 = arith.constant dense<0xFF800000> : vector<8xf32>
    %87 = vector.multi_reduction <maximumf>, %86, %cst_42 [1] : vector<8x8xf32> to vector<8xf32>
    %88 = vector.shape_cast %87 : vector<8xf32> to vector<8x1xf32>
    %89 = vector.broadcast %88 : vector<8x1xf32> to vector<8x8xf32>
    %90 = arith.subf %86, %89 : vector<8x8xf32>
    %91 = math.exp %90 : vector<8x8xf32>
    %cst_43 = arith.constant dense<0.000000e+00> : vector<8xf32>
    %92 = vector.multi_reduction <add>, %91, %cst_43 [1] : vector<8x8xf32> to vector<8xf32>
    %93 = vector.shape_cast %92 : vector<8xf32> to vector<8x1xf32>
    %94 = tpu.reciprocal %93 {approx = true} : vector<8x1xf32> -> vector<8x1xf32>
    %95 = vector.broadcast %94 : vector<8x1xf32> to vector<8x8xf32>
    %96 = arith.mulf %91, %95 : vector<8x8xf32>
    %cst_44 = arith.constant dense<0.000000e+00> : vector<8x8xf32>
    %97 = tpu.matmul %96, %83, %cst_44 {dimension_numbers = #tpu.dot_dimension_numbers<[1], [0], [0], [1], [0, 0, 1, 1], [], []>} : vector<8x8xf32>, vector<8x8xf32>, vector<8x8xf32> -> vector<8x8xf32>
    %98 = vector.extract_strided_slice %16 {offsets = [24, 0], sizes = [8, 32], strides = [1, 1]} : vector<32x32xf32> to vector<8x32xf32>
    %cst_45 = arith.constant dense<0.000000e+00> : vector<8x32xf32>
    %99 = tpu.matmul %97, %98, %cst_45 {dimension_numbers = #tpu.dot_dimension_numbers<[1], [0], [0], [1], [0, 0, 1, 1], [], []>} : vector<8x8xf32>, vector<8x32xf32>, vector<8x32xf32> -> vector<8x32xf32>
    %100 = arith.addf %80, %99 : vector<8x32xf32>
    %101 = vector.broadcast %18 : vector<1x32xf32> to vector<8x32xf32>
    %102 = arith.addf %100, %101 : vector<8x32xf32>
    %c0_46 = arith.constant 0 : index
    %c0_47 = arith.constant 0 : index
    %c0_48 = arith.constant 0 : index
    %103 = vector.load %arg13[%c0_46, %c0_47, %c0_48] : memref<2x1x32xf32, #tpu.memory_space<vmem>>, vector<1x1x32xf32>
    %104 = vector.shape_cast %103 : vector<1x1x32xf32> to vector<1x32xf32>
    %c0_49 = arith.constant 0 : index
    %c0_50 = arith.constant 0 : index
    %c0_51 = arith.constant 0 : index
    %105 = vector.load %arg14[%c0_49, %c0_50, %c0_51] : memref<2x1x32xf32, #tpu.memory_space<vmem>>, vector<1x1x32xf32>
    %106 = vector.shape_cast %105 : vector<1x1x32xf32> to vector<1x32xf32>
    %107 = arith.addf %10, %102 : vector<8x32xf32>
    %cst_52 = arith.constant dense<0.000000e+00> : vector<8xf32>
    %108 = vector.multi_reduction <add>, %107, %cst_52 [1] : vector<8x32xf32> to vector<8xf32>
    %109 = vector.shape_cast %108 : vector<8xf32> to vector<8x1xf32>
    %cst_53 = arith.constant 3.200000e+01 : f32
    %110 = vector.broadcast %cst_53 : f32 to vector<8x1xf32>
    %111 = arith.divf %109, %110 : vector<8x1xf32>
    %112 = vector.broadcast %111 : vector<8x1xf32> to vector<8x32xf32>
    %113 = arith.subf %107, %112 : vector<8x32xf32>
    %114 = arith.mulf %113, %113 : vector<8x32xf32>
    %cst_54 = arith.constant dense<0.000000e+00> : vector<8xf32>
    %115 = vector.multi_reduction <add>, %114, %cst_54 [1] : vector<8x32xf32> to vector<8xf32>
    %116 = vector.shape_cast %115 : vector<8xf32> to vector<8x1xf32>
    %cst_55 = arith.constant 3.200000e+01 : f32
    %117 = vector.broadcast %cst_55 : f32 to vector<8x1xf32>
    %118 = arith.divf %116, %117 : vector<8x1xf32>
    %cst_56 = arith.constant 9.99999974E-6 : f32
    %119 = vector.broadcast %cst_56 : f32 to vector<8x1xf32>
    %120 = arith.addf %118, %119 : vector<8x1xf32>
    %121 = math.rsqrt %120 : vector<8x1xf32>
    %122 = vector.broadcast %121 : vector<8x1xf32> to vector<8x32xf32>
    %123 = arith.mulf %113, %122 : vector<8x32xf32>
    %124 = vector.broadcast %104 : vector<1x32xf32> to vector<8x32xf32>
    %125 = arith.mulf %123, %124 : vector<8x32xf32>
    %126 = vector.broadcast %106 : vector<1x32xf32> to vector<8x32xf32>
    %127 = arith.addf %125, %126 : vector<8x32xf32>
    %c0_57 = arith.constant 0 : index
    %c0_58 = arith.constant 0 : index
    %c0_59 = arith.constant 0 : index
    %128 = vector.load %arg9[%c0_57, %c0_58, %c0_59] : memref<2x32x64xf32, #tpu.memory_space<vmem>>, vector<1x32x64xf32>
    %129 = vector.shape_cast %128 : vector<1x32x64xf32> to vector<32x64xf32>
    %cst_60 = arith.constant dense<0.000000e+00> : vector<8x64xf32>
    %130 = tpu.matmul %127, %129, %cst_60 {dimension_numbers = #tpu.dot_dimension_numbers<[1], [0], [0], [1], [0, 0, 1, 1], [], []>} : vector<8x32xf32>, vector<32x64xf32>, vector<8x64xf32> -> vector<8x64xf32>
    %c0_61 = arith.constant 0 : index
    %c0_62 = arith.constant 0 : index
    %c0_63 = arith.constant 0 : index
    %131 = vector.load %arg10[%c0_61, %c0_62, %c0_63] : memref<2x1x64xf32, #tpu.memory_space<vmem>>, vector<1x1x64xf32>
    %132 = vector.shape_cast %131 : vector<1x1x64xf32> to vector<1x64xf32>
    %133 = vector.broadcast %132 : vector<1x64xf32> to vector<8x64xf32>
    %134 = arith.addf %130, %133 : vector<8x64xf32>
    %cst_64 = arith.constant 0.000000e+00 : f32
    %135 = vector.broadcast %cst_64 : f32 to vector<8x64xf32>
    %136 = arith.maximumf %134, %135 : vector<8x64xf32>
    %c0_65 = arith.constant 0 : index
    %c0_66 = arith.constant 0 : index
    %c0_67 = arith.constant 0 : index
    %137 = vector.load %arg11[%c0_65, %c0_66, %c0_67] : memref<2x64x32xf32, #tpu.memory_space<vmem>>, vector<1x64x32xf32>
    %138 = vector.shape_cast %137 : vector<1x64x32xf32> to vector<64x32xf32>
    %cst_68 = arith.constant dense<0.000000e+00> : vector<8x32xf32>
    %139 = tpu.matmul %136, %138, %cst_68 {dimension_numbers = #tpu.dot_dimension_numbers<[1], [0], [0], [1], [0, 0, 1, 1], [], []>} : vector<8x64xf32>, vector<64x32xf32>, vector<8x32xf32> -> vector<8x32xf32>
    %c0_69 = arith.constant 0 : index
    %c0_70 = arith.constant 0 : index
    %c0_71 = arith.constant 0 : index
    %140 = vector.load %arg12[%c0_69, %c0_70, %c0_71] : memref<2x1x32xf32, #tpu.memory_space<vmem>>, vector<1x1x32xf32>
    %141 = vector.shape_cast %140 : vector<1x1x32xf32> to vector<1x32xf32>
    %142 = vector.broadcast %141 : vector<1x32xf32> to vector<8x32xf32>
    %143 = arith.addf %139, %142 : vector<8x32xf32>
    %c0_72 = arith.constant 0 : index
    %c0_73 = arith.constant 0 : index
    %c0_74 = arith.constant 0 : index
    %144 = vector.load %arg15[%c0_72, %c0_73, %c0_74] : memref<2x1x32xf32, #tpu.memory_space<vmem>>, vector<1x1x32xf32>
    %145 = vector.shape_cast %144 : vector<1x1x32xf32> to vector<1x32xf32>
    %c0_75 = arith.constant 0 : index
    %c0_76 = arith.constant 0 : index
    %c0_77 = arith.constant 0 : index
    %146 = vector.load %arg16[%c0_75, %c0_76, %c0_77] : memref<2x1x32xf32, #tpu.memory_space<vmem>>, vector<1x1x32xf32>
    %147 = vector.shape_cast %146 : vector<1x1x32xf32> to vector<1x32xf32>
    %148 = arith.addf %127, %143 : vector<8x32xf32>
    %cst_78 = arith.constant dense<0.000000e+00> : vector<8xf32>
    %149 = vector.multi_reduction <add>, %148, %cst_78 [1] : vector<8x32xf32> to vector<8xf32>
    %150 = vector.shape_cast %149 : vector<8xf32> to vector<8x1xf32>
    %cst_79 = arith.constant 3.200000e+01 : f32
    %151 = vector.broadcast %cst_79 : f32 to vector<8x1xf32>
    %152 = arith.divf %150, %151 : vector<8x1xf32>
    %153 = vector.broadcast %152 : vector<8x1xf32> to vector<8x32xf32>
    %154 = arith.subf %148, %153 : vector<8x32xf32>
    %155 = arith.mulf %154, %154 : vector<8x32xf32>
    %cst_80 = arith.constant dense<0.000000e+00> : vector<8xf32>
    %156 = vector.multi_reduction <add>, %155, %cst_80 [1] : vector<8x32xf32> to vector<8xf32>
    %157 = vector.shape_cast %156 : vector<8xf32> to vector<8x1xf32>
    %cst_81 = arith.constant 3.200000e+01 : f32
    %158 = vector.broadcast %cst_81 : f32 to vector<8x1xf32>
    %159 = arith.divf %157, %158 : vector<8x1xf32>
    %cst_82 = arith.constant 9.99999974E-6 : f32
    %160 = vector.broadcast %cst_82 : f32 to vector<8x1xf32>
    %161 = arith.addf %159, %160 : vector<8x1xf32>
    %162 = math.rsqrt %161 : vector<8x1xf32>
    %163 = vector.broadcast %162 : vector<8x1xf32> to vector<8x32xf32>
    %164 = arith.mulf %154, %163 : vector<8x32xf32>
    %165 = vector.broadcast %145 : vector<1x32xf32> to vector<8x32xf32>
    %166 = arith.mulf %164, %165 : vector<8x32xf32>
    %167 = vector.broadcast %147 : vector<1x32xf32> to vector<8x32xf32>
    %168 = arith.addf %166, %167 : vector<8x32xf32>
    %c1 = arith.constant 1 : index
    %c0_83 = arith.constant 0 : index
    %c0_84 = arith.constant 0 : index
    %169 = vector.load %arg5[%c1, %c0_83, %c0_84] : memref<2x32x96xf32, #tpu.memory_space<vmem>>, vector<1x32x96xf32>
    %170 = vector.shape_cast %169 : vector<1x32x96xf32> to vector<32x96xf32>
    %c1_85 = arith.constant 1 : index
    %c0_86 = arith.constant 0 : index
    %c0_87 = arith.constant 0 : index
    %171 = vector.load %arg6[%c1_85, %c0_86, %c0_87] : memref<2x1x96xf32, #tpu.memory_space<vmem>>, vector<1x1x96xf32>
    %172 = vector.shape_cast %171 : vector<1x1x96xf32> to vector<1x96xf32>
    %c1_88 = arith.constant 1 : index
    %c0_89 = arith.constant 0 : index
    %c0_90 = arith.constant 0 : index
    %173 = vector.load %arg7[%c1_88, %c0_89, %c0_90] : memref<2x32x32xf32, #tpu.memory_space<vmem>>, vector<1x32x32xf32>
    %174 = vector.shape_cast %173 : vector<1x32x32xf32> to vector<32x32xf32>
    %c1_91 = arith.constant 1 : index
    %c0_92 = arith.constant 0 : index
    %c0_93 = arith.constant 0 : index
    %175 = vector.load %arg8[%c1_91, %c0_92, %c0_93] : memref<2x1x32xf32, #tpu.memory_space<vmem>>, vector<1x1x32xf32>
    %176 = vector.shape_cast %175 : vector<1x1x32xf32> to vector<1x32xf32>
    %cst_94 = arith.constant dense<0.000000e+00> : vector<8x96xf32>
    %177 = tpu.matmul %168, %170, %cst_94 {dimension_numbers = #tpu.dot_dimension_numbers<[1], [0], [0], [1], [0, 0, 1, 1], [], []>} : vector<8x32xf32>, vector<32x96xf32>, vector<8x96xf32> -> vector<8x96xf32>
    %178 = vector.broadcast %172 : vector<1x96xf32> to vector<8x96xf32>
    %179 = arith.addf %177, %178 : vector<8x96xf32>
    %180 = vector.extract_strided_slice %179 {offsets = [0, 0], sizes = [8, 8], strides = [1, 1]} : vector<8x96xf32> to vector<8x8xf32>
    %181 = vector.extract_strided_slice %179 {offsets = [0, 32], sizes = [8, 8], strides = [1, 1]} : vector<8x96xf32> to vector<8x8xf32>
    %182 = vector.extract_strided_slice %179 {offsets = [0, 64], sizes = [8, 8], strides = [1, 1]} : vector<8x96xf32> to vector<8x8xf32>
    %cst_95 = arith.constant dense<0.000000e+00> : vector<8x8xf32>
    %183 = tpu.matmul %180, %181, %cst_95 {dimension_numbers = #tpu.dot_dimension_numbers<[1], [1], [0], [0], [0, 0, 1, 0], [], []>} : vector<8x8xf32>, vector<8x8xf32>, vector<8x8xf32> -> vector<8x8xf32>
    %cst_96 = arith.constant 0.353553385 : f32
    %184 = vector.broadcast %cst_96 : f32 to vector<8x8xf32>
    %185 = arith.mulf %183, %184 : vector<8x8xf32>
    %cst_97 = arith.constant dense<0xFF800000> : vector<8xf32>
    %186 = vector.multi_reduction <maximumf>, %185, %cst_97 [1] : vector<8x8xf32> to vector<8xf32>
    %187 = vector.shape_cast %186 : vector<8xf32> to vector<8x1xf32>
    %188 = vector.broadcast %187 : vector<8x1xf32> to vector<8x8xf32>
    %189 = arith.subf %185, %188 : vector<8x8xf32>
    %190 = math.exp %189 : vector<8x8xf32>
    %cst_98 = arith.constant dense<0.000000e+00> : vector<8xf32>
    %191 = vector.multi_reduction <add>, %190, %cst_98 [1] : vector<8x8xf32> to vector<8xf32>
    %192 = vector.shape_cast %191 : vector<8xf32> to vector<8x1xf32>
    %193 = tpu.reciprocal %192 {approx = true} : vector<8x1xf32> -> vector<8x1xf32>
    %194 = vector.broadcast %193 : vector<8x1xf32> to vector<8x8xf32>
    %195 = arith.mulf %190, %194 : vector<8x8xf32>
    %cst_99 = arith.constant dense<0.000000e+00> : vector<8x8xf32>
    %196 = tpu.matmul %195, %182, %cst_99 {dimension_numbers = #tpu.dot_dimension_numbers<[1], [0], [0], [1], [0, 0, 1, 1], [], []>} : vector<8x8xf32>, vector<8x8xf32>, vector<8x8xf32> -> vector<8x8xf32>
    %197 = vector.extract_strided_slice %174 {offsets = [0, 0], sizes = [8, 32], strides = [1, 1]} : vector<32x32xf32> to vector<8x32xf32>
    %cst_100 = arith.constant dense<0.000000e+00> : vector<8x32xf32>
    %198 = tpu.matmul %196, %197, %cst_100 {dimension_numbers = #tpu.dot_dimension_numbers<[1], [0], [0], [1], [0, 0, 1, 1], [], []>} : vector<8x8xf32>, vector<8x32xf32>, vector<8x32xf32> -> vector<8x32xf32>
    %199 = vector.extract_strided_slice %179 {offsets = [0, 8], sizes = [8, 8], strides = [1, 1]} : vector<8x96xf32> to vector<8x8xf32>
    %200 = vector.extract_strided_slice %179 {offsets = [0, 40], sizes = [8, 8], strides = [1, 1]} : vector<8x96xf32> to vector<8x8xf32>
    %201 = vector.extract_strided_slice %179 {offsets = [0, 72], sizes = [8, 8], strides = [1, 1]} : vector<8x96xf32> to vector<8x8xf32>
    %cst_101 = arith.constant dense<0.000000e+00> : vector<8x8xf32>
    %202 = tpu.matmul %199, %200, %cst_101 {dimension_numbers = #tpu.dot_dimension_numbers<[1], [1], [0], [0], [0, 0, 1, 0], [], []>} : vector<8x8xf32>, vector<8x8xf32>, vector<8x8xf32> -> vector<8x8xf32>
    %cst_102 = arith.constant 0.353553385 : f32
    %203 = vector.broadcast %cst_102 : f32 to vector<8x8xf32>
    %204 = arith.mulf %202, %203 : vector<8x8xf32>
    %cst_103 = arith.constant dense<0xFF800000> : vector<8xf32>
    %205 = vector.multi_reduction <maximumf>, %204, %cst_103 [1] : vector<8x8xf32> to vector<8xf32>
    %206 = vector.shape_cast %205 : vector<8xf32> to vector<8x1xf32>
    %207 = vector.broadcast %206 : vector<8x1xf32> to vector<8x8xf32>
    %208 = arith.subf %204, %207 : vector<8x8xf32>
    %209 = math.exp %208 : vector<8x8xf32>
    %cst_104 = arith.constant dense<0.000000e+00> : vector<8xf32>
    %210 = vector.multi_reduction <add>, %209, %cst_104 [1] : vector<8x8xf32> to vector<8xf32>
    %211 = vector.shape_cast %210 : vector<8xf32> to vector<8x1xf32>
    %212 = tpu.reciprocal %211 {approx = true} : vector<8x1xf32> -> vector<8x1xf32>
    %213 = vector.broadcast %212 : vector<8x1xf32> to vector<8x8xf32>
    %214 = arith.mulf %209, %213 : vector<8x8xf32>
    %cst_105 = arith.constant dense<0.000000e+00> : vector<8x8xf32>
    %215 = tpu.matmul %214, %201, %cst_105 {dimension_numbers = #tpu.dot_dimension_numbers<[1], [0], [0], [1], [0, 0, 1, 1], [], []>} : vector<8x8xf32>, vector<8x8xf32>, vector<8x8xf32> -> vector<8x8xf32>
    %216 = vector.extract_strided_slice %174 {offsets = [8, 0], sizes = [8, 32], strides = [1, 1]} : vector<32x32xf32> to vector<8x32xf32>
    %cst_106 = arith.constant dense<0.000000e+00> : vector<8x32xf32>
    %217 = tpu.matmul %215, %216, %cst_106 {dimension_numbers = #tpu.dot_dimension_numbers<[1], [0], [0], [1], [0, 0, 1, 1], [], []>} : vector<8x8xf32>, vector<8x32xf32>, vector<8x32xf32> -> vector<8x32xf32>
    %218 = arith.addf %198, %217 : vector<8x32xf32>
    %219 = vector.extract_strided_slice %179 {offsets = [0, 16], sizes = [8, 8], strides = [1, 1]} : vector<8x96xf32> to vector<8x8xf32>
    %220 = vector.extract_strided_slice %179 {offsets = [0, 48], sizes = [8, 8], strides = [1, 1]} : vector<8x96xf32> to vector<8x8xf32>
    %221 = vector.extract_strided_slice %179 {offsets = [0, 80], sizes = [8, 8], strides = [1, 1]} : vector<8x96xf32> to vector<8x8xf32>
    %cst_107 = arith.constant dense<0.000000e+00> : vector<8x8xf32>
    %222 = tpu.matmul %219, %220, %cst_107 {dimension_numbers = #tpu.dot_dimension_numbers<[1], [1], [0], [0], [0, 0, 1, 0], [], []>} : vector<8x8xf32>, vector<8x8xf32>, vector<8x8xf32> -> vector<8x8xf32>
    %cst_108 = arith.constant 0.353553385 : f32
    %223 = vector.broadcast %cst_108 : f32 to vector<8x8xf32>
    %224 = arith.mulf %222, %223 : vector<8x8xf32>
    %cst_109 = arith.constant dense<0xFF800000> : vector<8xf32>
    %225 = vector.multi_reduction <maximumf>, %224, %cst_109 [1] : vector<8x8xf32> to vector<8xf32>
    %226 = vector.shape_cast %225 : vector<8xf32> to vector<8x1xf32>
    %227 = vector.broadcast %226 : vector<8x1xf32> to vector<8x8xf32>
    %228 = arith.subf %224, %227 : vector<8x8xf32>
    %229 = math.exp %228 : vector<8x8xf32>
    %cst_110 = arith.constant dense<0.000000e+00> : vector<8xf32>
    %230 = vector.multi_reduction <add>, %229, %cst_110 [1] : vector<8x8xf32> to vector<8xf32>
    %231 = vector.shape_cast %230 : vector<8xf32> to vector<8x1xf32>
    %232 = tpu.reciprocal %231 {approx = true} : vector<8x1xf32> -> vector<8x1xf32>
    %233 = vector.broadcast %232 : vector<8x1xf32> to vector<8x8xf32>
    %234 = arith.mulf %229, %233 : vector<8x8xf32>
    %cst_111 = arith.constant dense<0.000000e+00> : vector<8x8xf32>
    %235 = tpu.matmul %234, %221, %cst_111 {dimension_numbers = #tpu.dot_dimension_numbers<[1], [0], [0], [1], [0, 0, 1, 1], [], []>} : vector<8x8xf32>, vector<8x8xf32>, vector<8x8xf32> -> vector<8x8xf32>
    %236 = vector.extract_strided_slice %174 {offsets = [16, 0], sizes = [8, 32], strides = [1, 1]} : vector<32x32xf32> to vector<8x32xf32>
    %cst_112 = arith.constant dense<0.000000e+00> : vector<8x32xf32>
    %237 = tpu.matmul %235, %236, %cst_112 {dimension_numbers = #tpu.dot_dimension_numbers<[1], [0], [0], [1], [0, 0, 1, 1], [], []>} : vector<8x8xf32>, vector<8x32xf32>, vector<8x32xf32> -> vector<8x32xf32>
    %238 = arith.addf %218, %237 : vector<8x32xf32>
    %239 = vector.extract_strided_slice %179 {offsets = [0, 24], sizes = [8, 8], strides = [1, 1]} : vector<8x96xf32> to vector<8x8xf32>
    %240 = vector.extract_strided_slice %179 {offsets = [0, 56], sizes = [8, 8], strides = [1, 1]} : vector<8x96xf32> to vector<8x8xf32>
    %241 = vector.extract_strided_slice %179 {offsets = [0, 88], sizes = [8, 8], strides = [1, 1]} : vector<8x96xf32> to vector<8x8xf32>
    %cst_113 = arith.constant dense<0.000000e+00> : vector<8x8xf32>
    %242 = tpu.matmul %239, %240, %cst_113 {dimension_numbers = #tpu.dot_dimension_numbers<[1], [1], [0], [0], [0, 0, 1, 0], [], []>} : vector<8x8xf32>, vector<8x8xf32>, vector<8x8xf32> -> vector<8x8xf32>
    %cst_114 = arith.constant 0.353553385 : f32
    %243 = vector.broadcast %cst_114 : f32 to vector<8x8xf32>
    %244 = arith.mulf %242, %243 : vector<8x8xf32>
    %cst_115 = arith.constant dense<0xFF800000> : vector<8xf32>
    %245 = vector.multi_reduction <maximumf>, %244, %cst_115 [1] : vector<8x8xf32> to vector<8xf32>
    %246 = vector.shape_cast %245 : vector<8xf32> to vector<8x1xf32>
    %247 = vector.broadcast %246 : vector<8x1xf32> to vector<8x8xf32>
    %248 = arith.subf %244, %247 : vector<8x8xf32>
    %249 = math.exp %248 : vector<8x8xf32>
    %cst_116 = arith.constant dense<0.000000e+00> : vector<8xf32>
    %250 = vector.multi_reduction <add>, %249, %cst_116 [1] : vector<8x8xf32> to vector<8xf32>
    %251 = vector.shape_cast %250 : vector<8xf32> to vector<8x1xf32>
    %252 = tpu.reciprocal %251 {approx = true} : vector<8x1xf32> -> vector<8x1xf32>
    %253 = vector.broadcast %252 : vector<8x1xf32> to vector<8x8xf32>
    %254 = arith.mulf %249, %253 : vector<8x8xf32>
    %cst_117 = arith.constant dense<0.000000e+00> : vector<8x8xf32>
    %255 = tpu.matmul %254, %241, %cst_117 {dimension_numbers = #tpu.dot_dimension_numbers<[1], [0], [0], [1], [0, 0, 1, 1], [], []>} : vector<8x8xf32>, vector<8x8xf32>, vector<8x8xf32> -> vector<8x8xf32>
    %256 = vector.extract_strided_slice %174 {offsets = [24, 0], sizes = [8, 32], strides = [1, 1]} : vector<32x32xf32> to vector<8x32xf32>
    %cst_118 = arith.constant dense<0.000000e+00> : vector<8x32xf32>
    %257 = tpu.matmul %255, %256, %cst_118 {dimension_numbers = #tpu.dot_dimension_numbers<[1], [0], [0], [1], [0, 0, 1, 1], [], []>} : vector<8x8xf32>, vector<8x32xf32>, vector<8x32xf32> -> vector<8x32xf32>
    %258 = arith.addf %238, %257 : vector<8x32xf32>
    %259 = vector.broadcast %176 : vector<1x32xf32> to vector<8x32xf32>
    %260 = arith.addf %258, %259 : vector<8x32xf32>
    %c1_119 = arith.constant 1 : index
    %c0_120 = arith.constant 0 : index
    %c0_121 = arith.constant 0 : index
    %261 = vector.load %arg13[%c1_119, %c0_120, %c0_121] : memref<2x1x32xf32, #tpu.memory_space<vmem>>, vector<1x1x32xf32>
    %262 = vector.shape_cast %261 : vector<1x1x32xf32> to vector<1x32xf32>
    %c1_122 = arith.constant 1 : index
    %c0_123 = arith.constant 0 : index
    %c0_124 = arith.constant 0 : index
    %263 = vector.load %arg14[%c1_122, %c0_123, %c0_124] : memref<2x1x32xf32, #tpu.memory_space<vmem>>, vector<1x1x32xf32>
    %264 = vector.shape_cast %263 : vector<1x1x32xf32> to vector<1x32xf32>
    %265 = arith.addf %168, %260 : vector<8x32xf32>
    %cst_125 = arith.constant dense<0.000000e+00> : vector<8xf32>
    %266 = vector.multi_reduction <add>, %265, %cst_125 [1] : vector<8x32xf32> to vector<8xf32>
    %267 = vector.shape_cast %266 : vector<8xf32> to vector<8x1xf32>
    %cst_126 = arith.constant 3.200000e+01 : f32
    %268 = vector.broadcast %cst_126 : f32 to vector<8x1xf32>
    %269 = arith.divf %267, %268 : vector<8x1xf32>
    %270 = vector.broadcast %269 : vector<8x1xf32> to vector<8x32xf32>
    %271 = arith.subf %265, %270 : vector<8x32xf32>
    %272 = arith.mulf %271, %271 : vector<8x32xf32>
    %cst_127 = arith.constant dense<0.000000e+00> : vector<8xf32>
    %273 = vector.multi_reduction <add>, %272, %cst_127 [1] : vector<8x32xf32> to vector<8xf32>
    %274 = vector.shape_cast %273 : vector<8xf32> to vector<8x1xf32>
    %cst_128 = arith.constant 3.200000e+01 : f32
    %275 = vector.broadcast %cst_128 : f32 to vector<8x1xf32>
    %276 = arith.divf %274, %275 : vector<8x1xf32>
    %cst_129 = arith.constant 9.99999974E-6 : f32
    %277 = vector.broadcast %cst_129 : f32 to vector<8x1xf32>
    %278 = arith.addf %276, %277 : vector<8x1xf32>
    %279 = math.rsqrt %278 : vector<8x1xf32>
    %280 = vector.broadcast %279 : vector<8x1xf32> to vector<8x32xf32>
    %281 = arith.mulf %271, %280 : vector<8x32xf32>
    %282 = vector.broadcast %262 : vector<1x32xf32> to vector<8x32xf32>
    %283 = arith.mulf %281, %282 : vector<8x32xf32>
    %284 = vector.broadcast %264 : vector<1x32xf32> to vector<8x32xf32>
    %285 = arith.addf %283, %284 : vector<8x32xf32>
    %c1_130 = arith.constant 1 : index
    %c0_131 = arith.constant 0 : index
    %c0_132 = arith.constant 0 : index
    %286 = vector.load %arg9[%c1_130, %c0_131, %c0_132] : memref<2x32x64xf32, #tpu.memory_space<vmem>>, vector<1x32x64xf32>
    %287 = vector.shape_cast %286 : vector<1x32x64xf32> to vector<32x64xf32>
    %cst_133 = arith.constant dense<0.000000e+00> : vector<8x64xf32>
    %288 = tpu.matmul %285, %287, %cst_133 {dimension_numbers = #tpu.dot_dimension_numbers<[1], [0], [0], [1], [0, 0, 1, 1], [], []>} : vector<8x32xf32>, vector<32x64xf32>, vector<8x64xf32> -> vector<8x64xf32>
    %c1_134 = arith.constant 1 : index
    %c0_135 = arith.constant 0 : index
    %c0_136 = arith.constant 0 : index
    %289 = vector.load %arg10[%c1_134, %c0_135, %c0_136] : memref<2x1x64xf32, #tpu.memory_space<vmem>>, vector<1x1x64xf32>
    %290 = vector.shape_cast %289 : vector<1x1x64xf32> to vector<1x64xf32>
    %291 = vector.broadcast %290 : vector<1x64xf32> to vector<8x64xf32>
    %292 = arith.addf %288, %291 : vector<8x64xf32>
    %cst_137 = arith.constant 0.000000e+00 : f32
    %293 = vector.broadcast %cst_137 : f32 to vector<8x64xf32>
    %294 = arith.maximumf %292, %293 : vector<8x64xf32>
    %c1_138 = arith.constant 1 : index
    %c0_139 = arith.constant 0 : index
    %c0_140 = arith.constant 0 : index
    %295 = vector.load %arg11[%c1_138, %c0_139, %c0_140] : memref<2x64x32xf32, #tpu.memory_space<vmem>>, vector<1x64x32xf32>
    %296 = vector.shape_cast %295 : vector<1x64x32xf32> to vector<64x32xf32>
    %cst_141 = arith.constant dense<0.000000e+00> : vector<8x32xf32>
    %297 = tpu.matmul %294, %296, %cst_141 {dimension_numbers = #tpu.dot_dimension_numbers<[1], [0], [0], [1], [0, 0, 1, 1], [], []>} : vector<8x64xf32>, vector<64x32xf32>, vector<8x32xf32> -> vector<8x32xf32>
    %c1_142 = arith.constant 1 : index
    %c0_143 = arith.constant 0 : index
    %c0_144 = arith.constant 0 : index
    %298 = vector.load %arg12[%c1_142, %c0_143, %c0_144] : memref<2x1x32xf32, #tpu.memory_space<vmem>>, vector<1x1x32xf32>
    %299 = vector.shape_cast %298 : vector<1x1x32xf32> to vector<1x32xf32>
    %300 = vector.broadcast %299 : vector<1x32xf32> to vector<8x32xf32>
    %301 = arith.addf %297, %300 : vector<8x32xf32>
    %c1_145 = arith.constant 1 : index
    %c0_146 = arith.constant 0 : index
    %c0_147 = arith.constant 0 : index
    %302 = vector.load %arg15[%c1_145, %c0_146, %c0_147] : memref<2x1x32xf32, #tpu.memory_space<vmem>>, vector<1x1x32xf32>
    %303 = vector.shape_cast %302 : vector<1x1x32xf32> to vector<1x32xf32>
    %c1_148 = arith.constant 1 : index
    %c0_149 = arith.constant 0 : index
    %c0_150 = arith.constant 0 : index
    %304 = vector.load %arg16[%c1_148, %c0_149, %c0_150] : memref<2x1x32xf32, #tpu.memory_space<vmem>>, vector<1x1x32xf32>
    %305 = vector.shape_cast %304 : vector<1x1x32xf32> to vector<1x32xf32>
    %306 = arith.addf %285, %301 : vector<8x32xf32>
    %cst_151 = arith.constant dense<0.000000e+00> : vector<8xf32>
    %307 = vector.multi_reduction <add>, %306, %cst_151 [1] : vector<8x32xf32> to vector<8xf32>
    %308 = vector.shape_cast %307 : vector<8xf32> to vector<8x1xf32>
    %cst_152 = arith.constant 3.200000e+01 : f32
    %309 = vector.broadcast %cst_152 : f32 to vector<8x1xf32>
    %310 = arith.divf %308, %309 : vector<8x1xf32>
    %311 = vector.broadcast %310 : vector<8x1xf32> to vector<8x32xf32>
    %312 = arith.subf %306, %311 : vector<8x32xf32>
    %313 = arith.mulf %312, %312 : vector<8x32xf32>
    %cst_153 = arith.constant dense<0.000000e+00> : vector<8xf32>
    %314 = vector.multi_reduction <add>, %313, %cst_153 [1] : vector<8x32xf32> to vector<8xf32>
    %315 = vector.shape_cast %314 : vector<8xf32> to vector<8x1xf32>
    %cst_154 = arith.constant 3.200000e+01 : f32
    %316 = vector.broadcast %cst_154 : f32 to vector<8x1xf32>
    %317 = arith.divf %315, %316 : vector<8x1xf32>
    %cst_155 = arith.constant 9.99999974E-6 : f32
    %318 = vector.broadcast %cst_155 : f32 to vector<8x1xf32>
    %319 = arith.addf %317, %318 : vector<8x1xf32>
    %320 = math.rsqrt %319 : vector<8x1xf32>
    %321 = vector.broadcast %320 : vector<8x1xf32> to vector<8x32xf32>
    %322 = arith.mulf %312, %321 : vector<8x32xf32>
    %323 = vector.broadcast %303 : vector<1x32xf32> to vector<8x32xf32>
    %324 = arith.mulf %322, %323 : vector<8x32xf32>
    %325 = vector.broadcast %305 : vector<1x32xf32> to vector<8x32xf32>
    %326 = arith.addf %324, %325 : vector<8x32xf32>
    %cst_156 = arith.constant dense<0.000000e+00> : vector<32xf32>
    %327 = vector.multi_reduction <add>, %326, %cst_156 [0] : vector<8x32xf32> to vector<32xf32>
    %328 = vector.shape_cast %327 : vector<32xf32> to vector<1x32xf32>
    %cst_157 = arith.constant 8.000000e+00 : f32
    %329 = vector.broadcast %cst_157 : f32 to vector<1x32xf32>
    %330 = arith.divf %328, %329 : vector<1x32xf32>
    %331 = vector.shape_cast %330 : vector<1x32xf32> to vector<1x1x32xf32>
    %c0_158 = arith.constant 0 : index
    %c0_159 = arith.constant 0 : index
    %c0_160 = arith.constant 0 : index
    %332 = vector.load %arg17[%c0_158, %c0_159, %c0_160] : memref<1x1x32xf32, #tpu.memory_space<vmem>>, vector<1x1x32xf32>
    tpu.vector_store %arg17[%c0_158, %c0_159, %c0_160], %331 {strides = array<i32>} : memref<1x1x32xf32, #tpu.memory_space<vmem>>, vector<1x1x32xf32>,
    return
  }
  func.func @transform_0(%arg0: i32) -> (i32, i32, i32) {
    %c0_i32 = arith.constant 0 : i32
    %c0_i32_0 = arith.constant 0 : i32
    %c0_i32_1 = arith.constant 0 : i32
    return %arg0, %c0_i32, %c0_i32_0 : i32, i32, i32
  }
  func.func @transform_1(%arg0: i32) -> (i32, i32) {
    %c0_i32 = arith.constant 0 : i32
    %c0_i32_0 = arith.constant 0 : i32
    %c0_i32_1 = arith.constant 0 : i32
    return %c0_i32, %c0_i32_0 : i32, i32
  }
  func.func @transform_2(%arg0: i32) -> (i32, i32) {
    %c0_i32 = arith.constant 0 : i32
    %c0_i32_0 = arith.constant 0 : i32
    %c0_i32_1 = arith.constant 0 : i32
    return %c0_i32, %c0_i32_0 : i32, i32
  }
  func.func @transform_3(%arg0: i32) -> (i32, i32) {
    %c0_i32 = arith.constant 0 : i32
    %c0_i32_0 = arith.constant 0 : i32
    %c0_i32_1 = arith.constant 0 : i32
    return %c0_i32, %c0_i32_0 : i32, i32
  }
  func.func @transform_4(%arg0: i32) -> (i32, i32, i32) {
    %c0_i32 = arith.constant 0 : i32
    %c0_i32_0 = arith.constant 0 : i32
    %c0_i32_1 = arith.constant 0 : i32
    %c0_i32_2 = arith.constant 0 : i32
    return %c0_i32, %c0_i32_0, %c0_i32_1 : i32, i32, i32
  }
  func.func @transform_5(%arg0: i32) -> (i32, i32, i32) {
    %c0_i32 = arith.constant 0 : i32
    %c0_i32_0 = arith.constant 0 : i32
    %c0_i32_1 = arith.constant 0 : i32
    %c0_i32_2 = arith.constant 0 : i32
    return %c0_i32, %c0_i32_0, %c0_i32_1 : i32, i32, i32
  }
  func.func @transform_6(%arg0: i32) -> (i32, i32, i32) {
    %c0_i32 = arith.constant 0 : i32
    %c0_i32_0 = arith.constant 0 : i32
    %c0_i32_1 = arith.constant 0 : i32
    %c0_i32_2 = arith.constant 0 : i32
    return %c0_i32, %c0_i32_0, %c0_i32_1 : i32, i32, i32
  }
  func.func @transform_7(%arg0: i32) -> (i32, i32, i32) {
    %c0_i32 = arith.constant 0 : i32
    %c0_i32_0 = arith.constant 0 : i32
    %c0_i32_1 = arith.constant 0 : i32
    %c0_i32_2 = arith.constant 0 : i32
    return %c0_i32, %c0_i32_0, %c0_i32_1 : i32, i32, i32
  }
  func.func @transform_8(%arg0: i32) -> (i32, i32, i32) {
    %c0_i32 = arith.constant 0 : i32
    %c0_i32_0 = arith.constant 0 : i32
    %c0_i32_1 = arith.constant 0 : i32
    %c0_i32_2 = arith.constant 0 : i32
    return %c0_i32, %c0_i32_0, %c0_i32_1 : i32, i32, i32
  }
  func.func @transform_9(%arg0: i32) -> (i32, i32, i32) {
    %c0_i32 = arith.constant 0 : i32
    %c0_i32_0 = arith.constant 0 : i32
    %c0_i32_1 = arith.constant 0 : i32
    %c0_i32_2 = arith.constant 0 : i32
    return %c0_i32, %c0_i32_0, %c0_i32_1 : i32, i32, i32
  }
  func.func @transform_10(%arg0: i32) -> (i32, i32, i32) {
    %c0_i32 = arith.constant 0 : i32
    %c0_i32_0 = arith.constant 0 : i32
    %c0_i32_1 = arith.constant 0 : i32
    %c0_i32_2 = arith.constant 0 : i32
    return %c0_i32, %c0_i32_0, %c0_i32_1 : i32, i32, i32
  }
  func.func @transform_11(%arg0: i32) -> (i32, i32, i32) {
    %c0_i32 = arith.constant 0 : i32
    %c0_i32_0 = arith.constant 0 : i32
    %c0_i32_1 = arith.constant 0 : i32
    %c0_i32_2 = arith.constant 0 : i32
    return %c0_i32, %c0_i32_0, %c0_i32_1 : i32, i32, i32
  }
  func.func @transform_12(%arg0: i32) -> (i32, i32, i32) {
    %c0_i32 = arith.constant 0 : i32
    %c0_i32_0 = arith.constant 0 : i32
    %c0_i32_1 = arith.constant 0 : i32
    %c0_i32_2 = arith.constant 0 : i32
    return %c0_i32, %c0_i32_0, %c0_i32_1 : i32, i32, i32
  }
  func.func @transform_13(%arg0: i32) -> (i32, i32, i32) {
    %c0_i32 = arith.constant 0 : i32
    %c0_i32_0 = arith.constant 0 : i32
    %c0_i32_1 = arith.constant 0 : i32
    %c0_i32_2 = arith.constant 0 : i32
    return %c0_i32, %c0_i32_0, %c0_i32_1 : i32, i32, i32
  }
  func.func @transform_14(%arg0: i32) -> (i32, i32, i32) {
    %c0_i32 = arith.constant 0 : i32
    %c0_i32_0 = arith.constant 0 : i32
    %c0_i32_1 = arith.constant 0 : i32
    %c0_i32_2 = arith.constant 0 : i32
    return %c0_i32, %c0_i32_0, %c0_i32_1 : i32, i32, i32
  }
  func.func @transform_15(%arg0: i32) -> (i32, i32, i32) {
    %c0_i32 = arith.constant 0 : i32
    %c0_i32_0 = arith.constant 0 : i32
    %c0_i32_1 = arith.constant 0 : i32
    %c0_i32_2 = arith.constant 0 : i32
    return %c0_i32, %c0_i32_0, %c0_i32_1 : i32, i32, i32
  }
  func.func @transform_16(%arg0: i32) -> (i32, i32, i32) {
    %c0_i32 = arith.constant 0 : i32
    %c0_i32_0 = arith.constant 0 : i32
    %c0_i32_1 = arith.constant 0 : i32
    return %arg0, %c0_i32, %c0_i32_0 : i32, i32, i32
  }
}

</mosaic_0001>

<llo_original>
// kernel: tpu_custom_call.1
$region0: #{tpu_custom_call.1}
  #allocation0 [shape = 'u32[]', space=smem, size = 0x4, offset = 0x4, fixed_abs, tag = 'smem constant byte address 0x4 - core index']
  #allocation1 [shape = 'u32[144,128]{1,0:T(1,128)}', space=vmem, size = 0x12000, scoped, tag = 'internal scratch']
  %s0 = inlined_call_operand.hbm [shape: f32[2,8,16], index: 0, kind: input, shape index: {}]
  %s1 = inlined_call_operand.hbm [shape: f32[8,32], index: 1, kind: input, shape index: {}]
  %s2 = inlined_call_operand.hbm [shape: f32[16,32], index: 2, kind: input, shape index: {}]
  %s3 = inlined_call_operand.hbm [shape: f32[1,32], index: 3, kind: input, shape index: {}]
  %s4 = inlined_call_operand.vmem [shape: f32[2,32,96], index: 4, kind: input, shape index: {}]
  %s5 = inlined_call_operand.vmem [shape: f32[2,1,96], index: 5, kind: input, shape index: {}]
  %s6 = inlined_call_operand.vmem [shape: f32[2,32,32], index: 6, kind: input, shape index: {}]
  %s7 = inlined_call_operand.vmem [shape: f32[2,1,32], index: 7, kind: input, shape index: {}]
  %s8 = inlined_call_operand.vmem [shape: f32[2,32,64], index: 8, kind: input, shape index: {}]
  %s9 = inlined_call_operand.vmem [shape: f32[2,1,64], index: 9, kind: input, shape index: {}]
  %s10 = inlined_call_operand.vmem [shape: f32[2,64,32], index: 10, kind: input, shape index: {}]
  %s11 = inlined_call_operand.vmem [shape: f32[2,1,32], index: 11, kind: input, shape index: {}]
  %s12 = inlined_call_operand.vmem [shape: f32[2,1,32], index: 12, kind: input, shape index: {}]
  %s13 = inlined_call_operand.vmem [shape: f32[2,1,32], index: 13, kind: input, shape index: {}]
  %s14 = inlined_call_operand.vmem [shape: f32[2,1,32], index: 14, kind: input, shape index: {}]
  %s15 = inlined_call_operand.vmem [shape: f32[2,1,32], index: 15, kind: input, shape index: {}]
  %s16 = inlined_call_operand.hbm [shape: f32[2,1,32], index: 16, kind: output, shape index: {}]
  %s17 = sld [smem:[#allocation0]]
  $region113: #{tpu_custom_call.1} parent=0
    _
  %s19 = ssub.s32 1, %s17
  %s20 = scalar_select 0, %s19, %s17
  $region1: #{tpu_custom_call.1} parent=0
    #allocation2 [shape = 'u8[8192]{0}', space=vmem, size = 0x2000, scoped, tag = 'input window, operand 0']
    #allocation3 [shape = 's32[2]{0}', space=sflag, size = 0x8, scoped, tag = 'scoped memory for tpu_custom_call.1']
    #allocation4 [shape = 's32[2]{0}', space=sflag, size = 0x8, scoped, tag = 'scoped memory for tpu_custom_call.1']
    #allocation5 [shape = 'u8[4096]{0}', space=vmem, size = 0x1000, scoped, tag = 'input window, operand 1, single buffered']
    #allocation6 [shape = 's32[1]{0}', space=sflag, size = 0x4, scoped, tag = 'scoped memory for tpu_custom_call.1']
    #allocation7 [shape = 'u8[8192]{0}', space=vmem, size = 0x2000, scoped, tag = 'input window, operand 2, single buffered']
    #allocation8 [shape = 'u8[512]{0}', space=vmem, size = 0x400, scoped, tag = 'input window, operand 3, single buffered']
    #allocation9 [shape = 's32[1]{0}', space=sflag, size = 0x4, scoped, tag = 'scoped memory for tpu_custom_call.1']
    #allocation10 [shape = 'u8[1024]{0}', space=vmem, size = 0x400, scoped, tag = 'output window, operand 0']
    %21 = vsyncpa [#allocation3], 0
    %s22 = scalar_lea.sflag [#allocation3], 1
    %23 = vsyncpa %s22, 0
    %24 = vsyncpa [#allocation6], 0
    %25 = vsyncpa [#allocation9], 0
    %26 = vsyncpa [#allocation4], 0
    %s27 = scalar_lea.sflag [#allocation4], 1
    %28 = vsyncpa %s27, 0
    loop: start=0, step=1, limit=4
    $region2: #{tpu_custom_call.1} parent=1 // loop_pre_header
      _
    $region3: #{tpu_custom_call.1} parent=1 // loop_header
      %s30 = sphi 0, %s34
      %p31 = scmp.ge.s32.totalorder %s30, 4
      %s40 = sphi 0, %s42
      %s43 = sphi 0, %s40
      %s44 = sphi 0, %s43
      %s60 = sphi 0, %s44
      %s64 = sphi 0, %s64
      %s66 = sphi 0, %s64
      %s67 = sphi 0, %s66
      %s81 = sphi 0, %s67
      %s85 = sphi 0, %s85
      %s87 = sphi 0, %s85
      %s88 = sphi 0, %s87
      %s102 = sphi 0, %s88
      %s106 = sphi 0, %s106
      %s108 = sphi 0, %s106
      %s109 = sphi 0, %s108
      %s123 = sphi 0, %s109
      %s127 = sphi 0, %s127
      %s129 = sphi 0, %s127
      %s130 = sphi 0, %s129
      %s144 = sphi 0, %s130
      %s148 = sphi 0, %s148
      %s150 = sphi 0, %s148
      %s151 = sphi 0, %s150
      %s165 = sphi 0, %s151
      %s169 = sphi 0, %s169
      %s171 = sphi 0, %s169
      %s172 = sphi 0, %s171
      %s186 = sphi 0, %s172
      %s190 = sphi 0, %s190
      %s192 = sphi 0, %s190
      %s193 = sphi 0, %s192
      %s207 = sphi 0, %s193
      %s211 = sphi 0, %s211
      %s213 = sphi 0, %s211
      %s214 = sphi 0, %s213
      %s228 = sphi 0, %s214
      %s232 = sphi 0, %s232
      %s234 = sphi 0, %s232
      %s235 = sphi 0, %s234
      %s249 = sphi 0, %s235
      %s253 = sphi 0, %s253
      %s255 = sphi 0, %s253
      %s256 = sphi 0, %s255
      %s270 = sphi 0, %s256
      %s274 = sphi 0, %s274
      %s276 = sphi 0, %s274
      %s277 = sphi 0, %s276
      %s291 = sphi 0, %s277
      %s295 = sphi 0, %s295
      %s297 = sphi 0, %s295
      %s298 = sphi 0, %s297
      %s312 = sphi 0, %s298
      %s316 = sphi 0, %s316
      %s318 = sphi 0, %s316
      %s319 = sphi 0, %s318
      %s333 = sphi 0, %s319
      %s337 = sphi 0, %s337
      %s339 = sphi 0, %s337
      %s340 = sphi 0, %s339
      %s354 = sphi 0, %s340
      %s358 = sphi 0, %s358
      %s360 = sphi 0, %s358
      %s361 = sphi 0, %s360
      %s375 = sphi 0, %s361
      %s381 = sphi 0, %s383
      %s384 = sphi 0, %s381
      %s385 = sphi 0, %s384
      %s401 = sphi 0, %s385
    $region4: #{tpu_custom_call.1} parent=1 // loop_header_branch
      %33 = sbr.rel (%p31) target = $region8
    $region5: #{tpu_custom_call.1} parent=1 // loop_body
      %s35 = ssub.s32 %s30, 1
      %s36 = ssub.s32 %s30, 2
      %s37 = sadd.s32 %s30, 1
      %s38 = ssub.s32 %s30, %s37
      %p39 = scmp.eq.s32.totalorder %s38, 0
      %s41 = sadd.s32 %s40, 1
      %s42 = scalar_select %p39, %s40, %s41
      %p45 = pneg %p39
      %p46 = scmp.eq.s32.totalorder %s30, 1
      %p47 = por %p45, %p46
      %p48 = scmp.ne.s32.totalorder %s40, %s43
      %p49 = scmp.eq.s32.totalorder %s30, 0
      %p50 = por %p48, %p49
      %p51 = scmp.ne.s32.totalorder %s40, %s43
      %p52 = scmp.eq.s32.totalorder %s35, 1
      %p53 = por %p51, %p52
      %p54 = scmp.ne.s32.totalorder %s43, %s44
      %p55 = scmp.eq.s32.totalorder %s35, 0
      %p56 = por %p54, %p55
      %p57 = scmp.ne.s32.totalorder %s43, %s44
      %p58 = scmp.eq.s32.totalorder %s36, 1
      %p59 = por %p57, %p58
      %p61 = scmp.ne.s32.totalorder %s44, %s60
      %p62 = scmp.eq.s32.totalorder %s36, 0
      %p63 = por %p61, %p62
      %s65 = sadd.s32 %s64, 1
      %p68 = scmp.eq.s32.totalorder %s30, 1
      %p69 = scmp.ne.s32.totalorder %s64, %s66
      %p70 = scmp.eq.s32.totalorder %s30, 0
      %p71 = por %p69, %p70
      %p72 = scmp.ne.s32.totalorder %s64, %s66
      %p73 = scmp.eq.s32.totalorder %s35, 1
      %p74 = por %p72, %p73
      %p75 = scmp.ne.s32.totalorder %s66, %s67
      %p76 = scmp.eq.s32.totalorder %s35, 0
      %p77 = por %p75, %p76
      %p78 = scmp.ne.s32.totalorder %s66, %s67
      %p79 = scmp.eq.s32.totalorder %s36, 1
      %p80 = por %p78, %p79
      %p82 = scmp.ne.s32.totalorder %s67, %s81
      %p83 = scmp.eq.s32.totalorder %s36, 0
      %p84 = por %p82, %p83
      %s86 = sadd.s32 %s85, 1
      %p89 = scmp.eq.s32.totalorder %s30, 1
      %p90 = scmp.ne.s32.totalorder %s85, %s87
      %p91 = scmp.eq.s32.totalorder %s30, 0
      %p92 = por %p90, %p91
      %p93 = scmp.ne.s32.totalorder %s85, %s87
      %p94 = scmp.eq.s32.totalorder %s35, 1
      %p95 = por %p93, %p94
      %p96 = scmp.ne.s32.totalorder %s87, %s88
      %p97 = scmp.eq.s32.totalorder %s35, 0
      %p98 = por %p96, %p97
      %p99 = scmp.ne.s32.totalorder %s87, %s88
      %p100 = scmp.eq.s32.totalorder %s36, 1
      %p101 = por %p99, %p100
      %p103 = scmp.ne.s32.totalorder %s88, %s102
      %p104 = scmp.eq.s32.totalorder %s36, 0
      %p105 = por %p103, %p104
      %s107 = sadd.s32 %s106, 1
      %p110 = scmp.eq.s32.totalorder %s30, 1
      %p111 = scmp.ne.s32.totalorder %s106, %s108
      %p112 = scmp.eq.s32.totalorder %s30, 0
      %p113 = por %p111, %p112
      %p114 = scmp.ne.s32.totalorder %s106, %s108
      %p115 = scmp.eq.s32.totalorder %s35, 1
      %p116 = por %p114, %p115
      %p117 = scmp.ne.s32.totalorder %s108, %s109
      %p118 = scmp.eq.s32.totalorder %s35, 0
      %p119 = por %p117, %p118
      %p120 = scmp.ne.s32.totalorder %s108, %s109
      %p121 = scmp.eq.s32.totalorder %s36, 1
      %p122 = por %p120, %p121
      %p124 = scmp.ne.s32.totalorder %s109, %s123
      %p125 = scmp.eq.s32.totalorder %s36, 0
      %p126 = por %p124, %p125
      %s128 = sadd.s32 %s127, 1
      %p131 = scmp.eq.s32.totalorder %s30, 1
      %p132 = scmp.ne.s32.totalorder %s127, %s129
      %p133 = scmp.eq.s32.totalorder %s30, 0
      %p134 = por %p132, %p133
      %p135 = scmp.ne.s32.totalorder %s127, %s129
      %p136 = scmp.eq.s32.totalorder %s35, 1
      %p137 = por %p135, %p136
      %p138 = scmp.ne.s32.totalorder %s129, %s130
      %p139 = scmp.eq.s32.totalorder %s35, 0
      %p140 = por %p138, %p139
      %p141 = scmp.ne.s32.totalorder %s129, %s130
      %p142 = scmp.eq.s32.totalorder %s36, 1
      %p143 = por %p141, %p142
      %p145 = scmp.ne.s32.totalorder %s130, %s144
      %p146 = scmp.eq.s32.totalorder %s36, 0
      %p147 = por %p145, %p146
      %s149 = sadd.s32 %s148, 1
      %p152 = scmp.eq.s32.totalorder %s30, 1
      %p153 = scmp.ne.s32.totalorder %s148, %s150
      %p154 = scmp.eq.s32.totalorder %s30, 0
      %p155 = por %p153, %p154
      %p156 = scmp.ne.s32.totalorder %s148, %s150
      %p157 = scmp.eq.s32.totalorder %s35, 1
      %p158 = por %p156, %p157
      %p159 = scmp.ne.s32.totalorder %s150, %s151
      %p160 = scmp.eq.s32.totalorder %s35, 0
      %p161 = por %p159, %p160
      %p162 = scmp.ne.s32.totalorder %s150, %s151
      %p163 = scmp.eq.s32.totalorder %s36, 1
      %p164 = por %p162, %p163
      %p166 = scmp.ne.s32.totalorder %s151, %s165
      %p167 = scmp.eq.s32.totalorder %s36, 0
      %p168 = por %p166, %p167
      %s170 = sadd.s32 %s169, 1
      %p173 = scmp.eq.s32.totalorder %s30, 1
      %p174 = scmp.ne.s32.totalorder %s169, %s171
      %p175 = scmp.eq.s32.totalorder %s30, 0
      %p176 = por %p174, %p175
      %p177 = scmp.ne.s32.totalorder %s169, %s171
      %p178 = scmp.eq.s32.totalorder %s35, 1
      %p179 = por %p177, %p178
      %p180 = scmp.ne.s32.totalorder %s171, %s172
      %p181 = scmp.eq.s32.totalorder %s35, 0
      %p182 = por %p180, %p181
      %p183 = scmp.ne.s32.totalorder %s171, %s172
      %p184 = scmp.eq.s32.totalorder %s36, 1
      %p185 = por %p183, %p184
      %p187 = scmp.ne.s32.totalorder %s172, %s186
      %p188 = scmp.eq.s32.totalorder %s36, 0
      %p189 = por %p187, %p188
      %s191 = sadd.s32 %s190, 1
      %p194 = scmp.eq.s32.totalorder %s30, 1
      %p195 = scmp.ne.s32.totalorder %s190, %s192
      %p196 = scmp.eq.s32.totalorder %s30, 0
      %p197 = por %p195, %p196
      %p198 = scmp.ne.s32.totalorder %s190, %s192
      %p199 = scmp.eq.s32.totalorder %s35, 1
      %p200 = por %p198, %p199
      %p201 = scmp.ne.s32.totalorder %s192, %s193
      %p202 = scmp.eq.s32.totalorder %s35, 0
      %p203 = por %p201, %p202
      %p204 = scmp.ne.s32.totalorder %s192, %s193
      %p205 = scmp.eq.s32.totalorder %s36, 1
      %p206 = por %p204, %p205
      %p208 = scmp.ne.s32.totalorder %s193, %s207
      %p209 = scmp.eq.s32.totalorder %s36, 0
      %p210 = por %p208, %p209
      %s212 = sadd.s32 %s211, 1
      %p215 = scmp.eq.s32.totalorder %s30, 1
      %p216 = scmp.ne.s32.totalorder %s211, %s213
      %p217 = scmp.eq.s32.totalorder %s30, 0
      %p218 = por %p216, %p217
      %p219 = scmp.ne.s32.totalorder %s211, %s213
      %p220 = scmp.eq.s32.totalorder %s35, 1
      %p221 = por %p219, %p220
      %p222 = scmp.ne.s32.totalorder %s213, %s214
      %p223 = scmp.eq.s32.totalorder %s35, 0
      %p224 = por %p222, %p223
      %p225 = scmp.ne.s32.totalorder %s213, %s214
      %p226 = scmp.eq.s32.totalorder %s36, 1
      %p227 = por %p225, %p226
      %p229 = scmp.ne.s32.totalorder %s214, %s228
      %p230 = scmp.eq.s32.totalorder %s36, 0
      %p231 = por %p229, %p230
      %s233 = sadd.s32 %s232, 1
      %p236 = scmp.eq.s32.totalorder %s30, 1
      %p237 = scmp.ne.s32.totalorder %s232, %s234
      %p238 = scmp.eq.s32.totalorder %s30, 0
      %p239 = por %p237, %p238
      %p240 = scmp.ne.s32.totalorder %s232, %s234
      %p241 = scmp.eq.s32.totalorder %s35, 1
      %p242 = por %p240, %p241
      %p243 = scmp.ne.s32.totalorder %s234, %s235
      %p244 = scmp.eq.s32.totalorder %s35, 0
      %p245 = por %p243, %p244
      %p246 = scmp.ne.s32.totalorder %s234, %s235
      %p247 = scmp.eq.s32.totalorder %s36, 1
      %p248 = por %p246, %p247
      %p250 = scmp.ne.s32.totalorder %s235, %s249
      %p251 = scmp.eq.s32.totalorder %s36, 0
      %p252 = por %p250, %p251
      %s254 = sadd.s32 %s253, 1
      %p257 = scmp.eq.s32.totalorder %s30, 1
      %p258 = scmp.ne.s32.totalorder %s253, %s255
      %p259 = scmp.eq.s32.totalorder %s30, 0
      %p260 = por %p258, %p259
      %p261 = scmp.ne.s32.totalorder %s253, %s255
      %p262 = scmp.eq.s32.totalorder %s35, 1
      %p263 = por %p261, %p262
      %p264 = scmp.ne.s32.totalorder %s255, %s256
      %p265 = scmp.eq.s32.totalorder %s35, 0
      %p266 = por %p264, %p265
      %p267 = scmp.ne.s32.totalorder %s255, %s256
      %p268 = scmp.eq.s32.totalorder %s36, 1
      %p269 = por %p267, %p268
      %p271 = scmp.ne.s32.totalorder %s256, %s270
      %p272 = scmp.eq.s32.totalorder %s36, 0
      %p273 = por %p271, %p272
      %s275 = sadd.s32 %s274, 1
      %p278 = scmp.eq.s32.totalorder %s30, 1
      %p279 = scmp.ne.s32.totalorder %s274, %s276
      %p280 = scmp.eq.s32.totalorder %s30, 0
      %p281 = por %p279, %p280
      %p282 = scmp.ne.s32.totalorder %s274, %s276
      %p283 = scmp.eq.s32.totalorder %s35, 1
      %p284 = por %p282, %p283
      %p285 = scmp.ne.s32.totalorder %s276, %s277
      %p286 = scmp.eq.s32.totalorder %s35, 0
      %p287 = por %p285, %p286
      %p288 = scmp.ne.s32.totalorder %s276, %s277
      %p289 = scmp.eq.s32.totalorder %s36, 1
      %p290 = por %p288, %p289
      %p292 = scmp.ne.s32.totalorder %s277, %s291
      %p293 = scmp.eq.s32.totalorder %s36, 0
      %p294 = por %p292, %p293
      %s296 = sadd.s32 %s295, 1
      %p299 = scmp.eq.s32.totalorder %s30, 1
      %p300 = scmp.ne.s32.totalorder %s295, %s297
      %p301 = scmp.eq.s32.totalorder %s30, 0
      %p302 = por %p300, %p301
      %p303 = scmp.ne.s32.totalorder %s295, %s297
      %p304 = scmp.eq.s32.totalorder %s35, 1
      %p305 = por %p303, %p304
      %p306 = scmp.ne.s32.totalorder %s297, %s298
      %p307 = scmp.eq.s32.totalorder %s35, 0
      %p308 = por %p306, %p307
      %p309 = scmp.ne.s32.totalorder %s297, %s298
      %p310 = scmp.eq.s32.totalorder %s36, 1
      %p311 = por %p309, %p310
      %p313 = scmp.ne.s32.totalorder %s298, %s312
      %p314 = scmp.eq.s32.totalorder %s36, 0
      %p315 = por %p313, %p314
      %s317 = sadd.s32 %s316, 1
      %p320 = scmp.eq.s32.totalorder %s30, 1
      %p321 = scmp.ne.s32.totalorder %s316, %s318
      %p322 = scmp.eq.s32.totalorder %s30, 0
      %p323 = por %p321, %p322
      %p324 = scmp.ne.s32.totalorder %s316, %s318
      %p325 = scmp.eq.s32.totalorder %s35, 1
      %p326 = por %p324, %p325
      %p327 = scmp.ne.s32.totalorder %s318, %s319
      %p328 = scmp.eq.s32.totalorder %s35, 0
      %p329 = por %p327, %p328
      %p330 = scmp.ne.s32.totalorder %s318, %s319
      %p331 = scmp.eq.s32.totalorder %s36, 1
      %p332 = por %p330, %p331
      %p334 = scmp.ne.s32.totalorder %s319, %s333
      %p335 = scmp.eq.s32.totalorder %s36, 0
      %p336 = por %p334, %p335
      %s338 = sadd.s32 %s337, 1
      %p341 = scmp.eq.s32.totalorder %s30, 1
      %p342 = scmp.ne.s32.totalorder %s337, %s339
      %p343 = scmp.eq.s32.totalorder %s30, 0
      %p344 = por %p342, %p343
      %p345 = scmp.ne.s32.totalorder %s337, %s339
      %p346 = scmp.eq.s32.totalorder %s35, 1
      %p347 = por %p345, %p346
      %p348 = scmp.ne.s32.totalorder %s339, %s340
      %p349 = scmp.eq.s32.totalorder %s35, 0
      %p350 = por %p348, %p349
      %p351 = scmp.ne.s32.totalorder %s339, %s340
      %p352 = scmp.eq.s32.totalorder %s36, 1
      %p353 = por %p351, %p352
      %p355 = scmp.ne.s32.totalorder %s340, %s354
      %p356 = scmp.eq.s32.totalorder %s36, 0
      %p357 = por %p355, %p356
      %s359 = sadd.s32 %s358, 1
      %p362 = scmp.eq.s32.totalorder %s30, 1
      %p363 = scmp.ne.s32.totalorder %s358, %s360
      %p364 = scmp.eq.s32.totalorder %s30, 0
      %p365 = por %p363, %p364
      %p366 = scmp.ne.s32.totalorder %s358, %s360
      %p367 = scmp.eq.s32.totalorder %s35, 1
      %p368 = por %p366, %p367
      %p369 = scmp.ne.s32.totalorder %s360, %s361
      %p370 = scmp.eq.s32.totalorder %s35, 0
      %p371 = por %p369, %p370
      %p372 = scmp.ne.s32.totalorder %s360, %s361
      %p373 = scmp.eq.s32.totalorder %s36, 1
      %p374 = por %p372, %p373
      %p376 = scmp.ne.s32.totalorder %s361, %s375
      %p377 = scmp.eq.s32.totalorder %s36, 0
      %p378 = por %p376, %p377
      %s379 = ssub.s32 %s30, %s37
      %p380 = scmp.eq.s32.totalorder %s379, 0
      %s382 = sadd.s32 %s381, 1
      %s383 = scalar_select %p380, %s381, %s382
      %p386 = pneg %p380
      %p387 = scmp.eq.s32.totalorder %s30, 1
      %p388 = por %p386, %p387
      %p389 = scmp.ne.s32.totalorder %s381, %s384
      %p390 = scmp.eq.s32.totalorder %s30, 0
      %p391 = por %p389, %p390
      %p392 = scmp.ne.s32.totalorder %s381, %s384
      %p393 = scmp.eq.s32.totalorder %s35, 1
      %p394 = por %p392, %p393
      %p395 = scmp.ne.s32.totalorder %s384, %s385
      %p396 = scmp.eq.s32.totalorder %s35, 0
      %p397 = por %p395, %p396
      %p398 = scmp.ne.s32.totalorder %s384, %s385
      %p399 = scmp.eq.s32.totalorder %s36, 1
      %p400 = por %p398, %p399
      %p402 = scmp.ne.s32.totalorder %s385, %s401
      %p403 = scmp.eq.s32.totalorder %s36, 0
      %p404 = por %p402, %p403
      %p405 = scmp.le.s32.totalorder 1, %s30
      %p406 = scmp.lt.s32.totalorder %s30, 3
      %p407 = pnand %p405, %p406
      %p408 = pneg %p407
      // Predicated region
      $region9: #{tpu_custom_call.1} parent=5 // pred_check
        _
      $region10: #{tpu_custom_call.1} parent=5 // pred_check_branch
        %410 = sbr.rel (%p407) target = $region12
      $region11: #{tpu_custom_call.1} parent=5 // pred_region
        %s411 = ssub.s32 %s30, 1
        // Predicated region
        $region13: #{tpu_custom_call.1} parent=11 // pred_check
          %p412 = pneg %p77
        $region14: #{tpu_custom_call.1} parent=11 // pred_check_branch
          %414 = sbr.rel (%p412) target = $region16
        $region15: #{tpu_custom_call.1} parent=11 // pred_region
          %s416 = ssub.s32 128, 128
          %417 = vsyncadd [#allocation6], %s416
          %s419 = sshll.u32 [#allocation5], 4
          %s420 = int_to_ptr.vmem [resolvable:$true] %s419
          %422 = dma.hbm_to_vmem [thread:$0]  %s1, 128, %s420, [#allocation6]
        $region16: #{tpu_custom_call.1} parent=11 // pred_fallthru
          _
        // Predicated region
        $region17: #{tpu_custom_call.1} parent=11 // pred_check
          %p423 = pneg %p98
        $region18: #{tpu_custom_call.1} parent=11 // pred_check_branch
          %425 = sbr.rel (%p423) target = $region20
        $region19: #{tpu_custom_call.1} parent=11 // pred_region
          %s427 = ssub.s32 256, 256
          %428 = vsyncadd [#allocation6], %s427
          %s429 = sshll.u32 [#allocation7], 4
          %s430 = int_to_ptr.vmem [resolvable:$true] %s429
          %435 = dma.hbm_to_vmem [thread:$0]  %s2, 256, %s430, [#allocation6], 128, 128, 8
        $region20: #{tpu_custom_call.1} parent=11 // pred_fallthru
          _
        // Predicated region
        $region21: #{tpu_custom_call.1} parent=11 // pred_check
          %p436 = pneg %p119
        $region22: #{tpu_custom_call.1} parent=11 // pred_check_branch
          %438 = sbr.rel (%p436) target = $region24
        $region23: #{tpu_custom_call.1} parent=11 // pred_region
          %s440 = ssub.s32 16, 16
          %441 = vsyncadd [#allocation9], %s440
          %s443 = sshll.u32 [#allocation8], 4
          %s444 = int_to_ptr.vmem [resolvable:$true] %s443
          %446 = dma.hbm_to_vmem [thread:$0]  %s3, 16, %s444, [#allocation9]
        $region24: #{tpu_custom_call.1} parent=11 // pred_fallthru
          _
        // Predicated region
        $region25: #{tpu_custom_call.1} parent=11 // pred_check
          %p447 = pneg %p140
        $region26: #{tpu_custom_call.1} parent=11 // pred_check_branch
          %449 = sbr.rel (%p447) target = $region28
        $region27: #{tpu_custom_call.1} parent=11 // pred_region
          _
        $region28: #{tpu_custom_call.1} parent=11 // pred_fallthru
          _
        // Predicated region
        $region29: #{tpu_custom_call.1} parent=11 // pred_check
          %p450 = pneg %p161
        $region30: #{tpu_custom_call.1} parent=11 // pred_check_branch
          %452 = sbr.rel (%p450) target = $region32
        $region31: #{tpu_custom_call.1} parent=11 // pred_region
          _
        $region32: #{tpu_custom_call.1} parent=11 // pred_fallthru
          _
        // Predicated region
        $region33: #{tpu_custom_call.1} parent=11 // pred_check
          %p453 = pneg %p182
        $region34: #{tpu_custom_call.1} parent=11 // pred_check_branch
          %455 = sbr.rel (%p453) target = $region36
        $region35: #{tpu_custom_call.1} parent=11 // pred_region
          _
        $region36: #{tpu_custom_call.1} parent=11 // pred_fallthru
          _
        // Predicated region
        $region37: #{tpu_custom_call.1} parent=11 // pred_check
          %p456 = pneg %p203
        $region38: #{tpu_custom_call.1} parent=11 // pred_check_branch
          %458 = sbr.rel (%p456) target = $region40
        $region39: #{tpu_custom_call.1} parent=11 // pred_region
          _
        $region40: #{tpu_custom_call.1} parent=11 // pred_fallthru
          _
        // Predicated region
        $region41: #{tpu_custom_call.1} parent=11 // pred_check
          %p459 = pneg %p224
        $region42: #{tpu_custom_call.1} parent=11 // pred_check_branch
          %461 = sbr.rel (%p459) target = $region44
        $region43: #{tpu_custom_call.1} parent=11 // pred_region
          _
        $region44: #{tpu_custom_call.1} parent=11 // pred_fallthru
          _
        // Predicated region
        $region45: #{tpu_custom_call.1} parent=11 // pred_check
          %p462 = pneg %p245
        $region46: #{tpu_custom_call.1} parent=11 // pred_check_branch
          %464 = sbr.rel (%p462) target = $region48
        $region47: #{tpu_custom_call.1} parent=11 // pred_region
          _
        $region48: #{tpu_custom_call.1} parent=11 // pred_fallthru
          _
        // Predicated region
        $region49: #{tpu_custom_call.1} parent=11 // pred_check
          %p465 = pneg %p266
        $region50: #{tpu_custom_call.1} parent=11 // pred_check_branch
          %467 = sbr.rel (%p465) target = $region52
        $region51: #{tpu_custom_call.1} parent=11 // pred_region
          _
        $region52: #{tpu_custom_call.1} parent=11 // pred_fallthru
          _
        // Predicated region
        $region53: #{tpu_custom_call.1} parent=11 // pred_check
          %p468 = pneg %p287
        $region54: #{tpu_custom_call.1} parent=11 // pred_check_branch
          %470 = sbr.rel (%p468) target = $region56
        $region55: #{tpu_custom_call.1} parent=11 // pred_region
          _
        $region56: #{tpu_custom_call.1} parent=11 // pred_fallthru
          _
        // Predicated region
        $region57: #{tpu_custom_call.1} parent=11 // pred_check
          %p471 = pneg %p308
        $region58: #{tpu_custom_call.1} parent=11 // pred_check_branch
          %473 = sbr.rel (%p471) target = $region60
        $region59: #{tpu_custom_call.1} parent=11 // pred_region
          _
        $region60: #{tpu_custom_call.1} parent=11 // pred_fallthru
          _
        // Predicated region
        $region61: #{tpu_custom_call.1} parent=11 // pred_check
          %p474 = pneg %p329
        $region62: #{tpu_custom_call.1} parent=11 // pred_check_branch
          %476 = sbr.rel (%p474) target = $region64
        $region63: #{tpu_custom_call.1} parent=11 // pred_region
          _
        $region64: #{tpu_custom_call.1} parent=11 // pred_fallthru
          _
        // Predicated region
        $region65: #{tpu_custom_call.1} parent=11 // pred_check
          %p477 = pneg %p350
        $region66: #{tpu_custom_call.1} parent=11 // pred_check_branch
          %479 = sbr.rel (%p477) target = $region68
        $region67: #{tpu_custom_call.1} parent=11 // pred_region
          _
        $region68: #{tpu_custom_call.1} parent=11 // pred_fallthru
          _
        // Predicated region
        $region69: #{tpu_custom_call.1} parent=11 // pred_check
          %p480 = pneg %p371
        $region70: #{tpu_custom_call.1} parent=11 // pred_check_branch
          %482 = sbr.rel (%p480) target = $region72
        $region71: #{tpu_custom_call.1} parent=11 // pred_region
          _
        $region72: #{tpu_custom_call.1} parent=11 // pred_fallthru
          _
      $region12: #{tpu_custom_call.1} parent=5 // pred_fallthru
        _
      %p483 = scmp.lt.s32.totalorder %s30, 2
      // Predicated region
      $region73: #{tpu_custom_call.1} parent=5 // pred_check
        %p484 = pneg %p483
      $region74: #{tpu_custom_call.1} parent=5 // pred_check_branch
        %486 = sbr.rel (%p484) target = $region76
      $region75: #{tpu_custom_call.1} parent=5 // pred_region
        // Predicated region
        $region77: #{tpu_custom_call.1} parent=75 // pred_check
          %p487 = pneg %p50
        $region78: #{tpu_custom_call.1} parent=75 // pred_check_branch
          %489 = sbr.rel (%p487) target = $region80
        $region79: #{tpu_custom_call.1} parent=75 // pred_region
          %s490 = sand.u32 %s40, 1
          %s491 = scalar_lea.sflag [#allocation3], %s490
          %s492 = sand.u32 %s40, 1
          %s493 = smul.addr %s492, 8
          %s494 = scalar_lea.vmem [#allocation2], %s493
          %s496 = ssub.s32 128, 128
          %497 = vsyncadd %s491, %s496
          %s498 = smul.addr %s30, 128
          %s499 = scalar_lea.hbm %s0, %s498
          %s501 = sshll.u32 %s494, 4
          %s502 = int_to_ptr.vmem [resolvable:$true] %s501
          %504 = dma.hbm_to_vmem [thread:$0]  %s499, 128, %s502, %s491
        $region80: #{tpu_custom_call.1} parent=75 // pred_fallthru
          _
      $region76: #{tpu_custom_call.1} parent=5 // pred_fallthru
        _
      %p505 = scmp.le.s32.totalorder 1, %s30
      %p506 = scmp.lt.s32.totalorder %s30, 3
      %p507 = pnand %p505, %p506
      %p508 = pneg %p507
      // Predicated region
      $region81: #{tpu_custom_call.1} parent=5 // pred_check
        _
      $region82: #{tpu_custom_call.1} parent=5 // pred_check_branch
        %510 = sbr.rel (%p507) target = $region84
      $region83: #{tpu_custom_call.1} parent=5 // pred_region
        %s511 = ssub.s32 %s30, 1
        %s512 = sand.u32 %s43, 1
        %s513 = scalar_lea.sflag [#allocation3], %s512
        %s514 = sand.u32 %s43, 1
        %s515 = smul.addr %s514, 8
        %s516 = scalar_lea.vmem [#allocation2], %s515
        // Predicated region
        $region85: #{tpu_custom_call.1} parent=83 // pred_check
          %p517 = pneg %p56
        $region86: #{tpu_custom_call.1} parent=83 // pred_check_branch
          %519 = sbr.rel (%p517) target = $region88
        $region87: #{tpu_custom_call.1} parent=83 // pred_region
          %520 = dma.done %s513, 128
        $region88: #{tpu_custom_call.1} parent=83 // pred_fallthru
          _
        // Predicated region
        $region89: #{tpu_custom_call.1} parent=83 // pred_check
          %p521 = pneg %p77
        $region90: #{tpu_custom_call.1} parent=83 // pred_check_branch
          %523 = sbr.rel (%p521) target = $region92
        $region91: #{tpu_custom_call.1} parent=83 // pred_region
          %524 = dma.done [#allocation6], 128
        $region92: #{tpu_custom_call.1} parent=83 // pred_fallthru
          _
        // Predicated region
        $region93: #{tpu_custom_call.1} parent=83 // pred_check
          %p525 = pneg %p98
        $region94: #{tpu_custom_call.1} parent=83 // pred_check_branch
          %527 = sbr.rel (%p525) target = $region96
        $region95: #{tpu_custom_call.1} parent=83 // pred_region
          %528 = dma.done [#allocation6], 256
        $region96: #{tpu_custom_call.1} parent=83 // pred_fallthru
          _
        // Predicated region
        $region97: #{tpu_custom_call.1} parent=83 // pred_check
          %p529 = pneg %p119
        $region98: #{tpu_custom_call.1} parent=83 // pred_check_branch
          %531 = sbr.rel (%p529) target = $region100
        $region99: #{tpu_custom_call.1} parent=83 // pred_region
          %532 = dma.done [#allocation9], 16
        $region100: #{tpu_custom_call.1} parent=83 // pred_fallthru
          _
        %s533 = sand.u32 %s43, 1
        %s534 = scalar_lea.sflag [#allocation3], %s533
        %s535 = sand.u32 %s43, 1
        %s536 = smul.addr %s535, 8
        %s537 = scalar_lea.vmem [#allocation2], %s536
        %p538 = pneg %p56
        %p539 = pneg %p53
        %p540 = pneg %p77
        %p541 = pneg %p74
        %p542 = pneg %p98
        %p543 = pneg %p95
        %p544 = pneg %p119
        %p545 = pneg %p116
        %p546 = pneg %p140
        %p547 = pneg %p137
        %p548 = pneg %p161
        %p549 = pneg %p158
        %p550 = pneg %p182
        %p551 = pneg %p179
        %p552 = pneg %p203
        %p553 = pneg %p200
        %p554 = pneg %p224
        %p555 = pneg %p221
        %p556 = pneg %p245
        %p557 = pneg %p242
        %p558 = pneg %p266
        %p559 = pneg %p263
        %p560 = pneg %p287
        %p561 = pneg %p284
        %p562 = pneg %p308
        %p563 = pneg %p305
        %p564 = pneg %p329
        %p565 = pneg %p326
        %p566 = pneg %p350
        %p567 = pneg %p347
        %p568 = pneg %p371
        %p569 = pneg %p368
        %p570 = pneg %p397
        %p571 = pneg %p394
        %s572 = sand.u32 %s384, 1
        %s573 = scalar_lea.sflag [#allocation4], %s572
        %s574 = sand.u32 %s384, 1
        %s575 = scalar_lea.vmem [#allocation10], %s574
        %v576 = vld [vmem:[%s516] sm:$0xff]
        %v577 = vld [vmem:[#allocation7] sm:$0xff]
        %v578 = vld [vmem:[#allocation7 + $0x8] sm:$0xff]
        %v579 = vld [vmem:[#allocation8] sm:$0x1]
        %v581 = vlaneseq
        %v582 = vshrl.u32 %v581, 7
        %v583 = vsub.s32 0, %v582
        %v584 = vrot.slane %v579, %v583
        %vm586 = vcmask 130048
        %v588 = vsel %vm586, %v576, 0
        %590 = vmatprep.subr.mxu0 0.0
        %591 = vmatpush1.msra.mxu0 0.0
        %592 = vmatprep.subr.mxu0 0.0
        %593 = vmatpush1.msra.mxu0 0.0
        %594 = vmatprep.subr.mxu0 0.0
        %595 = vmatpush1.msra.mxu0 0.0
        %596 = vmatprep.subr.mxu0 0.0
        %597 = vmatpush1.msra.mxu0 0.0
        %598 = vmatprep.subr.mxu0 0.0
        %599 = vmatpush1.msra.mxu0 0.0
        %600 = vmatprep.subr.mxu0 0.0
        %601 = vmatpush1.msra.mxu0 0.0
        %602 = vmatprep.subr.mxu0 0.0
        %603 = vmatpush1.msra.mxu0 0.0
        %604 = vmatprep.subr.mxu0 0.0
        %605 = vmatpush1.msra.mxu0 0.0
        %606 = vmatprep.subr.mxu0 0.0
        %607 = vmatpush1.msra.mxu0 0.0
        %608 = vmatprep.subr.mxu0 0.0
        %609 = vmatpush1.msra.mxu0 0.0
        %610 = vmatprep.subr.mxu0 0.0
        %611 = vmatpush1.msra.mxu0 0.0
        %612 = vmatprep.subr.mxu0 0.0
        %613 = vmatpush1.msra.mxu0 0.0
        %614 = vmatprep.subr.mxu0 0.0
        %615 = vmatpush1.msra.mxu0 0.0
        %616 = vmatprep.subr.mxu0 0.0
        %617 = vmatpush1.msra.mxu0 0.0
        %618 = vmatprep.subr.mxu0 0.0
        %619 = vmatpush1.msra.mxu0 %v578
        %620 = vmatprep.subr.mxu0 0.0
        %621 = vmatpush1.msra.mxu0 %v577
        %622 = vmatprep.subr.mxu0 0.0
        %623 = vmatpush2.msra.mxu0 0.0
        %624 = vmatprep.subr.mxu0 0.0
        %625 = vmatpush2.msra.mxu0 0.0
        %626 = vmatprep.subr.mxu0 0.0
        %627 = vmatpush2.msra.mxu0 0.0
        %628 = vmatprep.subr.mxu0 0.0
        %629 = vmatpush2.msra.mxu0 0.0
        %630 = vmatprep.subr.mxu0 0.0
        %631 = vmatpush2.msra.mxu0 0.0
        %632 = vmatprep.subr.mxu0 0.0
        %633 = vmatpush2.msra.mxu0 0.0
        %634 = vmatprep.subr.mxu0 0.0
        %635 = vmatpush2.msra.mxu0 0.0
        %636 = vmatprep.subr.mxu0 0.0
        %637 = vmatpush2.msra.mxu0 0.0
        %638 = vmatprep.subr.mxu0 0.0
        %639 = vmatpush2.msra.mxu0 0.0
        %640 = vmatprep.subr.mxu0 0.0
        %641 = vmatpush2.msra.mxu0 0.0
        %642 = vmatprep.subr.mxu0 0.0
        %643 = vmatpush2.msra.mxu0 0.0
        %644 = vmatprep.subr.mxu0 0.0
        %645 = vmatpush2.msra.mxu0 0.0
        %646 = vmatprep.subr.mxu0 0.0
        %647 = vmatpush2.msra.mxu0 0.0
        %648 = vmatprep.subr.mxu0 0.0
        %649 = vmatpush2.msra.mxu0 0.0
        %650 = vmatprep.subr.mxu0 0.0
        %651 = vmatpush2.msra.mxu0 0.0
        %652 = vmatprep.subr.mxu0 0.0
        %653 = vmatpush2.msra.mxu0 0.0
        %654 = vmatprep.mubr.f32.mxu0 0.0
        %655 = vmatmul.mubr.f32.gmra.mxu0 %v588
        %v656 = vpop.f32.mrf.mxu0
        %v657 = vadd.f32 %v584, %v656
        %v658 = vpop.f32.mrf.mxu0
        %659 = vdwg.mxu0
        %v660 = vmul.f32 %v657, 5.656854
        %v661 = vld [vmem:[#allocation5] sm:$0xff]
        %v662 = vadd.f32 %v660, %v661
        %v663 = vld [vmem:[%s4] sm:$0xff]
        %v664 = vld [vmem:[%s4 + $0x8] sm:$0xff]
        %v665 = vld [vmem:[%s4 + $0x10] sm:$0xff]
        %v666 = vld [vmem:[%s4 + $0x18] sm:$0xff]
        %v667 = vld [vmem:[%s5] sm:$0x1]
        %v668 = vld [vmem:[%s6] sm:$0xff]
        %v669 = vld [vmem:[%s6 + $0x8] sm:$0xff]
        %v670 = vld [vmem:[%s6 + $0x10] sm:$0xff]
        %v671 = vld [vmem:[%s6 + $0x18] sm:$0xff]
        %v672 = vld [vmem:[%s7] sm:$0x1]
        %v674 = vlaneseq
        %v675 = vshrl.u32 %v674, 7
        %v676 = vsub.s32 0, %v675
        %v677 = vrot.slane %v667, %v676
        %vm679 = vcmask 261120
        %v681 = vsel %vm679, %v662, 0
        %683 = vmatprep.subr.mxu0 0.0
        %684 = vmatpush1.msra.mxu0 0.0
        %685 = vmatprep.subr.mxu0 0.0
        %686 = vmatpush1.msra.mxu0 0.0
        %687 = vmatprep.subr.mxu0 0.0
        %688 = vmatpush1.msra.mxu0 0.0
        %689 = vmatprep.subr.mxu0 0.0
        %690 = vmatpush1.msra.mxu0 0.0
        %691 = vmatprep.subr.mxu0 0.0
        %692 = vmatpush1.msra.mxu0 0.0
        %693 = vmatprep.subr.mxu0 0.0
        %694 = vmatpush1.msra.mxu0 0.0
        %695 = vmatprep.subr.mxu0 0.0
        %696 = vmatpush1.msra.mxu0 0.0
        %697 = vmatprep.subr.mxu0 0.0
        %698 = vmatpush1.msra.mxu0 0.0
        %699 = vmatprep.subr.mxu0 0.0
        %700 = vmatpush1.msra.mxu0 0.0
        %701 = vmatprep.subr.mxu0 0.0
        %702 = vmatpush1.msra.mxu0 0.0
        %703 = vmatprep.subr.mxu0 0.0
        %704 = vmatpush1.msra.mxu0 0.0
        %705 = vmatprep.subr.mxu0 0.0
        %706 = vmatpush1.msra.mxu0 0.0
        %707 = vmatprep.subr.mxu0 0.0
        %708 = vmatpush1.msra.mxu0 %v666
        %709 = vmatprep.subr.mxu0 0.0
        %710 = vmatpush1.msra.mxu0 %v665
        %711 = vmatprep.subr.mxu0 0.0
        %712 = vmatpush1.msra.mxu0 %v664
        %713 = vmatprep.subr.mxu0 0.0
        %714 = vmatpush1.msra.mxu0 %v663
        %715 = vmatprep.subr.mxu0 0.0
        %716 = vmatpush2.msra.mxu0 0.0
        %717 = vmatprep.subr.mxu0 0.0
        %718 = vmatpush2.msra.mxu0 0.0
        %719 = vmatprep.subr.mxu0 0.0
        %720 = vmatpush2.msra.mxu0 0.0
        %721 = vmatprep.subr.mxu0 0.0
        %722 = vmatpush2.msra.mxu0 0.0
        %723 = vmatprep.subr.mxu0 0.0
        %724 = vmatpush2.msra.mxu0 0.0
        %725 = vmatprep.subr.mxu0 0.0
        %726 = vmatpush2.msra.mxu0 0.0
        %727 = vmatprep.subr.mxu0 0.0
        %728 = vmatpush2.msra.mxu0 0.0
        %729 = vmatprep.subr.mxu0 0.0
        %730 = vmatpush2.msra.mxu0 0.0
        %731 = vmatprep.subr.mxu0 0.0
        %732 = vmatpush2.msra.mxu0 0.0
        %733 = vmatprep.subr.mxu0 0.0
        %734 = vmatpush2.msra.mxu0 0.0
        %735 = vmatprep.subr.mxu0 0.0
        %736 = vmatpush2.msra.mxu0 0.0
        %737 = vmatprep.subr.mxu0 0.0
        %738 = vmatpush2.msra.mxu0 0.0
        %739 = vmatprep.subr.mxu0 0.0
        %740 = vmatpush2.msra.mxu0 0.0
        %741 = vmatprep.subr.mxu0 0.0
        %742 = vmatpush2.msra.mxu0 0.0
        %743 = vmatprep.subr.mxu0 0.0
        %744 = vmatpush2.msra.mxu0 0.0
        %745 = vmatprep.subr.mxu0 0.0
        %746 = vmatpush2.msra.mxu0 0.0
        %747 = vmatprep.mubr.f32.mxu0 0.0
        %748 = vmatmul.mubr.f32.gmra.mxu0 %v681
        %v749 = vpop.f32.mrf.mxu0
        %v750 = vadd.f32 %v677, %v749
        %v751 = vpop.f32.mrf.mxu0
        %752 = vdwg.mxu0
        %754 = vrot.lane.b32.xlu0 %v750, 96
        %v755 = vpop.permute.xlu0 %754
        %vm756 = vcmask 64512
        %v757 = vsel %vm756, %v750, 0
        %v759 = vsel %vm756, %v755, 0
        %761 = vmatprep.subr.mxu0 0.0
        %762 = vmatpush1.xpose.msra.mxu0 0.0
        %763 = vmatprep.subr.mxu0 0.0
        %764 = vmatpush1.xpose.msra.mxu0 0.0
        %765 = vmatprep.subr.mxu0 0.0
        %766 = vmatpush1.xpose.msra.mxu0 0.0
        %767 = vmatprep.subr.mxu0 0.0
        %768 = vmatpush1.xpose.msra.mxu0 0.0
        %769 = vmatprep.subr.mxu0 0.0
        %770 = vmatpush1.xpose.msra.mxu0 0.0
        %771 = vmatprep.subr.mxu0 0.0
        %772 = vmatpush1.xpose.msra.mxu0 0.0
        %773 = vmatprep.subr.mxu0 0.0
        %774 = vmatpush1.xpose.msra.mxu0 0.0
        %775 = vmatprep.subr.mxu0 0.0
        %776 = vmatpush1.xpose.msra.mxu0 0.0
        %777 = vmatprep.subr.mxu0 0.0
        %778 = vmatpush1.xpose.msra.mxu0 0.0
        %779 = vmatprep.subr.mxu0 0.0
        %780 = vmatpush1.xpose.msra.mxu0 0.0
        %781 = vmatprep.subr.mxu0 0.0
        %782 = vmatpush1.xpose.msra.mxu0 0.0
        %783 = vmatprep.subr.mxu0 0.0
        %784 = vmatpush1.xpose.msra.mxu0 0.0
        %785 = vmatprep.subr.mxu0 0.0
        %786 = vmatpush1.xpose.msra.mxu0 0.0
        %787 = vmatprep.subr.mxu0 0.0
        %788 = vmatpush1.xpose.msra.mxu0 0.0
        %789 = vmatprep.subr.mxu0 0.0
        %790 = vmatpush1.xpose.msra.mxu0 0.0
        %791 = vmatprep.subr.mxu0 0.0
        %792 = vmatpush1.xpose.msra.mxu0 %v759
        %793 = vmatprep.subr.mxu0 0.0
        %794 = vmatpush2.xpose.msra.mxu0 0.0
        %795 = vmatprep.subr.mxu0 0.0
        %796 = vmatpush2.xpose.msra.mxu0 0.0
        %797 = vmatprep.subr.mxu0 0.0
        %798 = vmatpush2.xpose.msra.mxu0 0.0
        %799 = vmatprep.subr.mxu0 0.0
        %800 = vmatpush2.xpose.msra.mxu0 0.0
        %801 = vmatprep.subr.mxu0 0.0
        %802 = vmatpush2.xpose.msra.mxu0 0.0
        %803 = vmatprep.subr.mxu0 0.0
        %804 = vmatpush2.xpose.msra.mxu0 0.0
        %805 = vmatprep.subr.mxu0 0.0
        %806 = vmatpush2.xpose.msra.mxu0 0.0
        %807 = vmatprep.subr.mxu0 0.0
        %808 = vmatpush2.xpose.msra.mxu0 0.0
        %809 = vmatprep.subr.mxu0 0.0
        %810 = vmatpush2.xpose.msra.mxu0 0.0
        %811 = vmatprep.subr.mxu0 0.0
        %812 = vmatpush2.xpose.msra.mxu0 0.0
        %813 = vmatprep.subr.mxu0 0.0
        %814 = vmatpush2.xpose.msra.mxu0 0.0
        %815 = vmatprep.subr.mxu0 0.0
        %816 = vmatpush2.xpose.msra.mxu0 0.0
        %817 = vmatprep.subr.mxu0 0.0
        %818 = vmatpush2.xpose.msra.mxu0 0.0
        %819 = vmatprep.subr.mxu0 0.0
        %820 = vmatpush2.xpose.msra.mxu0 0.0
        %821 = vmatprep.subr.mxu0 0.0
        %822 = vmatpush2.xpose.msra.mxu0 0.0
        %823 = vmatprep.subr.mxu0 0.0
        %824 = vmatpush2.xpose.msra.mxu0 0.0
        %825 = vmatprep.mubr.f32.mxu0 0.0
        %826 = vmatmul.mubr.f32.gmra.mxu0 %v757
        %v827 = vpop.f32.mrf.mxu0
        %v828 = vadd.f32 0.0, %v827
        %v829 = vpop.f32.mrf.mxu0
        %830 = vdwg.mxu0
        %v831 = vmul.f32 %v828, 0.35355338
        %v832 = vsel %vm756, %v831, -inf
        %833 = vmax.xlane.f32.xlu0 %v832
        %v834 = vpop.xlane.xlu0 %833
        %v835 = vsub.f32 %v831, %v834
        %v836 = vmul.f32 %v835, 1.442695
        %v837 = vpow.pop %v836
        %v838 = vsel %vm756, %v837, 0.0
        %839 = vadd.xlane.f32.xlu0 %v838
        %v840 = vpop.xlane.xlu0 %839
        %v841 = vrcp.pop %v840
        %v842 = vmul.f32 %v837, %v841
        %843 = vrot.lane.b32.xlu0 %v750, 64
        %v844 = vpop.permute.xlu0 %843
        %v847 = vsel %vm756, %v842, 0
        %849 = vmatprep.subr.mxu0 0.0
        %850 = vmatpush1.msra.mxu0 0.0
        %851 = vmatprep.subr.mxu0 0.0
        %852 = vmatpush1.msra.mxu0 0.0
        %853 = vmatprep.subr.mxu0 0.0
        %854 = vmatpush1.msra.mxu0 0.0
        %855 = vmatprep.subr.mxu0 0.0
        %856 = vmatpush1.msra.mxu0 0.0
        %857 = vmatprep.subr.mxu0 0.0
        %858 = vmatpush1.msra.mxu0 0.0
        %859 = vmatprep.subr.mxu0 0.0
        %860 = vmatpush1.msra.mxu0 0.0
        %861 = vmatprep.subr.mxu0 0.0
        %862 = vmatpush1.msra.mxu0 0.0
        %863 = vmatprep.subr.mxu0 0.0
        %864 = vmatpush1.msra.mxu0 0.0
        %865 = vmatprep.subr.mxu0 0.0
        %866 = vmatpush1.msra.mxu0 0.0
        %867 = vmatprep.subr.mxu0 0.0
        %868 = vmatpush1.msra.mxu0 0.0
        %869 = vmatprep.subr.mxu0 0.0
        %870 = vmatpush1.msra.mxu0 0.0
        %871 = vmatprep.subr.mxu0 0.0
        %872 = vmatpush1.msra.mxu0 0.0
        %873 = vmatprep.subr.mxu0 0.0
        %874 = vmatpush1.msra.mxu0 0.0
        %875 = vmatprep.subr.mxu0 0.0
        %876 = vmatpush1.msra.mxu0 0.0
        %877 = vmatprep.subr.mxu0 0.0
        %878 = vmatpush1.msra.mxu0 0.0
        %879 = vmatprep.subr.mxu0 0.0
        %880 = vmatpush1.msra.mxu0 %v844
        %881 = vmatprep.subr.mxu0 0.0
        %882 = vmatpush2.msra.mxu0 0.0
        %883 = vmatprep.subr.mxu0 0.0
        %884 = vmatpush2.msra.mxu0 0.0
        %885 = vmatprep.subr.mxu0 0.0
        %886 = vmatpush2.msra.mxu0 0.0
        %887 = vmatprep.subr.mxu0 0.0
        %888 = vmatpush2.msra.mxu0 0.0
        %889 = vmatprep.subr.mxu0 0.0
        %890 = vmatpush2.msra.mxu0 0.0
        %891 = vmatprep.subr.mxu0 0.0
        %892 = vmatpush2.msra.mxu0 0.0
        %893 = vmatprep.subr.mxu0 0.0
        %894 = vmatpush2.msra.mxu0 0.0
        %895 = vmatprep.subr.mxu0 0.0
        %896 = vmatpush2.msra.mxu0 0.0
        %897 = vmatprep.subr.mxu0 0.0
        %898 = vmatpush2.msra.mxu0 0.0
        %899 = vmatprep.subr.mxu0 0.0
        %900 = vmatpush2.msra.mxu0 0.0
        %901 = vmatprep.subr.mxu0 0.0
        %902 = vmatpush2.msra.mxu0 0.0
        %903 = vmatprep.subr.mxu0 0.0
        %904 = vmatpush2.msra.mxu0 0.0
        %905 = vmatprep.subr.mxu0 0.0
        %906 = vmatpush2.msra.mxu0 0.0
        %907 = vmatprep.subr.mxu0 0.0
        %908 = vmatpush2.msra.mxu0 0.0
        %909 = vmatprep.subr.mxu0 0.0
        %910 = vmatpush2.msra.mxu0 0.0
        %911 = vmatprep.subr.mxu0 0.0
        %912 = vmatpush2.msra.mxu0 0.0
        %913 = vmatprep.mubr.f32.mxu0 0.0
        %914 = vmatmul.mubr.f32.gmra.mxu0 %v847
        %v915 = vpop.f32.mrf.mxu0
        %v916 = vadd.f32 0.0, %v915
        %v917 = vpop.f32.mrf.mxu0
        %918 = vdwg.mxu0
        %919 = vrot.lane.b32.xlu0 %v750, 120
        %v920 = vpop.permute.xlu0 %919
        %921 = vrot.lane.b32.xlu0 %v750, 88
        %v922 = vpop.permute.xlu0 %921
        %v923 = vsel %vm756, %v920, 0
        %v925 = vsel %vm756, %v922, 0
        %927 = vmatprep.subr.mxu0 0.0
        %928 = vmatpush1.xpose.msra.mxu0 0.0
        %929 = vmatprep.subr.mxu0 0.0
        %930 = vmatpush1.xpose.msra.mxu0 0.0
        %931 = vmatprep.subr.mxu0 0.0
        %932 = vmatpush1.xpose.msra.mxu0 0.0
        %933 = vmatprep.subr.mxu0 0.0
        %934 = vmatpush1.xpose.msra.mxu0 0.0
        %935 = vmatprep.subr.mxu0 0.0
        %936 = vmatpush1.xpose.msra.mxu0 0.0
        %937 = vmatprep.subr.mxu0 0.0
        %938 = vmatpush1.xpose.msra.mxu0 0.0
        %939 = vmatprep.subr.mxu0 0.0
        %940 = vmatpush1.xpose.msra.mxu0 0.0
        %941 = vmatprep.subr.mxu0 0.0
        %942 = vmatpush1.xpose.msra.mxu0 0.0
        %943 = vmatprep.subr.mxu0 0.0
        %944 = vmatpush1.xpose.msra.mxu0 0.0
        %945 = vmatprep.subr.mxu0 0.0
        %946 = vmatpush1.xpose.msra.mxu0 0.0
        %947 = vmatprep.subr.mxu0 0.0
        %948 = vmatpush1.xpose.msra.mxu0 0.0
        %949 = vmatprep.subr.mxu0 0.0
        %950 = vmatpush1.xpose.msra.mxu0 0.0
        %951 = vmatprep.subr.mxu0 0.0
        %952 = vmatpush1.xpose.msra.mxu0 0.0
        %953 = vmatprep.subr.mxu0 0.0
        %954 = vmatpush1.xpose.msra.mxu0 0.0
        %955 = vmatprep.subr.mxu0 0.0
        %956 = vmatpush1.xpose.msra.mxu0 0.0
        %957 = vmatprep.subr.mxu0 0.0
        %958 = vmatpush1.xpose.msra.mxu0 %v925
        %959 = vmatprep.subr.mxu0 0.0
        %960 = vmatpush2.xpose.msra.mxu0 0.0
        %961 = vmatprep.subr.mxu0 0.0
        %962 = vmatpush2.xpose.msra.mxu0 0.0
        %963 = vmatprep.subr.mxu0 0.0
        %964 = vmatpush2.xpose.msra.mxu0 0.0
        %965 = vmatprep.subr.mxu0 0.0
        %966 = vmatpush2.xpose.msra.mxu0 0.0
        %967 = vmatprep.subr.mxu0 0.0
        %968 = vmatpush2.xpose.msra.mxu0 0.0
        %969 = vmatprep.subr.mxu0 0.0
        %970 = vmatpush2.xpose.msra.mxu0 0.0
        %971 = vmatprep.subr.mxu0 0.0
        %972 = vmatpush2.xpose.msra.mxu0 0.0
        %973 = vmatprep.subr.mxu0 0.0
        %974 = vmatpush2.xpose.msra.mxu0 0.0
        %975 = vmatprep.subr.mxu0 0.0
        %976 = vmatpush2.xpose.msra.mxu0 0.0
        %977 = vmatprep.subr.mxu0 0.0
        %978 = vmatpush2.xpose.msra.mxu0 0.0
        %979 = vmatprep.subr.mxu0 0.0
        %980 = vmatpush2.xpose.msra.mxu0 0.0
        %981 = vmatprep.subr.mxu0 0.0
        %982 = vmatpush2.xpose.msra.mxu0 0.0
        %983 = vmatprep.subr.mxu0 0.0
        %984 = vmatpush2.xpose.msra.mxu0 0.0
        %985 = vmatprep.subr.mxu0 0.0
        %986 = vmatpush2.xpose.msra.mxu0 0.0
        %987 = vmatprep.subr.mxu0 0.0
        %988 = vmatpush2.xpose.msra.mxu0 0.0
        %989 = vmatprep.subr.mxu0 0.0
        %990 = vmatpush2.xpose.msra.mxu0 0.0
        %991 = vmatprep.mubr.f32.mxu0 0.0
        %992 = vmatmul.mubr.f32.gmra.mxu0 %v923
        %v993 = vpop.f32.mrf.mxu0
        %v994 = vadd.f32 0.0, %v993
        %v995 = vpop.f32.mrf.mxu0
        %996 = vdwg.mxu0
        %v997 = vmul.f32 %v994, 0.35355338
        %v998 = vsel %vm756, %v997, -inf
        %999 = vmax.xlane.f32.xlu0 %v998
        %v1000 = vpop.xlane.xlu0 %999
        %v1001 = vsub.f32 %v997, %v1000
        %v1002 = vmul.f32 %v1001, 1.442695
        %v1003 = vpow.pop %v1002
        %v1004 = vsel %vm756, %v1003, 0.0
        %1005 = vadd.xlane.f32.xlu0 %v1004
        %v1006 = vpop.xlane.xlu0 %1005
        %v1007 = vrcp.pop %v1006
        %v1008 = vmul.f32 %v1003, %v1007
        %1009 = vrot.lane.b32.xlu0 %v750, 56
        %v1010 = vpop.permute.xlu0 %1009
        %v1013 = vsel %vm756, %v1008, 0
        %1015 = vmatprep.subr.mxu0 0.0
        %1016 = vmatpush1.msra.mxu0 0.0
        %1017 = vmatprep.subr.mxu0 0.0
        %1018 = vmatpush1.msra.mxu0 0.0
        %1019 = vmatprep.subr.mxu0 0.0
        %1020 = vmatpush1.msra.mxu0 0.0
        %1021 = vmatprep.subr.mxu0 0.0
        %1022 = vmatpush1.msra.mxu0 0.0
        %1023 = vmatprep.subr.mxu0 0.0
        %1024 = vmatpush1.msra.mxu0 0.0
        %1025 = vmatprep.subr.mxu0 0.0
        %1026 = vmatpush1.msra.mxu0 0.0
        %1027 = vmatprep.subr.mxu0 0.0
        %1028 = vmatpush1.msra.mxu0 0.0
        %1029 = vmatprep.subr.mxu0 0.0
        %1030 = vmatpush1.msra.mxu0 0.0
        %1031 = vmatprep.subr.mxu0 0.0
        %1032 = vmatpush1.msra.mxu0 0.0
        %1033 = vmatprep.subr.mxu0 0.0
        %1034 = vmatpush1.msra.mxu0 0.0
        %1035 = vmatprep.subr.mxu0 0.0
        %1036 = vmatpush1.msra.mxu0 0.0
        %1037 = vmatprep.subr.mxu0 0.0
        %1038 = vmatpush1.msra.mxu0 0.0
        %1039 = vmatprep.subr.mxu0 0.0
        %1040 = vmatpush1.msra.mxu0 0.0
        %1041 = vmatprep.subr.mxu0 0.0
        %1042 = vmatpush1.msra.mxu0 0.0
        %1043 = vmatprep.subr.mxu0 0.0
        %1044 = vmatpush1.msra.mxu0 0.0
        %1045 = vmatprep.subr.mxu0 0.0
        %1046 = vmatpush1.msra.mxu0 %v1010
        %1047 = vmatprep.subr.mxu0 0.0
        %1048 = vmatpush2.msra.mxu0 0.0
        %1049 = vmatprep.subr.mxu0 0.0
        %1050 = vmatpush2.msra.mxu0 0.0
        %1051 = vmatprep.subr.mxu0 0.0
        %1052 = vmatpush2.msra.mxu0 0.0
        %1053 = vmatprep.subr.mxu0 0.0
        %1054 = vmatpush2.msra.mxu0 0.0
        %1055 = vmatprep.subr.mxu0 0.0
        %1056 = vmatpush2.msra.mxu0 0.0
        %1057 = vmatprep.subr.mxu0 0.0
        %1058 = vmatpush2.msra.mxu0 0.0
        %1059 = vmatprep.subr.mxu0 0.0
        %1060 = vmatpush2.msra.mxu0 0.0
        %1061 = vmatprep.subr.mxu0 0.0
        %1062 = vmatpush2.msra.mxu0 0.0
        %1063 = vmatprep.subr.mxu0 0.0
        %1064 = vmatpush2.msra.mxu0 0.0
        %1065 = vmatprep.subr.mxu0 0.0
        %1066 = vmatpush2.msra.mxu0 0.0
        %1067 = vmatprep.subr.mxu0 0.0
        %1068 = vmatpush2.msra.mxu0 0.0
        %1069 = vmatprep.subr.mxu0 0.0
        %1070 = vmatpush2.msra.mxu0 0.0
        %1071 = vmatprep.subr.mxu0 0.0
        %1072 = vmatpush2.msra.mxu0 0.0
        %1073 = vmatprep.subr.mxu0 0.0
        %1074 = vmatpush2.msra.mxu0 0.0
        %1075 = vmatprep.subr.mxu0 0.0
        %1076 = vmatpush2.msra.mxu0 0.0
        %1077 = vmatprep.subr.mxu0 0.0
        %1078 = vmatpush2.msra.mxu0 0.0
        %1079 = vmatprep.mubr.f32.mxu0 0.0
        %1080 = vmatmul.mubr.f32.gmra.mxu0 %v1013
        %v1081 = vpop.f32.mrf.mxu0
        %v1082 = vadd.f32 0.0, %v1081
        %v1083 = vpop.f32.mrf.mxu0
        %1084 = vdwg.mxu0
        %v1086 = vsel %vm756, %v1082, 0
        %1088 = vmatprep.subr.mxu0 0.0
        %1089 = vmatpush1.msra.mxu0 0.0
        %1090 = vmatprep.subr.mxu0 0.0
        %1091 = vmatpush1.msra.mxu0 0.0
        %1092 = vmatprep.subr.mxu0 0.0
        %1093 = vmatpush1.msra.mxu0 0.0
        %1094 = vmatprep.subr.mxu0 0.0
        %1095 = vmatpush1.msra.mxu0 0.0
        %1096 = vmatprep.subr.mxu0 0.0
        %1097 = vmatpush1.msra.mxu0 0.0
        %1098 = vmatprep.subr.mxu0 0.0
        %1099 = vmatpush1.msra.mxu0 0.0
        %1100 = vmatprep.subr.mxu0 0.0
        %1101 = vmatpush1.msra.mxu0 0.0
        %1102 = vmatprep.subr.mxu0 0.0
        %1103 = vmatpush1.msra.mxu0 0.0
        %1104 = vmatprep.subr.mxu0 0.0
        %1105 = vmatpush1.msra.mxu0 0.0
        %1106 = vmatprep.subr.mxu0 0.0
        %1107 = vmatpush1.msra.mxu0 0.0
        %1108 = vmatprep.subr.mxu0 0.0
        %1109 = vmatpush1.msra.mxu0 0.0
        %1110 = vmatprep.subr.mxu0 0.0
        %1111 = vmatpush1.msra.mxu0 0.0
        %1112 = vmatprep.subr.mxu0 0.0
        %1113 = vmatpush1.msra.mxu0 0.0
        %1114 = vmatprep.subr.mxu0 0.0
        %1115 = vmatpush1.msra.mxu0 0.0
        %1116 = vmatprep.subr.mxu0 0.0
        %1117 = vmatpush1.msra.mxu0 0.0
        %1118 = vmatprep.subr.mxu0 0.0
        %1119 = vmatpush1.msra.mxu0 %v669
        %1120 = vmatprep.subr.mxu0 0.0
        %1121 = vmatpush2.msra.mxu0 0.0
        %1122 = vmatprep.subr.mxu0 0.0
        %1123 = vmatpush2.msra.mxu0 0.0
        %1124 = vmatprep.subr.mxu0 0.0
        %1125 = vmatpush2.msra.mxu0 0.0
        %1126 = vmatprep.subr.mxu0 0.0
        %1127 = vmatpush2.msra.mxu0 0.0
        %1128 = vmatprep.subr.mxu0 0.0
        %1129 = vmatpush2.msra.mxu0 0.0
        %1130 = vmatprep.subr.mxu0 0.0
        %1131 = vmatpush2.msra.mxu0 0.0
        %1132 = vmatprep.subr.mxu0 0.0
        %1133 = vmatpush2.msra.mxu0 0.0
        %1134 = vmatprep.subr.mxu0 0.0
        %1135 = vmatpush2.msra.mxu0 0.0
        %1136 = vmatprep.subr.mxu0 0.0
        %1137 = vmatpush2.msra.mxu0 0.0
        %1138 = vmatprep.subr.mxu0 0.0
        %1139 = vmatpush2.msra.mxu0 0.0
        %1140 = vmatprep.subr.mxu0 0.0
        %1141 = vmatpush2.msra.mxu0 0.0
        %1142 = vmatprep.subr.mxu0 0.0
        %1143 = vmatpush2.msra.mxu0 0.0
        %1144 = vmatprep.subr.mxu0 0.0
        %1145 = vmatpush2.msra.mxu0 0.0
        %1146 = vmatprep.subr.mxu0 0.0
        %1147 = vmatpush2.msra.mxu0 0.0
        %1148 = vmatprep.subr.mxu0 0.0
        %1149 = vmatpush2.msra.mxu0 0.0
        %1150 = vmatprep.subr.mxu0 0.0
        %1151 = vmatpush2.msra.mxu0 0.0
        %1152 = vmatprep.mubr.f32.mxu0 0.0
        %1153 = vmatmul.mubr.f32.gmra.mxu0 %v1086
        %v1154 = vpop.f32.mrf.mxu0
        %v1155 = vadd.f32 0.0, %v1154
        %v1156 = vpop.f32.mrf.mxu0
        %1157 = vdwg.mxu0
        %v1159 = vsel %vm756, %v916, 0
        %1161 = vmatprep.subr.mxu0 0.0
        %1162 = vmatpush1.msra.mxu0 0.0
        %1163 = vmatprep.subr.mxu0 0.0
        %1164 = vmatpush1.msra.mxu0 0.0
        %1165 = vmatprep.subr.mxu0 0.0
        %1166 = vmatpush1.msra.mxu0 0.0
        %1167 = vmatprep.subr.mxu0 0.0
        %1168 = vmatpush1.msra.mxu0 0.0
        %1169 = vmatprep.subr.mxu0 0.0
        %1170 = vmatpush1.msra.mxu0 0.0
        %1171 = vmatprep.subr.mxu0 0.0
        %1172 = vmatpush1.msra.mxu0 0.0
        %1173 = vmatprep.subr.mxu0 0.0
        %1174 = vmatpush1.msra.mxu0 0.0
        %1175 = vmatprep.subr.mxu0 0.0
        %1176 = vmatpush1.msra.mxu0 0.0
        %1177 = vmatprep.subr.mxu0 0.0
        %1178 = vmatpush1.msra.mxu0 0.0
        %1179 = vmatprep.subr.mxu0 0.0
        %1180 = vmatpush1.msra.mxu0 0.0
        %1181 = vmatprep.subr.mxu0 0.0
        %1182 = vmatpush1.msra.mxu0 0.0
        %1183 = vmatprep.subr.mxu0 0.0
        %1184 = vmatpush1.msra.mxu0 0.0
        %1185 = vmatprep.subr.mxu0 0.0
        %1186 = vmatpush1.msra.mxu0 0.0
        %1187 = vmatprep.subr.mxu0 0.0
        %1188 = vmatpush1.msra.mxu0 0.0
        %1189 = vmatprep.subr.mxu0 0.0
        %1190 = vmatpush1.msra.mxu0 0.0
        %1191 = vmatprep.subr.mxu0 0.0
        %1192 = vmatpush1.msra.mxu0 %v668
        %1193 = vmatprep.subr.mxu0 0.0
        %1194 = vmatpush2.msra.mxu0 0.0
        %1195 = vmatprep.subr.mxu0 0.0
        %1196 = vmatpush2.msra.mxu0 0.0
        %1197 = vmatprep.subr.mxu0 0.0
        %1198 = vmatpush2.msra.mxu0 0.0
        %1199 = vmatprep.subr.mxu0 0.0
        %1200 = vmatpush2.msra.mxu0 0.0
        %1201 = vmatprep.subr.mxu0 0.0
        %1202 = vmatpush2.msra.mxu0 0.0
        %1203 = vmatprep.subr.mxu0 0.0
        %1204 = vmatpush2.msra.mxu0 0.0
        %1205 = vmatprep.subr.mxu0 0.0
        %1206 = vmatpush2.msra.mxu0 0.0
        %1207 = vmatprep.subr.mxu0 0.0
        %1208 = vmatpush2.msra.mxu0 0.0
        %1209 = vmatprep.subr.mxu0 0.0
        %1210 = vmatpush2.msra.mxu0 0.0
        %1211 = vmatprep.subr.mxu0 0.0
        %1212 = vmatpush2.msra.mxu0 0.0
        %1213 = vmatprep.subr.mxu0 0.0
        %1214 = vmatpush2.msra.mxu0 0.0
        %1215 = vmatprep.subr.mxu0 0.0
        %1216 = vmatpush2.msra.mxu0 0.0
        %1217 = vmatprep.subr.mxu0 0.0
        %1218 = vmatpush2.msra.mxu0 0.0
        %1219 = vmatprep.subr.mxu0 0.0
        %1220 = vmatpush2.msra.mxu0 0.0
        %1221 = vmatprep.subr.mxu0 0.0
        %1222 = vmatpush2.msra.mxu0 0.0
        %1223 = vmatprep.subr.mxu0 0.0
        %1224 = vmatpush2.msra.mxu0 0.0
        %1225 = vmatprep.mubr.f32.mxu0 0.0
        %1226 = vmatmul.mubr.f32.gmra.mxu0 %v1159
        %v1227 = vpop.f32.mrf.mxu0
        %v1228 = vadd.f32 %v1155, %v1227
        %v1229 = vpop.f32.mrf.mxu0
        %1230 = vdwg.mxu0
        %1231 = vrot.lane.b32.xlu0 %v750, 112
        %v1232 = vpop.permute.xlu0 %1231
        %1233 = vrot.lane.b32.xlu0 %v750, 80
        %v1234 = vpop.permute.xlu0 %1233
        %v1235 = vsel %vm756, %v1232, 0
        %v1237 = vsel %vm756, %v1234, 0
        %1239 = vmatprep.subr.mxu0 0.0
        %1240 = vmatpush1.xpose.msra.mxu0 0.0
        %1241 = vmatprep.subr.mxu0 0.0
        %1242 = vmatpush1.xpose.msra.mxu0 0.0
        %1243 = vmatprep.subr.mxu0 0.0
        %1244 = vmatpush1.xpose.msra.mxu0 0.0
        %1245 = vmatprep.subr.mxu0 0.0
        %1246 = vmatpush1.xpose.msra.mxu0 0.0
        %1247 = vmatprep.subr.mxu0 0.0
        %1248 = vmatpush1.xpose.msra.mxu0 0.0
        %1249 = vmatprep.subr.mxu0 0.0
        %1250 = vmatpush1.xpose.msra.mxu0 0.0
        %1251 = vmatprep.subr.mxu0 0.0
        %1252 = vmatpush1.xpose.msra.mxu0 0.0
        %1253 = vmatprep.subr.mxu0 0.0
        %1254 = vmatpush1.xpose.msra.mxu0 0.0
        %1255 = vmatprep.subr.mxu0 0.0
        %1256 = vmatpush1.xpose.msra.mxu0 0.0
        %1257 = vmatprep.subr.mxu0 0.0
        %1258 = vmatpush1.xpose.msra.mxu0 0.0
        %1259 = vmatprep.subr.mxu0 0.0
        %1260 = vmatpush1.xpose.msra.mxu0 0.0
        %1261 = vmatprep.subr.mxu0 0.0
        %1262 = vmatpush1.xpose.msra.mxu0 0.0
        %1263 = vmatprep.subr.mxu0 0.0
        %1264 = vmatpush1.xpose.msra.mxu0 0.0
        %1265 = vmatprep.subr.mxu0 0.0
        %1266 = vmatpush1.xpose.msra.mxu0 0.0
        %1267 = vmatprep.subr.mxu0 0.0
        %1268 = vmatpush1.xpose.msra.mxu0 0.0
        %1269 = vmatprep.subr.mxu0 0.0
        %1270 = vmatpush1.xpose.msra.mxu0 %v1237
        %1271 = vmatprep.subr.mxu0 0.0
        %1272 = vmatpush2.xpose.msra.mxu0 0.0
        %1273 = vmatprep.subr.mxu0 0.0
        %1274 = vmatpush2.xpose.msra.mxu0 0.0
        %1275 = vmatprep.subr.mxu0 0.0
        %1276 = vmatpush2.xpose.msra.mxu0 0.0
        %1277 = vmatprep.subr.mxu0 0.0
        %1278 = vmatpush2.xpose.msra.mxu0 0.0
        %1279 = vmatprep.subr.mxu0 0.0
        %1280 = vmatpush2.xpose.msra.mxu0 0.0
        %1281 = vmatprep.subr.mxu0 0.0
        %1282 = vmatpush2.xpose.msra.mxu0 0.0
        %1283 = vmatprep.subr.mxu0 0.0
        %1284 = vmatpush2.xpose.msra.mxu0 0.0
        %1285 = vmatprep.subr.mxu0 0.0
        %1286 = vmatpush2.xpose.msra.mxu0 0.0
        %1287 = vmatprep.subr.mxu0 0.0
        %1288 = vmatpush2.xpose.msra.mxu0 0.0
        %1289 = vmatprep.subr.mxu0 0.0
        %1290 = vmatpush2.xpose.msra.mxu0 0.0
        %1291 = vmatprep.subr.mxu0 0.0
        %1292 = vmatpush2.xpose.msra.mxu0 0.0
        %1293 = vmatprep.subr.mxu0 0.0
        %1294 = vmatpush2.xpose.msra.mxu0 0.0
        %1295 = vmatprep.subr.mxu0 0.0
        %1296 = vmatpush2.xpose.msra.mxu0 0.0
        %1297 = vmatprep.subr.mxu0 0.0
        %1298 = vmatpush2.xpose.msra.mxu0 0.0
        %1299 = vmatprep.subr.mxu0 0.0
        %1300 = vmatpush2.xpose.msra.mxu0 0.0
        %1301 = vmatprep.subr.mxu0 0.0
        %1302 = vmatpush2.xpose.msra.mxu0 0.0
        %1303 = vmatprep.mubr.f32.mxu0 0.0
        %1304 = vmatmul.mubr.f32.gmra.mxu0 %v1235
        %v1305 = vpop.f32.mrf.mxu0
        %v1306 = vadd.f32 0.0, %v1305
        %v1307 = vpop.f32.mrf.mxu0
        %1308 = vdwg.mxu0
        %v1309 = vmul.f32 %v1306, 0.35355338
        %v1310 = vsel %vm756, %v1309, -inf
        %1311 = vmax.xlane.f32.xlu0 %v1310
        %v1312 = vpop.xlane.xlu0 %1311
        %v1313 = vsub.f32 %v1309, %v1312
        %v1314 = vmul.f32 %v1313, 1.442695
        %v1315 = vpow.pop %v1314
        %v1316 = vsel %vm756, %v1315, 0.0
        %1317 = vadd.xlane.f32.xlu0 %v1316
        %v1318 = vpop.xlane.xlu0 %1317
        %v1319 = vrcp.pop %v1318
        %v1320 = vmul.f32 %v1315, %v1319
        %1321 = vrot.lane.b32.xlu0 %v750, 48
        %v1322 = vpop.permute.xlu0 %1321
        %v1325 = vsel %vm756, %v1320, 0
        %1327 = vmatprep.subr.mxu0 0.0
        %1328 = vmatpush1.msra.mxu0 0.0
        %1329 = vmatprep.subr.mxu0 0.0
        %1330 = vmatpush1.msra.mxu0 0.0
        %1331 = vmatprep.subr.mxu0 0.0
        %1332 = vmatpush1.msra.mxu0 0.0
        %1333 = vmatprep.subr.mxu0 0.0
        %1334 = vmatpush1.msra.mxu0 0.0
        %1335 = vmatprep.subr.mxu0 0.0
        %1336 = vmatpush1.msra.mxu0 0.0
        %1337 = vmatprep.subr.mxu0 0.0
        %1338 = vmatpush1.msra.mxu0 0.0
        %1339 = vmatprep.subr.mxu0 0.0
        %1340 = vmatpush1.msra.mxu0 0.0
        %1341 = vmatprep.subr.mxu0 0.0
        %1342 = vmatpush1.msra.mxu0 0.0
        %1343 = vmatprep.subr.mxu0 0.0
        %1344 = vmatpush1.msra.mxu0 0.0
        %1345 = vmatprep.subr.mxu0 0.0
        %1346 = vmatpush1.msra.mxu0 0.0
        %1347 = vmatprep.subr.mxu0 0.0
        %1348 = vmatpush1.msra.mxu0 0.0
        %1349 = vmatprep.subr.mxu0 0.0
        %1350 = vmatpush1.msra.mxu0 0.0
        %1351 = vmatprep.subr.mxu0 0.0
        %1352 = vmatpush1.msra.mxu0 0.0
        %1353 = vmatprep.subr.mxu0 0.0
        %1354 = vmatpush1.msra.mxu0 0.0
        %1355 = vmatprep.subr.mxu0 0.0
        %1356 = vmatpush1.msra.mxu0 0.0
        %1357 = vmatprep.subr.mxu0 0.0
        %1358 = vmatpush1.msra.mxu0 %v1322
        %1359 = vmatprep.subr.mxu0 0.0
        %1360 = vmatpush2.msra.mxu0 0.0
        %1361 = vmatprep.subr.mxu0 0.0
        %1362 = vmatpush2.msra.mxu0 0.0
        %1363 = vmatprep.subr.mxu0 0.0
        %1364 = vmatpush2.msra.mxu0 0.0
        %1365 = vmatprep.subr.mxu0 0.0
        %1366 = vmatpush2.msra.mxu0 0.0
        %1367 = vmatprep.subr.mxu0 0.0
        %1368 = vmatpush2.msra.mxu0 0.0
        %1369 = vmatprep.subr.mxu0 0.0
        %1370 = vmatpush2.msra.mxu0 0.0
        %1371 = vmatprep.subr.mxu0 0.0
        %1372 = vmatpush2.msra.mxu0 0.0
        %1373 = vmatprep.subr.mxu0 0.0
        %1374 = vmatpush2.msra.mxu0 0.0
        %1375 = vmatprep.subr.mxu0 0.0
        %1376 = vmatpush2.msra.mxu0 0.0
        %1377 = vmatprep.subr.mxu0 0.0
        %1378 = vmatpush2.msra.mxu0 0.0
        %1379 = vmatprep.subr.mxu0 0.0
        %1380 = vmatpush2.msra.mxu0 0.0
        %1381 = vmatprep.subr.mxu0 0.0
        %1382 = vmatpush2.msra.mxu0 0.0
        %1383 = vmatprep.subr.mxu0 0.0
        %1384 = vmatpush2.msra.mxu0 0.0
        %1385 = vmatprep.subr.mxu0 0.0
        %1386 = vmatpush2.msra.mxu0 0.0
        %1387 = vmatprep.subr.mxu0 0.0
        %1388 = vmatpush2.msra.mxu0 0.0
        %1389 = vmatprep.subr.mxu0 0.0
        %1390 = vmatpush2.msra.mxu0 0.0
        %1391 = vmatprep.mubr.f32.mxu0 0.0
        %1392 = vmatmul.mubr.f32.gmra.mxu0 %v1325
        %v1393 = vpop.f32.mrf.mxu0
        %v1394 = vadd.f32 0.0, %v1393
        %v1395 = vpop.f32.mrf.mxu0
        %1396 = vdwg.mxu0
        %v1398 = vsel %vm756, %v1394, 0
        %1400 = vmatprep.subr.mxu0 0.0
        %1401 = vmatpush1.msra.mxu0 0.0
        %1402 = vmatprep.subr.mxu0 0.0
        %1403 = vmatpush1.msra.mxu0 0.0
        %1404 = vmatprep.subr.mxu0 0.0
        %1405 = vmatpush1.msra.mxu0 0.0
        %1406 = vmatprep.subr.mxu0 0.0
        %1407 = vmatpush1.msra.mxu0 0.0
        %1408 = vmatprep.subr.mxu0 0.0
        %1409 = vmatpush1.msra.mxu0 0.0
        %1410 = vmatprep.subr.mxu0 0.0
        %1411 = vmatpush1.msra.mxu0 0.0
        %1412 = vmatprep.subr.mxu0 0.0
        %1413 = vmatpush1.msra.mxu0 0.0
        %1414 = vmatprep.subr.mxu0 0.0
        %1415 = vmatpush1.msra.mxu0 0.0
        %1416 = vmatprep.subr.mxu0 0.0
        %1417 = vmatpush1.msra.mxu0 0.0
        %1418 = vmatprep.subr.mxu0 0.0
        %1419 = vmatpush1.msra.mxu0 0.0
        %1420 = vmatprep.subr.mxu0 0.0
        %1421 = vmatpush1.msra.mxu0 0.0
        %1422 = vmatprep.subr.mxu0 0.0
        %1423 = vmatpush1.msra.mxu0 0.0
        %1424 = vmatprep.subr.mxu0 0.0
        %1425 = vmatpush1.msra.mxu0 0.0
        %1426 = vmatprep.subr.mxu0 0.0
        %1427 = vmatpush1.msra.mxu0 0.0
        %1428 = vmatprep.subr.mxu0 0.0
        %1429 = vmatpush1.msra.mxu0 0.0
        %1430 = vmatprep.subr.mxu0 0.0
        %1431 = vmatpush1.msra.mxu0 %v670
        %1432 = vmatprep.subr.mxu0 0.0
        %1433 = vmatpush2.msra.mxu0 0.0
        %1434 = vmatprep.subr.mxu0 0.0
        %1435 = vmatpush2.msra.mxu0 0.0
        %1436 = vmatprep.subr.mxu0 0.0
        %1437 = vmatpush2.msra.mxu0 0.0
        %1438 = vmatprep.subr.mxu0 0.0
        %1439 = vmatpush2.msra.mxu0 0.0
        %1440 = vmatprep.subr.mxu0 0.0
        %1441 = vmatpush2.msra.mxu0 0.0
        %1442 = vmatprep.subr.mxu0 0.0
        %1443 = vmatpush2.msra.mxu0 0.0
        %1444 = vmatprep.subr.mxu0 0.0
        %1445 = vmatpush2.msra.mxu0 0.0
        %1446 = vmatprep.subr.mxu0 0.0
        %1447 = vmatpush2.msra.mxu0 0.0
        %1448 = vmatprep.subr.mxu0 0.0
        %1449 = vmatpush2.msra.mxu0 0.0
        %1450 = vmatprep.subr.mxu0 0.0
        %1451 = vmatpush2.msra.mxu0 0.0
        %1452 = vmatprep.subr.mxu0 0.0
        %1453 = vmatpush2.msra.mxu0 0.0
        %1454 = vmatprep.subr.mxu0 0.0
        %1455 = vmatpush2.msra.mxu0 0.0
        %1456 = vmatprep.subr.mxu0 0.0
        %1457 = vmatpush2.msra.mxu0 0.0
        %1458 = vmatprep.subr.mxu0 0.0
        %1459 = vmatpush2.msra.mxu0 0.0
        %1460 = vmatprep.subr.mxu0 0.0
        %1461 = vmatpush2.msra.mxu0 0.0
        %1462 = vmatprep.subr.mxu0 0.0
        %1463 = vmatpush2.msra.mxu0 0.0
        %1464 = vmatprep.mubr.f32.mxu0 0.0
        %1465 = vmatmul.mubr.f32.gmra.mxu0 %v1398
        %v1466 = vpop.f32.mrf.mxu0
        %v1467 = vadd.f32 0.0, %v1466
        %v1468 = vpop.f32.mrf.mxu0
        %1469 = vdwg.mxu0
        %v1470 = vadd.f32 %v1228, %v1467
        %1471 = vrot.lane.b32.xlu0 %v750, 104
        %v1472 = vpop.permute.xlu0 %1471
        %1473 = vrot.lane.b32.xlu0 %v750, 72
        %v1474 = vpop.permute.xlu0 %1473
        %v1475 = vsel %vm756, %v1472, 0
        %v1477 = vsel %vm756, %v1474, 0
        %1479 = vmatprep.subr.mxu0 0.0
        %1480 = vmatpush1.xpose.msra.mxu0 0.0
        %1481 = vmatprep.subr.mxu0 0.0
        %1482 = vmatpush1.xpose.msra.mxu0 0.0
        %1483 = vmatprep.subr.mxu0 0.0
        %1484 = vmatpush1.xpose.msra.mxu0 0.0
        %1485 = vmatprep.subr.mxu0 0.0
        %1486 = vmatpush1.xpose.msra.mxu0 0.0
        %1487 = vmatprep.subr.mxu0 0.0
        %1488 = vmatpush1.xpose.msra.mxu0 0.0
        %1489 = vmatprep.subr.mxu0 0.0
        %1490 = vmatpush1.xpose.msra.mxu0 0.0
        %1491 = vmatprep.subr.mxu0 0.0
        %1492 = vmatpush1.xpose.msra.mxu0 0.0
        %1493 = vmatprep.subr.mxu0 0.0
        %1494 = vmatpush1.xpose.msra.mxu0 0.0
        %1495 = vmatprep.subr.mxu0 0.0
        %1496 = vmatpush1.xpose.msra.mxu0 0.0
        %1497 = vmatprep.subr.mxu0 0.0
        %1498 = vmatpush1.xpose.msra.mxu0 0.0
        %1499 = vmatprep.subr.mxu0 0.0
        %1500 = vmatpush1.xpose.msra.mxu0 0.0
        %1501 = vmatprep.subr.mxu0 0.0
        %1502 = vmatpush1.xpose.msra.mxu0 0.0
        %1503 = vmatprep.subr.mxu0 0.0
        %1504 = vmatpush1.xpose.msra.mxu0 0.0
        %1505 = vmatprep.subr.mxu0 0.0
        %1506 = vmatpush1.xpose.msra.mxu0 0.0
        %1507 = vmatprep.subr.mxu0 0.0
        %1508 = vmatpush1.xpose.msra.mxu0 0.0
        %1509 = vmatprep.subr.mxu0 0.0
        %1510 = vmatpush1.xpose.msra.mxu0 %v1477
        %1511 = vmatprep.subr.mxu0 0.0
        %1512 = vmatpush2.xpose.msra.mxu0 0.0
        %1513 = vmatprep.subr.mxu0 0.0
        %1514 = vmatpush2.xpose.msra.mxu0 0.0
        %1515 = vmatprep.subr.mxu0 0.0
        %1516 = vmatpush2.xpose.msra.mxu0 0.0
        %1517 = vmatprep.subr.mxu0 0.0
        %1518 = vmatpush2.xpose.msra.mxu0 0.0
        %1519 = vmatprep.subr.mxu0 0.0
        %1520 = vmatpush2.xpose.msra.mxu0 0.0
        %1521 = vmatprep.subr.mxu0 0.0
        %1522 = vmatpush2.xpose.msra.mxu0 0.0
        %1523 = vmatprep.subr.mxu0 0.0
        %1524 = vmatpush2.xpose.msra.mxu0 0.0
        %1525 = vmatprep.subr.mxu0 0.0
        %1526 = vmatpush2.xpose.msra.mxu0 0.0
        %1527 = vmatprep.subr.mxu0 0.0
        %1528 = vmatpush2.xpose.msra.mxu0 0.0
        %1529 = vmatprep.subr.mxu0 0.0
        %1530 = vmatpush2.xpose.msra.mxu0 0.0
        %1531 = vmatprep.subr.mxu0 0.0
        %1532 = vmatpush2.xpose.msra.mxu0 0.0
        %1533 = vmatprep.subr.mxu0 0.0
        %1534 = vmatpush2.xpose.msra.mxu0 0.0
        %1535 = vmatprep.subr.mxu0 0.0
        %1536 = vmatpush2.xpose.msra.mxu0 0.0
        %1537 = vmatprep.subr.mxu0 0.0
        %1538 = vmatpush2.xpose.msra.mxu0 0.0
        %1539 = vmatprep.subr.mxu0 0.0
        %1540 = vmatpush2.xpose.msra.mxu0 0.0
        %1541 = vmatprep.subr.mxu0 0.0
        %1542 = vmatpush2.xpose.msra.mxu0 0.0
        %1543 = vmatprep.mubr.f32.mxu0 0.0
        %1544 = vmatmul.mubr.f32.gmra.mxu0 %v1475
        %v1545 = vpop.f32.mrf.mxu0
        %v1546 = vadd.f32 0.0, %v1545
        %v1547 = vpop.f32.mrf.mxu0
        %1548 = vdwg.mxu0
        %v1549 = vmul.f32 %v1546, 0.35355338
        %v1550 = vsel %vm756, %v1549, -inf
        %1551 = vmax.xlane.f32.xlu0 %v1550
        %v1552 = vpop.xlane.xlu0 %1551
        %v1553 = vsub.f32 %v1549, %v1552
        %v1554 = vmul.f32 %v1553, 1.442695
        %v1555 = vpow.pop %v1554
        %v1556 = vsel %vm756, %v1555, 0.0
        %1557 = vadd.xlane.f32.xlu0 %v1556
        %v1558 = vpop.xlane.xlu0 %1557
        %v1559 = vrcp.pop %v1558
        %v1560 = vmul.f32 %v1555, %v1559
        %1561 = vrot.lane.b32.xlu0 %v750, 40
        %v1562 = vpop.permute.xlu0 %1561
        %v1565 = vsel %vm756, %v1560, 0
        %1567 = vmatprep.subr.mxu0 0.0
        %1568 = vmatpush1.msra.mxu0 0.0
        %1569 = vmatprep.subr.mxu0 0.0
        %1570 = vmatpush1.msra.mxu0 0.0
        %1571 = vmatprep.subr.mxu0 0.0
        %1572 = vmatpush1.msra.mxu0 0.0
        %1573 = vmatprep.subr.mxu0 0.0
        %1574 = vmatpush1.msra.mxu0 0.0
        %1575 = vmatprep.subr.mxu0 0.0
        %1576 = vmatpush1.msra.mxu0 0.0
        %1577 = vmatprep.subr.mxu0 0.0
        %1578 = vmatpush1.msra.mxu0 0.0
        %1579 = vmatprep.subr.mxu0 0.0
        %1580 = vmatpush1.msra.mxu0 0.0
        %1581 = vmatprep.subr.mxu0 0.0
        %1582 = vmatpush1.msra.mxu0 0.0
        %1583 = vmatprep.subr.mxu0 0.0
        %1584 = vmatpush1.msra.mxu0 0.0
        %1585 = vmatprep.subr.mxu0 0.0
        %1586 = vmatpush1.msra.mxu0 0.0
        %1587 = vmatprep.subr.mxu0 0.0
        %1588 = vmatpush1.msra.mxu0 0.0
        %1589 = vmatprep.subr.mxu0 0.0
        %1590 = vmatpush1.msra.mxu0 0.0
        %1591 = vmatprep.subr.mxu0 0.0
        %1592 = vmatpush1.msra.mxu0 0.0
        %1593 = vmatprep.subr.mxu0 0.0
        %1594 = vmatpush1.msra.mxu0 0.0
        %1595 = vmatprep.subr.mxu0 0.0
        %1596 = vmatpush1.msra.mxu0 0.0
        %1597 = vmatprep.subr.mxu0 0.0
        %1598 = vmatpush1.msra.mxu0 %v1562
        %1599 = vmatprep.subr.mxu0 0.0
        %1600 = vmatpush2.msra.mxu0 0.0
        %1601 = vmatprep.subr.mxu0 0.0
        %1602 = vmatpush2.msra.mxu0 0.0
        %1603 = vmatprep.subr.mxu0 0.0
        %1604 = vmatpush2.msra.mxu0 0.0
        %1605 = vmatprep.subr.mxu0 0.0
        %1606 = vmatpush2.msra.mxu0 0.0
        %1607 = vmatprep.subr.mxu0 0.0
        %1608 = vmatpush2.msra.mxu0 0.0
        %1609 = vmatprep.subr.mxu0 0.0
        %1610 = vmatpush2.msra.mxu0 0.0
        %1611 = vmatprep.subr.mxu0 0.0
        %1612 = vmatpush2.msra.mxu0 0.0
        %1613 = vmatprep.subr.mxu0 0.0
        %1614 = vmatpush2.msra.mxu0 0.0
        %1615 = vmatprep.subr.mxu0 0.0
        %1616 = vmatpush2.msra.mxu0 0.0
        %1617 = vmatprep.subr.mxu0 0.0
        %1618 = vmatpush2.msra.mxu0 0.0
        %1619 = vmatprep.subr.mxu0 0.0
        %1620 = vmatpush2.msra.mxu0 0.0
        %1621 = vmatprep.subr.mxu0 0.0
        %1622 = vmatpush2.msra.mxu0 0.0
        %1623 = vmatprep.subr.mxu0 0.0
        %1624 = vmatpush2.msra.mxu0 0.0
        %1625 = vmatprep.subr.mxu0 0.0
        %1626 = vmatpush2.msra.mxu0 0.0
        %1627 = vmatprep.subr.mxu0 0.0
        %1628 = vmatpush2.msra.mxu0 0.0
        %1629 = vmatprep.subr.mxu0 0.0
        %1630 = vmatpush2.msra.mxu0 0.0
        %1631 = vmatprep.mubr.f32.mxu0 0.0
        %1632 = vmatmul.mubr.f32.gmra.mxu0 %v1565
        %v1633 = vpop.f32.mrf.mxu0
        %v1634 = vadd.f32 0.0, %v1633
        %v1635 = vpop.f32.mrf.mxu0
        %1636 = vdwg.mxu0
        %v1638 = vsel %vm756, %v1634, 0
        %1640 = vmatprep.subr.mxu0 0.0
        %1641 = vmatpush1.msra.mxu0 0.0
        %1642 = vmatprep.subr.mxu0 0.0
        %1643 = vmatpush1.msra.mxu0 0.0
        %1644 = vmatprep.subr.mxu0 0.0
        %1645 = vmatpush1.msra.mxu0 0.0
        %1646 = vmatprep.subr.mxu0 0.0
        %1647 = vmatpush1.msra.mxu0 0.0
        %1648 = vmatprep.subr.mxu0 0.0
        %1649 = vmatpush1.msra.mxu0 0.0
        %1650 = vmatprep.subr.mxu0 0.0
        %1651 = vmatpush1.msra.mxu0 0.0
        %1652 = vmatprep.subr.mxu0 0.0
        %1653 = vmatpush1.msra.mxu0 0.0
        %1654 = vmatprep.subr.mxu0 0.0
        %1655 = vmatpush1.msra.mxu0 0.0
        %1656 = vmatprep.subr.mxu0 0.0
        %1657 = vmatpush1.msra.mxu0 0.0
        %1658 = vmatprep.subr.mxu0 0.0
        %1659 = vmatpush1.msra.mxu0 0.0
        %1660 = vmatprep.subr.mxu0 0.0
        %1661 = vmatpush1.msra.mxu0 0.0
        %1662 = vmatprep.subr.mxu0 0.0
        %1663 = vmatpush1.msra.mxu0 0.0
        %1664 = vmatprep.subr.mxu0 0.0
        %1665 = vmatpush1.msra.mxu0 0.0
        %1666 = vmatprep.subr.mxu0 0.0
        %1667 = vmatpush1.msra.mxu0 0.0
        %1668 = vmatprep.subr.mxu0 0.0
        %1669 = vmatpush1.msra.mxu0 0.0
        %1670 = vmatprep.subr.mxu0 0.0
        %1671 = vmatpush1.msra.mxu0 %v671
        %1672 = vmatprep.subr.mxu0 0.0
        %1673 = vmatpush2.msra.mxu0 0.0
        %1674 = vmatprep.subr.mxu0 0.0
        %1675 = vmatpush2.msra.mxu0 0.0
        %1676 = vmatprep.subr.mxu0 0.0
        %1677 = vmatpush2.msra.mxu0 0.0
        %1678 = vmatprep.subr.mxu0 0.0
        %1679 = vmatpush2.msra.mxu0 0.0
        %1680 = vmatprep.subr.mxu0 0.0
        %1681 = vmatpush2.msra.mxu0 0.0
        %1682 = vmatprep.subr.mxu0 0.0
        %1683 = vmatpush2.msra.mxu0 0.0
        %1684 = vmatprep.subr.mxu0 0.0
        %1685 = vmatpush2.msra.mxu0 0.0
        %1686 = vmatprep.subr.mxu0 0.0
        %1687 = vmatpush2.msra.mxu0 0.0
        %1688 = vmatprep.subr.mxu0 0.0
        %1689 = vmatpush2.msra.mxu0 0.0
        %1690 = vmatprep.subr.mxu0 0.0
        %1691 = vmatpush2.msra.mxu0 0.0
        %1692 = vmatprep.subr.mxu0 0.0
        %1693 = vmatpush2.msra.mxu0 0.0
        %1694 = vmatprep.subr.mxu0 0.0
        %1695 = vmatpush2.msra.mxu0 0.0
        %1696 = vmatprep.subr.mxu0 0.0
        %1697 = vmatpush2.msra.mxu0 0.0
        %1698 = vmatprep.subr.mxu0 0.0
        %1699 = vmatpush2.msra.mxu0 0.0
        %1700 = vmatprep.subr.mxu0 0.0
        %1701 = vmatpush2.msra.mxu0 0.0
        %1702 = vmatprep.subr.mxu0 0.0
        %1703 = vmatpush2.msra.mxu0 0.0
        %1704 = vmatprep.mubr.f32.mxu0 0.0
        %1705 = vmatmul.mubr.f32.gmra.mxu0 %v1638
        %v1706 = vpop.f32.mrf.mxu0
        %v1707 = vadd.f32 0.0, %v1706
        %v1708 = vpop.f32.mrf.mxu0
        %1709 = vdwg.mxu0
        %v1710 = vadd.f32 %v1470, %v1707
        %v1712 = vlaneseq
        %v1713 = vshrl.u32 %v1712, 7
        %v1714 = vsub.s32 0, %v1713
        %v1715 = vrot.slane %v672, %v1714
        %v1717 = vadd.f32 %v1710, %v1715
        %v1718 = vld [vmem:[%s12] sm:$0x1]
        %v1719 = vld [vmem:[%s13] sm:$0x1]
        %v1720 = vadd.f32 %v662, %v1717
        %v1721 = vsel %vm679, %v1720, 0.0
        %1722 = vadd.xlane.f32.xlu0 %v1721
        %v1723 = vpop.xlane.xlu0 %1722
        %v1724 = vrcp.pop 32.0
        %v1725 = vmul.f32 %v1723, %v1724
        %v1726 = vsub.f32 %v1720, %v1725
        %v1727 = vmul.f32 %v1726, %v1726
        %v1728 = vsel %vm679, %v1727, 0.0
        %1729 = vadd.xlane.f32.xlu0 %v1728
        %v1730 = vpop.xlane.xlu0 %1729
        %v1731 = vmul.f32 %v1730, %v1724
        %v1732 = vadd.f32 %v1731, 1e-05
        %v1733 = vrsqrt.pop %v1732
        %v1734 = vmul.f32 %v1726, %v1733
        %v1736 = vlaneseq
        %v1737 = vshrl.u32 %v1736, 7
        %v1738 = vsub.s32 0, %v1737
        %v1739 = vrot.slane %v1718, %v1738
        %v1741 = vmul.f32 %v1734, %v1739
        %v1743 = vlaneseq
        %v1744 = vshrl.u32 %v1743, 7
        %v1745 = vsub.s32 0, %v1744
        %v1746 = vrot.slane %v1719, %v1745
        %v1748 = vadd.f32 %v1741, %v1746
        %v1749 = vld [vmem:[%s8] sm:$0xff]
        %v1750 = vld [vmem:[%s8 + $0x8] sm:$0xff]
        %v1751 = vld [vmem:[%s8 + $0x10] sm:$0xff]
        %v1752 = vld [vmem:[%s8 + $0x18] sm:$0xff]
        %v1753 = vld [vmem:[%s9] sm:$0x1]
        %v1755 = vlaneseq
        %v1756 = vshrl.u32 %v1755, 7
        %v1757 = vsub.s32 0, %v1756
        %v1758 = vrot.slane %v1753, %v1757
        %v1761 = vsel %vm679, %v1748, 0
        %1763 = vmatprep.subr.mxu0 0.0
        %1764 = vmatpush1.msra.mxu0 0.0
        %1765 = vmatprep.subr.mxu0 0.0
        %1766 = vmatpush1.msra.mxu0 0.0
        %1767 = vmatprep.subr.mxu0 0.0
        %1768 = vmatpush1.msra.mxu0 0.0
        %1769 = vmatprep.subr.mxu0 0.0
        %1770 = vmatpush1.msra.mxu0 0.0
        %1771 = vmatprep.subr.mxu0 0.0
        %1772 = vmatpush1.msra.mxu0 0.0
        %1773 = vmatprep.subr.mxu0 0.0
        %1774 = vmatpush1.msra.mxu0 0.0
        %1775 = vmatprep.subr.mxu0 0.0
        %1776 = vmatpush1.msra.mxu0 0.0
        %1777 = vmatprep.subr.mxu0 0.0
        %1778 = vmatpush1.msra.mxu0 0.0
        %1779 = vmatprep.subr.mxu0 0.0
        %1780 = vmatpush1.msra.mxu0 0.0
        %1781 = vmatprep.subr.mxu0 0.0
        %1782 = vmatpush1.msra.mxu0 0.0
        %1783 = vmatprep.subr.mxu0 0.0
        %1784 = vmatpush1.msra.mxu0 0.0
        %1785 = vmatprep.subr.mxu0 0.0
        %1786 = vmatpush1.msra.mxu0 0.0
        %1787 = vmatprep.subr.mxu0 0.0
        %1788 = vmatpush1.msra.mxu0 %v1752
        %1789 = vmatprep.subr.mxu0 0.0
        %1790 = vmatpush1.msra.mxu0 %v1751
        %1791 = vmatprep.subr.mxu0 0.0
        %1792 = vmatpush1.msra.mxu0 %v1750
        %1793 = vmatprep.subr.mxu0 0.0
        %1794 = vmatpush1.msra.mxu0 %v1749
        %1795 = vmatprep.subr.mxu0 0.0
        %1796 = vmatpush2.msra.mxu0 0.0
        %1797 = vmatprep.subr.mxu0 0.0
        %1798 = vmatpush2.msra.mxu0 0.0
        %1799 = vmatprep.subr.mxu0 0.0
        %1800 = vmatpush2.msra.mxu0 0.0
        %1801 = vmatprep.subr.mxu0 0.0
        %1802 = vmatpush2.msra.mxu0 0.0
        %1803 = vmatprep.subr.mxu0 0.0
        %1804 = vmatpush2.msra.mxu0 0.0
        %1805 = vmatprep.subr.mxu0 0.0
        %1806 = vmatpush2.msra.mxu0 0.0
        %1807 = vmatprep.subr.mxu0 0.0
        %1808 = vmatpush2.msra.mxu0 0.0
        %1809 = vmatprep.subr.mxu0 0.0
        %1810 = vmatpush2.msra.mxu0 0.0
        %1811 = vmatprep.subr.mxu0 0.0
        %1812 = vmatpush2.msra.mxu0 0.0
        %1813 = vmatprep.subr.mxu0 0.0
        %1814 = vmatpush2.msra.mxu0 0.0
        %1815 = vmatprep.subr.mxu0 0.0
        %1816 = vmatpush2.msra.mxu0 0.0
        %1817 = vmatprep.subr.mxu0 0.0
        %1818 = vmatpush2.msra.mxu0 0.0
        %1819 = vmatprep.subr.mxu0 0.0
        %1820 = vmatpush2.msra.mxu0 0.0
        %1821 = vmatprep.subr.mxu0 0.0
        %1822 = vmatpush2.msra.mxu0 0.0
        %1823 = vmatprep.subr.mxu0 0.0
        %1824 = vmatpush2.msra.mxu0 0.0
        %1825 = vmatprep.subr.mxu0 0.0
        %1826 = vmatpush2.msra.mxu0 0.0
        %1827 = vmatprep.mubr.f32.mxu0 0.0
        %1828 = vmatmul.mubr.f32.gmra.mxu0 %v1761
        %v1829 = vpop.f32.mrf.mxu0
        %v1830 = vadd.f32 %v1758, %v1829
        %v1831 = vpop.f32.mrf.mxu0
        %1832 = vdwg.mxu0
        %v1833 = vmax.f32 %v1830, 0.0
        %v1834 = vld [vmem:[%s10] sm:$0xff]
        %v1835 = vld [vmem:[%s10 + $0x8] sm:$0xff]
        %v1836 = vld [vmem:[%s10 + $0x10] sm:$0xff]
        %v1837 = vld [vmem:[%s10 + $0x18] sm:$0xff]
        %v1838 = vld [vmem:[%s10 + $0x20] sm:$0xff]
        %v1839 = vld [vmem:[%s10 + $0x28] sm:$0xff]
        %v1840 = vld [vmem:[%s10 + $0x30] sm:$0xff]
        %v1841 = vld [vmem:[%s10 + $0x38] sm:$0xff]
        %v1842 = vld [vmem:[%s11] sm:$0x1]
        %v1844 = vlaneseq
        %v1845 = vshrl.u32 %v1844, 7
        %v1846 = vsub.s32 0, %v1845
        %v1847 = vrot.slane %v1842, %v1846
        %vm1849 = vcmask 523264
        %v1851 = vsel %vm1849, %v1833, 0
        %1853 = vmatprep.subr.mxu0 0.0
        %1854 = vmatpush1.msra.mxu0 0.0
        %1855 = vmatprep.subr.mxu0 0.0
        %1856 = vmatpush1.msra.mxu0 0.0
        %1857 = vmatprep.subr.mxu0 0.0
        %1858 = vmatpush1.msra.mxu0 0.0
        %1859 = vmatprep.subr.mxu0 0.0
        %1860 = vmatpush1.msra.mxu0 0.0
        %1861 = vmatprep.subr.mxu0 0.0
        %1862 = vmatpush1.msra.mxu0 0.0
        %1863 = vmatprep.subr.mxu0 0.0
        %1864 = vmatpush1.msra.mxu0 0.0
        %1865 = vmatprep.subr.mxu0 0.0
        %1866 = vmatpush1.msra.mxu0 0.0
        %1867 = vmatprep.subr.mxu0 0.0
        %1868 = vmatpush1.msra.mxu0 0.0
        %1869 = vmatprep.subr.mxu0 0.0
        %1870 = vmatpush1.msra.mxu0 %v1841
        %1871 = vmatprep.subr.mxu0 0.0
        %1872 = vmatpush1.msra.mxu0 %v1840
        %1873 = vmatprep.subr.mxu0 0.0
        %1874 = vmatpush1.msra.mxu0 %v1839
        %1875 = vmatprep.subr.mxu0 0.0
        %1876 = vmatpush1.msra.mxu0 %v1838
        %1877 = vmatprep.subr.mxu0 0.0
        %1878 = vmatpush1.msra.mxu0 %v1837
        %1879 = vmatprep.subr.mxu0 0.0
        %1880 = vmatpush1.msra.mxu0 %v1836
        %1881 = vmatprep.subr.mxu0 0.0
        %1882 = vmatpush1.msra.mxu0 %v1835
        %1883 = vmatprep.subr.mxu0 0.0
        %1884 = vmatpush1.msra.mxu0 %v1834
        %1885 = vmatprep.subr.mxu0 0.0
        %1886 = vmatpush2.msra.mxu0 0.0
        %1887 = vmatprep.subr.mxu0 0.0
        %1888 = vmatpush2.msra.mxu0 0.0
        %1889 = vmatprep.subr.mxu0 0.0
        %1890 = vmatpush2.msra.mxu0 0.0
        %1891 = vmatprep.subr.mxu0 0.0
        %1892 = vmatpush2.msra.mxu0 0.0
        %1893 = vmatprep.subr.mxu0 0.0
        %1894 = vmatpush2.msra.mxu0 0.0
        %1895 = vmatprep.subr.mxu0 0.0
        %1896 = vmatpush2.msra.mxu0 0.0
        %1897 = vmatprep.subr.mxu0 0.0
        %1898 = vmatpush2.msra.mxu0 0.0
        %1899 = vmatprep.subr.mxu0 0.0
        %1900 = vmatpush2.msra.mxu0 0.0
        %1901 = vmatprep.subr.mxu0 0.0
        %1902 = vmatpush2.msra.mxu0 0.0
        %1903 = vmatprep.subr.mxu0 0.0
        %1904 = vmatpush2.msra.mxu0 0.0
        %1905 = vmatprep.subr.mxu0 0.0
        %1906 = vmatpush2.msra.mxu0 0.0
        %1907 = vmatprep.subr.mxu0 0.0
        %1908 = vmatpush2.msra.mxu0 0.0
        %1909 = vmatprep.subr.mxu0 0.0
        %1910 = vmatpush2.msra.mxu0 0.0
        %1911 = vmatprep.subr.mxu0 0.0
        %1912 = vmatpush2.msra.mxu0 0.0
        %1913 = vmatprep.subr.mxu0 0.0
        %1914 = vmatpush2.msra.mxu0 0.0
        %1915 = vmatprep.subr.mxu0 0.0
        %1916 = vmatpush2.msra.mxu0 0.0
        %1917 = vmatprep.mubr.f32.mxu0 0.0
        %1918 = vmatmul.mubr.f32.gmra.mxu0 %v1851
        %v1919 = vpop.f32.mrf.mxu0
        %v1920 = vadd.f32 %v1847, %v1919
        %v1921 = vpop.f32.mrf.mxu0
        %1922 = vdwg.mxu0
        %v1923 = vld [vmem:[%s14] sm:$0x1]
        %v1924 = vld [vmem:[%s15] sm:$0x1]
        %v1925 = vadd.f32 %v1748, %v1920
        %v1926 = vsel %vm679, %v1925, 0.0
        %1927 = vadd.xlane.f32.xlu0 %v1926
        %v1928 = vpop.xlane.xlu0 %1927
        %v1929 = vmul.f32 %v1928, %v1724
        %v1930 = vsub.f32 %v1925, %v1929
        %v1931 = vmul.f32 %v1930, %v1930
        %v1932 = vsel %vm679, %v1931, 0.0
        %1933 = vadd.xlane.f32.xlu0 %v1932
        %v1934 = vpop.xlane.xlu0 %1933
        %v1935 = vmul.f32 %v1934, %v1724
        %v1936 = vadd.f32 %v1935, 1e-05
        %v1937 = vrsqrt.pop %v1936
        %v1938 = vmul.f32 %v1930, %v1937
        %v1940 = vlaneseq
        %v1941 = vshrl.u32 %v1940, 7
        %v1942 = vsub.s32 0, %v1941
        %v1943 = vrot.slane %v1923, %v1942
        %v1945 = vmul.f32 %v1938, %v1943
        %v1947 = vlaneseq
        %v1948 = vshrl.u32 %v1947, 7
        %v1949 = vsub.s32 0, %v1948
        %v1950 = vrot.slane %v1924, %v1949
        %v1952 = vadd.f32 %v1945, %v1950
        %s1953 = scalar_lea.vmem %s4, 32
        %v1954 = vld [vmem:[%s1953] sm:$0xff]
        %v1955 = vld [vmem:[%s1953 + $0x8] sm:$0xff]
        %v1956 = vld [vmem:[%s1953 + $0x10] sm:$0xff]
        %v1957 = vld [vmem:[%s1953 + $0x18] sm:$0xff]
        %s1958 = scalar_lea.vmem %s5, 1
        %v1959 = vld [vmem:[%s1958] sm:$0x1]
        %s1960 = scalar_lea.vmem %s6, 32
        %v1961 = vld [vmem:[%s1960] sm:$0xff]
        %v1962 = vld [vmem:[%s1960 + $0x8] sm:$0xff]
        %v1963 = vld [vmem:[%s1960 + $0x10] sm:$0xff]
        %v1964 = vld [vmem:[%s1960 + $0x18] sm:$0xff]
        %s1965 = scalar_lea.vmem %s7, 1
        %v1966 = vld [vmem:[%s1965] sm:$0x1]
        %v1968 = vlaneseq
        %v1969 = vshrl.u32 %v1968, 7
        %v1970 = vsub.s32 0, %v1969
        %v1971 = vrot.slane %v1959, %v1970
        %v1974 = vsel %vm679, %v1952, 0
        %1976 = vmatprep.subr.mxu0 0.0
        %1977 = vmatpush1.msra.mxu0 0.0
        %1978 = vmatprep.subr.mxu0 0.0
        %1979 = vmatpush1.msra.mxu0 0.0
        %1980 = vmatprep.subr.mxu0 0.0
        %1981 = vmatpush1.msra.mxu0 0.0
        %1982 = vmatprep.subr.mxu0 0.0
        %1983 = vmatpush1.msra.mxu0 0.0
        %1984 = vmatprep.subr.mxu0 0.0
        %1985 = vmatpush1.msra.mxu0 0.0
        %1986 = vmatprep.subr.mxu0 0.0
        %1987 = vmatpush1.msra.mxu0 0.0
        %1988 = vmatprep.subr.mxu0 0.0
        %1989 = vmatpush1.msra.mxu0 0.0
        %1990 = vmatprep.subr.mxu0 0.0
        %1991 = vmatpush1.msra.mxu0 0.0
        %1992 = vmatprep.subr.mxu0 0.0
        %1993 = vmatpush1.msra.mxu0 0.0
        %1994 = vmatprep.subr.mxu0 0.0
        %1995 = vmatpush1.msra.mxu0 0.0
        %1996 = vmatprep.subr.mxu0 0.0
        %1997 = vmatpush1.msra.mxu0 0.0
        %1998 = vmatprep.subr.mxu0 0.0
        %1999 = vmatpush1.msra.mxu0 0.0
        %2000 = vmatprep.subr.mxu0 0.0
        %2001 = vmatpush1.msra.mxu0 %v1957
        %2002 = vmatprep.subr.mxu0 0.0
        %2003 = vmatpush1.msra.mxu0 %v1956
        %2004 = vmatprep.subr.mxu0 0.0
        %2005 = vmatpush1.msra.mxu0 %v1955
        %2006 = vmatprep.subr.mxu0 0.0
        %2007 = vmatpush1.msra.mxu0 %v1954
        %2008 = vmatprep.subr.mxu0 0.0
        %2009 = vmatpush2.msra.mxu0 0.0
        %2010 = vmatprep.subr.mxu0 0.0
        %2011 = vmatpush2.msra.mxu0 0.0
        %2012 = vmatprep.subr.mxu0 0.0
        %2013 = vmatpush2.msra.mxu0 0.0
        %2014 = vmatprep.subr.mxu0 0.0
        %2015 = vmatpush2.msra.mxu0 0.0
        %2016 = vmatprep.subr.mxu0 0.0
        %2017 = vmatpush2.msra.mxu0 0.0
        %2018 = vmatprep.subr.mxu0 0.0
        %2019 = vmatpush2.msra.mxu0 0.0
        %2020 = vmatprep.subr.mxu0 0.0
        %2021 = vmatpush2.msra.mxu0 0.0
        %2022 = vmatprep.subr.mxu0 0.0
        %2023 = vmatpush2.msra.mxu0 0.0
        %2024 = vmatprep.subr.mxu0 0.0
        %2025 = vmatpush2.msra.mxu0 0.0
        %2026 = vmatprep.subr.mxu0 0.0
        %2027 = vmatpush2.msra.mxu0 0.0
        %2028 = vmatprep.subr.mxu0 0.0
        %2029 = vmatpush2.msra.mxu0 0.0
        %2030 = vmatprep.subr.mxu0 0.0
        %2031 = vmatpush2.msra.mxu0 0.0
        %2032 = vmatprep.subr.mxu0 0.0
        %2033 = vmatpush2.msra.mxu0 0.0
        %2034 = vmatprep.subr.mxu0 0.0
        %2035 = vmatpush2.msra.mxu0 0.0
        %2036 = vmatprep.subr.mxu0 0.0
        %2037 = vmatpush2.msra.mxu0 0.0
        %2038 = vmatprep.subr.mxu0 0.0
        %2039 = vmatpush2.msra.mxu0 0.0
        %2040 = vmatprep.mubr.f32.mxu0 0.0
        %2041 = vmatmul.mubr.f32.gmra.mxu0 %v1974
        %v2042 = vpop.f32.mrf.mxu0
        %v2043 = vadd.f32 %v1971, %v2042
        %v2044 = vpop.f32.mrf.mxu0
        %2045 = vdwg.mxu0
        %2047 = vrot.lane.b32.xlu0 %v2043, 96
        %v2048 = vpop.permute.xlu0 %2047
        %v2049 = vsel %vm756, %v2043, 0
        %v2051 = vsel %vm756, %v2048, 0
        %2053 = vmatprep.subr.mxu0 0.0
        %2054 = vmatpush1.xpose.msra.mxu0 0.0
        %2055 = vmatprep.subr.mxu0 0.0
        %2056 = vmatpush1.xpose.msra.mxu0 0.0
        %2057 = vmatprep.subr.mxu0 0.0
        %2058 = vmatpush1.xpose.msra.mxu0 0.0
        %2059 = vmatprep.subr.mxu0 0.0
        %2060 = vmatpush1.xpose.msra.mxu0 0.0
        %2061 = vmatprep.subr.mxu0 0.0
        %2062 = vmatpush1.xpose.msra.mxu0 0.0
        %2063 = vmatprep.subr.mxu0 0.0
        %2064 = vmatpush1.xpose.msra.mxu0 0.0
        %2065 = vmatprep.subr.mxu0 0.0
        %2066 = vmatpush1.xpose.msra.mxu0 0.0
        %2067 = vmatprep.subr.mxu0 0.0
        %2068 = vmatpush1.xpose.msra.mxu0 0.0
        %2069 = vmatprep.subr.mxu0 0.0
        %2070 = vmatpush1.xpose.msra.mxu0 0.0
        %2071 = vmatprep.subr.mxu0 0.0
        %2072 = vmatpush1.xpose.msra.mxu0 0.0
        %2073 = vmatprep.subr.mxu0 0.0
        %2074 = vmatpush1.xpose.msra.mxu0 0.0
        %2075 = vmatprep.subr.mxu0 0.0
        %2076 = vmatpush1.xpose.msra.mxu0 0.0
        %2077 = vmatprep.subr.mxu0 0.0
        %2078 = vmatpush1.xpose.msra.mxu0 0.0
        %2079 = vmatprep.subr.mxu0 0.0
        %2080 = vmatpush1.xpose.msra.mxu0 0.0
        %2081 = vmatprep.subr.mxu0 0.0
        %2082 = vmatpush1.xpose.msra.mxu0 0.0
        %2083 = vmatprep.subr.mxu0 0.0
        %2084 = vmatpush1.xpose.msra.mxu0 %v2051
        %2085 = vmatprep.subr.mxu0 0.0
        %2086 = vmatpush2.xpose.msra.mxu0 0.0
        %2087 = vmatprep.subr.mxu0 0.0
        %2088 = vmatpush2.xpose.msra.mxu0 0.0
        %2089 = vmatprep.subr.mxu0 0.0
        %2090 = vmatpush2.xpose.msra.mxu0 0.0
        %2091 = vmatprep.subr.mxu0 0.0
        %2092 = vmatpush2.xpose.msra.mxu0 0.0
        %2093 = vmatprep.subr.mxu0 0.0
        %2094 = vmatpush2.xpose.msra.mxu0 0.0
        %2095 = vmatprep.subr.mxu0 0.0
        %2096 = vmatpush2.xpose.msra.mxu0 0.0
        %2097 = vmatprep.subr.mxu0 0.0
        %2098 = vmatpush2.xpose.msra.mxu0 0.0
        %2099 = vmatprep.subr.mxu0 0.0
        %2100 = vmatpush2.xpose.msra.mxu0 0.0
        %2101 = vmatprep.subr.mxu0 0.0
        %2102 = vmatpush2.xpose.msra.mxu0 0.0
        %2103 = vmatprep.subr.mxu0 0.0
        %2104 = vmatpush2.xpose.msra.mxu0 0.0
        %2105 = vmatprep.subr.mxu0 0.0
        %2106 = vmatpush2.xpose.msra.mxu0 0.0
        %2107 = vmatprep.subr.mxu0 0.0
        %2108 = vmatpush2.xpose.msra.mxu0 0.0
        %2109 = vmatprep.subr.mxu0 0.0
        %2110 = vmatpush2.xpose.msra.mxu0 0.0
        %2111 = vmatprep.subr.mxu0 0.0
        %2112 = vmatpush2.xpose.msra.mxu0 0.0
        %2113 = vmatprep.subr.mxu0 0.0
        %2114 = vmatpush2.xpose.msra.mxu0 0.0
        %2115 = vmatprep.subr.mxu0 0.0
        %2116 = vmatpush2.xpose.msra.mxu0 0.0
        %2117 = vmatprep.mubr.f32.mxu0 0.0
        %2118 = vmatmul.mubr.f32.gmra.mxu0 %v2049
        %v2119 = vpop.f32.mrf.mxu0
        %v2120 = vadd.f32 0.0, %v2119
        %v2121 = vpop.f32.mrf.mxu0
        %2122 = vdwg.mxu0
        %v2123 = vmul.f32 %v2120, 0.35355338
        %v2124 = vsel %vm756, %v2123, -inf
        %2125 = vmax.xlane.f32.xlu0 %v2124
        %v2126 = vpop.xlane.xlu0 %2125
        %v2127 = vsub.f32 %v2123, %v2126
        %v2128 = vmul.f32 %v2127, 1.442695
        %v2129 = vpow.pop %v2128
        %v2130 = vsel %vm756, %v2129, 0.0
        %2131 = vadd.xlane.f32.xlu0 %v2130
        %v2132 = vpop.xlane.xlu0 %2131
        %v2133 = vrcp.pop %v2132
        %v2134 = vmul.f32 %v2129, %v2133
        %2135 = vrot.lane.b32.xlu0 %v2043, 64
        %v2136 = vpop.permute.xlu0 %2135
        %v2139 = vsel %vm756, %v2134, 0
        %2141 = vmatprep.subr.mxu0 0.0
        %2142 = vmatpush1.msra.mxu0 0.0
        %2143 = vmatprep.subr.mxu0 0.0
        %2144 = vmatpush1.msra.mxu0 0.0
        %2145 = vmatprep.subr.mxu0 0.0
        %2146 = vmatpush1.msra.mxu0 0.0
        %2147 = vmatprep.subr.mxu0 0.0
        %2148 = vmatpush1.msra.mxu0 0.0
        %2149 = vmatprep.subr.mxu0 0.0
        %2150 = vmatpush1.msra.mxu0 0.0
        %2151 = vmatprep.subr.mxu0 0.0
        %2152 = vmatpush1.msra.mxu0 0.0
        %2153 = vmatprep.subr.mxu0 0.0
        %2154 = vmatpush1.msra.mxu0 0.0
        %2155 = vmatprep.subr.mxu0 0.0
        %2156 = vmatpush1.msra.mxu0 0.0
        %2157 = vmatprep.subr.mxu0 0.0
        %2158 = vmatpush1.msra.mxu0 0.0
        %2159 = vmatprep.subr.mxu0 0.0
        %2160 = vmatpush1.msra.mxu0 0.0
        %2161 = vmatprep.subr.mxu0 0.0
        %2162 = vmatpush1.msra.mxu0 0.0
        %2163 = vmatprep.subr.mxu0 0.0
        %2164 = vmatpush1.msra.mxu0 0.0
        %2165 = vmatprep.subr.mxu0 0.0
        %2166 = vmatpush1.msra.mxu0 0.0
        %2167 = vmatprep.subr.mxu0 0.0
        %2168 = vmatpush1.msra.mxu0 0.0
        %2169 = vmatprep.subr.mxu0 0.0
        %2170 = vmatpush1.msra.mxu0 0.0
        %2171 = vmatprep.subr.mxu0 0.0
        %2172 = vmatpush1.msra.mxu0 %v2136
        %2173 = vmatprep.subr.mxu0 0.0
        %2174 = vmatpush2.msra.mxu0 0.0
        %2175 = vmatprep.subr.mxu0 0.0
        %2176 = vmatpush2.msra.mxu0 0.0
        %2177 = vmatprep.subr.mxu0 0.0
        %2178 = vmatpush2.msra.mxu0 0.0
        %2179 = vmatprep.subr.mxu0 0.0
        %2180 = vmatpush2.msra.mxu0 0.0
        %2181 = vmatprep.subr.mxu0 0.0
        %2182 = vmatpush2.msra.mxu0 0.0
        %2183 = vmatprep.subr.mxu0 0.0
        %2184 = vmatpush2.msra.mxu0 0.0
        %2185 = vmatprep.subr.mxu0 0.0
        %2186 = vmatpush2.msra.mxu0 0.0
        %2187 = vmatprep.subr.mxu0 0.0
        %2188 = vmatpush2.msra.mxu0 0.0
        %2189 = vmatprep.subr.mxu0 0.0
        %2190 = vmatpush2.msra.mxu0 0.0
        %2191 = vmatprep.subr.mxu0 0.0
        %2192 = vmatpush2.msra.mxu0 0.0
        %2193 = vmatprep.subr.mxu0 0.0
        %2194 = vmatpush2.msra.mxu0 0.0
        %2195 = vmatprep.subr.mxu0 0.0
        %2196 = vmatpush2.msra.mxu0 0.0
        %2197 = vmatprep.subr.mxu0 0.0
        %2198 = vmatpush2.msra.mxu0 0.0
        %2199 = vmatprep.subr.mxu0 0.0
        %2200 = vmatpush2.msra.mxu0 0.0
        %2201 = vmatprep.subr.mxu0 0.0
        %2202 = vmatpush2.msra.mxu0 0.0
        %2203 = vmatprep.subr.mxu0 0.0
        %2204 = vmatpush2.msra.mxu0 0.0
        %2205 = vmatprep.mubr.f32.mxu0 0.0
        %2206 = vmatmul.mubr.f32.gmra.mxu0 %v2139
        %v2207 = vpop.f32.mrf.mxu0
        %v2208 = vadd.f32 0.0, %v2207
        %v2209 = vpop.f32.mrf.mxu0
        %2210 = vdwg.mxu0
        %2211 = vrot.lane.b32.xlu0 %v2043, 120
        %v2212 = vpop.permute.xlu0 %2211
        %2213 = vrot.lane.b32.xlu0 %v2043, 88
        %v2214 = vpop.permute.xlu0 %2213
        %v2215 = vsel %vm756, %v2212, 0
        %v2217 = vsel %vm756, %v2214, 0
        %2219 = vmatprep.subr.mxu0 0.0
        %2220 = vmatpush1.xpose.msra.mxu0 0.0
        %2221 = vmatprep.subr.mxu0 0.0
        %2222 = vmatpush1.xpose.msra.mxu0 0.0
        %2223 = vmatprep.subr.mxu0 0.0
        %2224 = vmatpush1.xpose.msra.mxu0 0.0
        %2225 = vmatprep.subr.mxu0 0.0
        %2226 = vmatpush1.xpose.msra.mxu0 0.0
        %2227 = vmatprep.subr.mxu0 0.0
        %2228 = vmatpush1.xpose.msra.mxu0 0.0
        %2229 = vmatprep.subr.mxu0 0.0
        %2230 = vmatpush1.xpose.msra.mxu0 0.0
        %2231 = vmatprep.subr.mxu0 0.0
        %2232 = vmatpush1.xpose.msra.mxu0 0.0
        %2233 = vmatprep.subr.mxu0 0.0
        %2234 = vmatpush1.xpose.msra.mxu0 0.0
        %2235 = vmatprep.subr.mxu0 0.0
        %2236 = vmatpush1.xpose.msra.mxu0 0.0
        %2237 = vmatprep.subr.mxu0 0.0
        %2238 = vmatpush1.xpose.msra.mxu0 0.0
        %2239 = vmatprep.subr.mxu0 0.0
        %2240 = vmatpush1.xpose.msra.mxu0 0.0
        %2241 = vmatprep.subr.mxu0 0.0
        %2242 = vmatpush1.xpose.msra.mxu0 0.0
        %2243 = vmatprep.subr.mxu0 0.0
        %2244 = vmatpush1.xpose.msra.mxu0 0.0
        %2245 = vmatprep.subr.mxu0 0.0
        %2246 = vmatpush1.xpose.msra.mxu0 0.0
        %2247 = vmatprep.subr.mxu0 0.0
        %2248 = vmatpush1.xpose.msra.mxu0 0.0
        %2249 = vmatprep.subr.mxu0 0.0
        %2250 = vmatpush1.xpose.msra.mxu0 %v2217
        %2251 = vmatprep.subr.mxu0 0.0
        %2252 = vmatpush2.xpose.msra.mxu0 0.0
        %2253 = vmatprep.subr.mxu0 0.0
        %2254 = vmatpush2.xpose.msra.mxu0 0.0
        %2255 = vmatprep.subr.mxu0 0.0
        %2256 = vmatpush2.xpose.msra.mxu0 0.0
        %2257 = vmatprep.subr.mxu0 0.0
        %2258 = vmatpush2.xpose.msra.mxu0 0.0
        %2259 = vmatprep.subr.mxu0 0.0
        %2260 = vmatpush2.xpose.msra.mxu0 0.0
        %2261 = vmatprep.subr.mxu0 0.0
        %2262 = vmatpush2.xpose.msra.mxu0 0.0
        %2263 = vmatprep.subr.mxu0 0.0
        %2264 = vmatpush2.xpose.msra.mxu0 0.0
        %2265 = vmatprep.subr.mxu0 0.0
        %2266 = vmatpush2.xpose.msra.mxu0 0.0
        %2267 = vmatprep.subr.mxu0 0.0
        %2268 = vmatpush2.xpose.msra.mxu0 0.0
        %2269 = vmatprep.subr.mxu0 0.0
        %2270 = vmatpush2.xpose.msra.mxu0 0.0
        %2271 = vmatprep.subr.mxu0 0.0
        %2272 = vmatpush2.xpose.msra.mxu0 0.0
        %2273 = vmatprep.subr.mxu0 0.0
        %2274 = vmatpush2.xpose.msra.mxu0 0.0
        %2275 = vmatprep.subr.mxu0 0.0
        %2276 = vmatpush2.xpose.msra.mxu0 0.0
        %2277 = vmatprep.subr.mxu0 0.0
        %2278 = vmatpush2.xpose.msra.mxu0 0.0
        %2279 = vmatprep.subr.mxu0 0.0
        %2280 = vmatpush2.xpose.msra.mxu0 0.0
        %2281 = vmatprep.subr.mxu0 0.0
        %2282 = vmatpush2.xpose.msra.mxu0 0.0
        %2283 = vmatprep.mubr.f32.mxu0 0.0
        %2284 = vmatmul.mubr.f32.gmra.mxu0 %v2215
        %v2285 = vpop.f32.mrf.mxu0
        %v2286 = vadd.f32 0.0, %v2285
        %v2287 = vpop.f32.mrf.mxu0
        %2288 = vdwg.mxu0
        %v2289 = vmul.f32 %v2286, 0.35355338
        %v2290 = vsel %vm756, %v2289, -inf
        %2291 = vmax.xlane.f32.xlu0 %v2290
        %v2292 = vpop.xlane.xlu0 %2291
        %v2293 = vsub.f32 %v2289, %v2292
        %v2294 = vmul.f32 %v2293, 1.442695
        %v2295 = vpow.pop %v2294
        %v2296 = vsel %vm756, %v2295, 0.0
        %2297 = vadd.xlane.f32.xlu0 %v2296
        %v2298 = vpop.xlane.xlu0 %2297
        %v2299 = vrcp.pop %v2298
        %v2300 = vmul.f32 %v2295, %v2299
        %2301 = vrot.lane.b32.xlu0 %v2043, 56
        %v2302 = vpop.permute.xlu0 %2301
        %v2305 = vsel %vm756, %v2300, 0
        %2307 = vmatprep.subr.mxu0 0.0
        %2308 = vmatpush1.msra.mxu0 0.0
        %2309 = vmatprep.subr.mxu0 0.0
        %2310 = vmatpush1.msra.mxu0 0.0
        %2311 = vmatprep.subr.mxu0 0.0
        %2312 = vmatpush1.msra.mxu0 0.0
        %2313 = vmatprep.subr.mxu0 0.0
        %2314 = vmatpush1.msra.mxu0 0.0
        %2315 = vmatprep.subr.mxu0 0.0
        %2316 = vmatpush1.msra.mxu0 0.0
        %2317 = vmatprep.subr.mxu0 0.0
        %2318 = vmatpush1.msra.mxu0 0.0
        %2319 = vmatprep.subr.mxu0 0.0
        %2320 = vmatpush1.msra.mxu0 0.0
        %2321 = vmatprep.subr.mxu0 0.0
        %2322 = vmatpush1.msra.mxu0 0.0
        %2323 = vmatprep.subr.mxu0 0.0
        %2324 = vmatpush1.msra.mxu0 0.0
        %2325 = vmatprep.subr.mxu0 0.0
        %2326 = vmatpush1.msra.mxu0 0.0
        %2327 = vmatprep.subr.mxu0 0.0
        %2328 = vmatpush1.msra.mxu0 0.0
        %2329 = vmatprep.subr.mxu0 0.0
        %2330 = vmatpush1.msra.mxu0 0.0
        %2331 = vmatprep.subr.mxu0 0.0
        %2332 = vmatpush1.msra.mxu0 0.0
        %2333 = vmatprep.subr.mxu0 0.0
        %2334 = vmatpush1.msra.mxu0 0.0
        %2335 = vmatprep.subr.mxu0 0.0
        %2336 = vmatpush1.msra.mxu0 0.0
        %2337 = vmatprep.subr.mxu0 0.0
        %2338 = vmatpush1.msra.mxu0 %v2302
        %2339 = vmatprep.subr.mxu0 0.0
        %2340 = vmatpush2.msra.mxu0 0.0
        %2341 = vmatprep.subr.mxu0 0.0
        %2342 = vmatpush2.msra.mxu0 0.0
        %2343 = vmatprep.subr.mxu0 0.0
        %2344 = vmatpush2.msra.mxu0 0.0
        %2345 = vmatprep.subr.mxu0 0.0
        %2346 = vmatpush2.msra.mxu0 0.0
        %2347 = vmatprep.subr.mxu0 0.0
        %2348 = vmatpush2.msra.mxu0 0.0
        %2349 = vmatprep.subr.mxu0 0.0
        %2350 = vmatpush2.msra.mxu0 0.0
        %2351 = vmatprep.subr.mxu0 0.0
        %2352 = vmatpush2.msra.mxu0 0.0
        %2353 = vmatprep.subr.mxu0 0.0
        %2354 = vmatpush2.msra.mxu0 0.0
        %2355 = vmatprep.subr.mxu0 0.0
        %2356 = vmatpush2.msra.mxu0 0.0
        %2357 = vmatprep.subr.mxu0 0.0
        %2358 = vmatpush2.msra.mxu0 0.0
        %2359 = vmatprep.subr.mxu0 0.0
        %2360 = vmatpush2.msra.mxu0 0.0
        %2361 = vmatprep.subr.mxu0 0.0
        %2362 = vmatpush2.msra.mxu0 0.0
        %2363 = vmatprep.subr.mxu0 0.0
        %2364 = vmatpush2.msra.mxu0 0.0
        %2365 = vmatprep.subr.mxu0 0.0
        %2366 = vmatpush2.msra.mxu0 0.0
        %2367 = vmatprep.subr.mxu0 0.0
        %2368 = vmatpush2.msra.mxu0 0.0
        %2369 = vmatprep.subr.mxu0 0.0
        %2370 = vmatpush2.msra.mxu0 0.0
        %2371 = vmatprep.mubr.f32.mxu0 0.0
        %2372 = vmatmul.mubr.f32.gmra.mxu0 %v2305
        %v2373 = vpop.f32.mrf.mxu0
        %v2374 = vadd.f32 0.0, %v2373
        %v2375 = vpop.f32.mrf.mxu0
        %2376 = vdwg.mxu0
        %v2378 = vsel %vm756, %v2374, 0
        %2380 = vmatprep.subr.mxu0 0.0
        %2381 = vmatpush1.msra.mxu0 0.0
        %2382 = vmatprep.subr.mxu0 0.0
        %2383 = vmatpush1.msra.mxu0 0.0
        %2384 = vmatprep.subr.mxu0 0.0
        %2385 = vmatpush1.msra.mxu0 0.0
        %2386 = vmatprep.subr.mxu0 0.0
        %2387 = vmatpush1.msra.mxu0 0.0
        %2388 = vmatprep.subr.mxu0 0.0
        %2389 = vmatpush1.msra.mxu0 0.0
        %2390 = vmatprep.subr.mxu0 0.0
        %2391 = vmatpush1.msra.mxu0 0.0
        %2392 = vmatprep.subr.mxu0 0.0
        %2393 = vmatpush1.msra.mxu0 0.0
        %2394 = vmatprep.subr.mxu0 0.0
        %2395 = vmatpush1.msra.mxu0 0.0
        %2396 = vmatprep.subr.mxu0 0.0
        %2397 = vmatpush1.msra.mxu0 0.0
        %2398 = vmatprep.subr.mxu0 0.0
        %2399 = vmatpush1.msra.mxu0 0.0
        %2400 = vmatprep.subr.mxu0 0.0
        %2401 = vmatpush1.msra.mxu0 0.0
        %2402 = vmatprep.subr.mxu0 0.0
        %2403 = vmatpush1.msra.mxu0 0.0
        %2404 = vmatprep.subr.mxu0 0.0
        %2405 = vmatpush1.msra.mxu0 0.0
        %2406 = vmatprep.subr.mxu0 0.0
        %2407 = vmatpush1.msra.mxu0 0.0
        %2408 = vmatprep.subr.mxu0 0.0
        %2409 = vmatpush1.msra.mxu0 0.0
        %2410 = vmatprep.subr.mxu0 0.0
        %2411 = vmatpush1.msra.mxu0 %v1962
        %2412 = vmatprep.subr.mxu0 0.0
        %2413 = vmatpush2.msra.mxu0 0.0
        %2414 = vmatprep.subr.mxu0 0.0
        %2415 = vmatpush2.msra.mxu0 0.0
        %2416 = vmatprep.subr.mxu0 0.0
        %2417 = vmatpush2.msra.mxu0 0.0
        %2418 = vmatprep.subr.mxu0 0.0
        %2419 = vmatpush2.msra.mxu0 0.0
        %2420 = vmatprep.subr.mxu0 0.0
        %2421 = vmatpush2.msra.mxu0 0.0
        %2422 = vmatprep.subr.mxu0 0.0
        %2423 = vmatpush2.msra.mxu0 0.0
        %2424 = vmatprep.subr.mxu0 0.0
        %2425 = vmatpush2.msra.mxu0 0.0
        %2426 = vmatprep.subr.mxu0 0.0
        %2427 = vmatpush2.msra.mxu0 0.0
        %2428 = vmatprep.subr.mxu0 0.0
        %2429 = vmatpush2.msra.mxu0 0.0
        %2430 = vmatprep.subr.mxu0 0.0
        %2431 = vmatpush2.msra.mxu0 0.0
        %2432 = vmatprep.subr.mxu0 0.0
        %2433 = vmatpush2.msra.mxu0 0.0
        %2434 = vmatprep.subr.mxu0 0.0
        %2435 = vmatpush2.msra.mxu0 0.0
        %2436 = vmatprep.subr.mxu0 0.0
        %2437 = vmatpush2.msra.mxu0 0.0
        %2438 = vmatprep.subr.mxu0 0.0
        %2439 = vmatpush2.msra.mxu0 0.0
        %2440 = vmatprep.subr.mxu0 0.0
        %2441 = vmatpush2.msra.mxu0 0.0
        %2442 = vmatprep.subr.mxu0 0.0
        %2443 = vmatpush2.msra.mxu0 0.0
        %2444 = vmatprep.mubr.f32.mxu0 0.0
        %2445 = vmatmul.mubr.f32.gmra.mxu0 %v2378
        %v2446 = vpop.f32.mrf.mxu0
        %v2447 = vadd.f32 0.0, %v2446
        %v2448 = vpop.f32.mrf.mxu0
        %2449 = vdwg.mxu0
        %v2451 = vsel %vm756, %v2208, 0
        %2453 = vmatprep.subr.mxu0 0.0
        %2454 = vmatpush1.msra.mxu0 0.0
        %2455 = vmatprep.subr.mxu0 0.0
        %2456 = vmatpush1.msra.mxu0 0.0
        %2457 = vmatprep.subr.mxu0 0.0
        %2458 = vmatpush1.msra.mxu0 0.0
        %2459 = vmatprep.subr.mxu0 0.0
        %2460 = vmatpush1.msra.mxu0 0.0
        %2461 = vmatprep.subr.mxu0 0.0
        %2462 = vmatpush1.msra.mxu0 0.0
        %2463 = vmatprep.subr.mxu0 0.0
        %2464 = vmatpush1.msra.mxu0 0.0
        %2465 = vmatprep.subr.mxu0 0.0
        %2466 = vmatpush1.msra.mxu0 0.0
        %2467 = vmatprep.subr.mxu0 0.0
        %2468 = vmatpush1.msra.mxu0 0.0
        %2469 = vmatprep.subr.mxu0 0.0
        %2470 = vmatpush1.msra.mxu0 0.0
        %2471 = vmatprep.subr.mxu0 0.0
        %2472 = vmatpush1.msra.mxu0 0.0
        %2473 = vmatprep.subr.mxu0 0.0
        %2474 = vmatpush1.msra.mxu0 0.0
        %2475 = vmatprep.subr.mxu0 0.0
        %2476 = vmatpush1.msra.mxu0 0.0
        %2477 = vmatprep.subr.mxu0 0.0
        %2478 = vmatpush1.msra.mxu0 0.0
        %2479 = vmatprep.subr.mxu0 0.0
        %2480 = vmatpush1.msra.mxu0 0.0
        %2481 = vmatprep.subr.mxu0 0.0
        %2482 = vmatpush1.msra.mxu0 0.0
        %2483 = vmatprep.subr.mxu0 0.0
        %2484 = vmatpush1.msra.mxu0 %v1961
        %2485 = vmatprep.subr.mxu0 0.0
        %2486 = vmatpush2.msra.mxu0 0.0
        %2487 = vmatprep.subr.mxu0 0.0
        %2488 = vmatpush2.msra.mxu0 0.0
        %2489 = vmatprep.subr.mxu0 0.0
        %2490 = vmatpush2.msra.mxu0 0.0
        %2491 = vmatprep.subr.mxu0 0.0
        %2492 = vmatpush2.msra.mxu0 0.0
        %2493 = vmatprep.subr.mxu0 0.0
        %2494 = vmatpush2.msra.mxu0 0.0
        %2495 = vmatprep.subr.mxu0 0.0
        %2496 = vmatpush2.msra.mxu0 0.0
        %2497 = vmatprep.subr.mxu0 0.0
        %2498 = vmatpush2.msra.mxu0 0.0
        %2499 = vmatprep.subr.mxu0 0.0
        %2500 = vmatpush2.msra.mxu0 0.0
        %2501 = vmatprep.subr.mxu0 0.0
        %2502 = vmatpush2.msra.mxu0 0.0
        %2503 = vmatprep.subr.mxu0 0.0
        %2504 = vmatpush2.msra.mxu0 0.0
        %2505 = vmatprep.subr.mxu0 0.0
        %2506 = vmatpush2.msra.mxu0 0.0
        %2507 = vmatprep.subr.mxu0 0.0
        %2508 = vmatpush2.msra.mxu0 0.0
        %2509 = vmatprep.subr.mxu0 0.0
        %2510 = vmatpush2.msra.mxu0 0.0
        %2511 = vmatprep.subr.mxu0 0.0
        %2512 = vmatpush2.msra.mxu0 0.0
        %2513 = vmatprep.subr.mxu0 0.0
        %2514 = vmatpush2.msra.mxu0 0.0
        %2515 = vmatprep.subr.mxu0 0.0
        %2516 = vmatpush2.msra.mxu0 0.0
        %2517 = vmatprep.mubr.f32.mxu0 0.0
        %2518 = vmatmul.mubr.f32.gmra.mxu0 %v2451
        %v2519 = vpop.f32.mrf.mxu0
        %v2520 = vadd.f32 %v2447, %v2519
        %v2521 = vpop.f32.mrf.mxu0
        %2522 = vdwg.mxu0
        %2523 = vrot.lane.b32.xlu0 %v2043, 112
        %v2524 = vpop.permute.xlu0 %2523
        %2525 = vrot.lane.b32.xlu0 %v2043, 80
        %v2526 = vpop.permute.xlu0 %2525
        %v2527 = vsel %vm756, %v2524, 0
        %v2529 = vsel %vm756, %v2526, 0
        %2531 = vmatprep.subr.mxu0 0.0
        %2532 = vmatpush1.xpose.msra.mxu0 0.0
        %2533 = vmatprep.subr.mxu0 0.0
        %2534 = vmatpush1.xpose.msra.mxu0 0.0
        %2535 = vmatprep.subr.mxu0 0.0
        %2536 = vmatpush1.xpose.msra.mxu0 0.0
        %2537 = vmatprep.subr.mxu0 0.0
        %2538 = vmatpush1.xpose.msra.mxu0 0.0
        %2539 = vmatprep.subr.mxu0 0.0
        %2540 = vmatpush1.xpose.msra.mxu0 0.0
        %2541 = vmatprep.subr.mxu0 0.0
        %2542 = vmatpush1.xpose.msra.mxu0 0.0
        %2543 = vmatprep.subr.mxu0 0.0
        %2544 = vmatpush1.xpose.msra.mxu0 0.0
        %2545 = vmatprep.subr.mxu0 0.0
        %2546 = vmatpush1.xpose.msra.mxu0 0.0
        %2547 = vmatprep.subr.mxu0 0.0
        %2548 = vmatpush1.xpose.msra.mxu0 0.0
        %2549 = vmatprep.subr.mxu0 0.0
        %2550 = vmatpush1.xpose.msra.mxu0 0.0
        %2551 = vmatprep.subr.mxu0 0.0
        %2552 = vmatpush1.xpose.msra.mxu0 0.0
        %2553 = vmatprep.subr.mxu0 0.0
        %2554 = vmatpush1.xpose.msra.mxu0 0.0
        %2555 = vmatprep.subr.mxu0 0.0
        %2556 = vmatpush1.xpose.msra.mxu0 0.0
        %2557 = vmatprep.subr.mxu0 0.0
        %2558 = vmatpush1.xpose.msra.mxu0 0.0
        %2559 = vmatprep.subr.mxu0 0.0
        %2560 = vmatpush1.xpose.msra.mxu0 0.0
        %2561 = vmatprep.subr.mxu0 0.0
        %2562 = vmatpush1.xpose.msra.mxu0 %v2529
        %2563 = vmatprep.subr.mxu0 0.0
        %2564 = vmatpush2.xpose.msra.mxu0 0.0
        %2565 = vmatprep.subr.mxu0 0.0
        %2566 = vmatpush2.xpose.msra.mxu0 0.0
        %2567 = vmatprep.subr.mxu0 0.0
        %2568 = vmatpush2.xpose.msra.mxu0 0.0
        %2569 = vmatprep.subr.mxu0 0.0
        %2570 = vmatpush2.xpose.msra.mxu0 0.0
        %2571 = vmatprep.subr.mxu0 0.0
        %2572 = vmatpush2.xpose.msra.mxu0 0.0
        %2573 = vmatprep.subr.mxu0 0.0
        %2574 = vmatpush2.xpose.msra.mxu0 0.0
        %2575 = vmatprep.subr.mxu0 0.0
        %2576 = vmatpush2.xpose.msra.mxu0 0.0
        %2577 = vmatprep.subr.mxu0 0.0
        %2578 = vmatpush2.xpose.msra.mxu0 0.0
        %2579 = vmatprep.subr.mxu0 0.0
        %2580 = vmatpush2.xpose.msra.mxu0 0.0
        %2581 = vmatprep.subr.mxu0 0.0
        %2582 = vmatpush2.xpose.msra.mxu0 0.0
        %2583 = vmatprep.subr.mxu0 0.0
        %2584 = vmatpush2.xpose.msra.mxu0 0.0
        %2585 = vmatprep.subr.mxu0 0.0
        %2586 = vmatpush2.xpose.msra.mxu0 0.0
        %2587 = vmatprep.subr.mxu0 0.0
        %2588 = vmatpush2.xpose.msra.mxu0 0.0
        %2589 = vmatprep.subr.mxu0 0.0
        %2590 = vmatpush2.xpose.msra.mxu0 0.0
        %2591 = vmatprep.subr.mxu0 0.0
        %2592 = vmatpush2.xpose.msra.mxu0 0.0
        %2593 = vmatprep.subr.mxu0 0.0
        %2594 = vmatpush2.xpose.msra.mxu0 0.0
        %2595 = vmatprep.mubr.f32.mxu0 0.0
        %2596 = vmatmul.mubr.f32.gmra.mxu0 %v2527
        %v2597 = vpop.f32.mrf.mxu0
        %v2598 = vadd.f32 0.0, %v2597
        %v2599 = vpop.f32.mrf.mxu0
        %2600 = vdwg.mxu0
        %v2601 = vmul.f32 %v2598, 0.35355338
        %v2602 = vsel %vm756, %v2601, -inf
        %2603 = vmax.xlane.f32.xlu0 %v2602
        %v2604 = vpop.xlane.xlu0 %2603
        %v2605 = vsub.f32 %v2601, %v2604
        %v2606 = vmul.f32 %v2605, 1.442695
        %v2607 = vpow.pop %v2606
        %v2608 = vsel %vm756, %v2607, 0.0
        %2609 = vadd.xlane.f32.xlu0 %v2608
        %v2610 = vpop.xlane.xlu0 %2609
        %v2611 = vrcp.pop %v2610
        %v2612 = vmul.f32 %v2607, %v2611
        %2613 = vrot.lane.b32.xlu0 %v2043, 48
        %v2614 = vpop.permute.xlu0 %2613
        %v2617 = vsel %vm756, %v2612, 0
        %2619 = vmatprep.subr.mxu0 0.0
        %2620 = vmatpush1.msra.mxu0 0.0
        %2621 = vmatprep.subr.mxu0 0.0
        %2622 = vmatpush1.msra.mxu0 0.0
        %2623 = vmatprep.subr.mxu0 0.0
        %2624 = vmatpush1.msra.mxu0 0.0
        %2625 = vmatprep.subr.mxu0 0.0
        %2626 = vmatpush1.msra.mxu0 0.0
        %2627 = vmatprep.subr.mxu0 0.0
        %2628 = vmatpush1.msra.mxu0 0.0
        %2629 = vmatprep.subr.mxu0 0.0
        %2630 = vmatpush1.msra.mxu0 0.0
        %2631 = vmatprep.subr.mxu0 0.0
        %2632 = vmatpush1.msra.mxu0 0.0
        %2633 = vmatprep.subr.mxu0 0.0
        %2634 = vmatpush1.msra.mxu0 0.0
        %2635 = vmatprep.subr.mxu0 0.0
        %2636 = vmatpush1.msra.mxu0 0.0
        %2637 = vmatprep.subr.mxu0 0.0
        %2638 = vmatpush1.msra.mxu0 0.0
        %2639 = vmatprep.subr.mxu0 0.0
        %2640 = vmatpush1.msra.mxu0 0.0
        %2641 = vmatprep.subr.mxu0 0.0
        %2642 = vmatpush1.msra.mxu0 0.0
        %2643 = vmatprep.subr.mxu0 0.0
        %2644 = vmatpush1.msra.mxu0 0.0
        %2645 = vmatprep.subr.mxu0 0.0
        %2646 = vmatpush1.msra.mxu0 0.0
        %2647 = vmatprep.subr.mxu0 0.0
        %2648 = vmatpush1.msra.mxu0 0.0
        %2649 = vmatprep.subr.mxu0 0.0
        %2650 = vmatpush1.msra.mxu0 %v2614
        %2651 = vmatprep.subr.mxu0 0.0
        %2652 = vmatpush2.msra.mxu0 0.0
        %2653 = vmatprep.subr.mxu0 0.0
        %2654 = vmatpush2.msra.mxu0 0.0
        %2655 = vmatprep.subr.mxu0 0.0
        %2656 = vmatpush2.msra.mxu0 0.0
        %2657 = vmatprep.subr.mxu0 0.0
        %2658 = vmatpush2.msra.mxu0 0.0
        %2659 = vmatprep.subr.mxu0 0.0
        %2660 = vmatpush2.msra.mxu0 0.0
        %2661 = vmatprep.subr.mxu0 0.0
        %2662 = vmatpush2.msra.mxu0 0.0
        %2663 = vmatprep.subr.mxu0 0.0
        %2664 = vmatpush2.msra.mxu0 0.0
        %2665 = vmatprep.subr.mxu0 0.0
        %2666 = vmatpush2.msra.mxu0 0.0
        %2667 = vmatprep.subr.mxu0 0.0
        %2668 = vmatpush2.msra.mxu0 0.0
        %2669 = vmatprep.subr.mxu0 0.0
        %2670 = vmatpush2.msra.mxu0 0.0
        %2671 = vmatprep.subr.mxu0 0.0
        %2672 = vmatpush2.msra.mxu0 0.0
        %2673 = vmatprep.subr.mxu0 0.0
        %2674 = vmatpush2.msra.mxu0 0.0
        %2675 = vmatprep.subr.mxu0 0.0
        %2676 = vmatpush2.msra.mxu0 0.0
        %2677 = vmatprep.subr.mxu0 0.0
        %2678 = vmatpush2.msra.mxu0 0.0
        %2679 = vmatprep.subr.mxu0 0.0
        %2680 = vmatpush2.msra.mxu0 0.0
        %2681 = vmatprep.subr.mxu0 0.0
        %2682 = vmatpush2.msra.mxu0 0.0
        %2683 = vmatprep.mubr.f32.mxu0 0.0
        %2684 = vmatmul.mubr.f32.gmra.mxu0 %v2617
        %v2685 = vpop.f32.mrf.mxu0
        %v2686 = vadd.f32 0.0, %v2685
        %v2687 = vpop.f32.mrf.mxu0
        %2688 = vdwg.mxu0
        %v2690 = vsel %vm756, %v2686, 0
        %2692 = vmatprep.subr.mxu0 0.0
        %2693 = vmatpush1.msra.mxu0 0.0
        %2694 = vmatprep.subr.mxu0 0.0
        %2695 = vmatpush1.msra.mxu0 0.0
        %2696 = vmatprep.subr.mxu0 0.0
        %2697 = vmatpush1.msra.mxu0 0.0
        %2698 = vmatprep.subr.mxu0 0.0
        %2699 = vmatpush1.msra.mxu0 0.0
        %2700 = vmatprep.subr.mxu0 0.0
        %2701 = vmatpush1.msra.mxu0 0.0
        %2702 = vmatprep.subr.mxu0 0.0
        %2703 = vmatpush1.msra.mxu0 0.0
        %2704 = vmatprep.subr.mxu0 0.0
        %2705 = vmatpush1.msra.mxu0 0.0
        %2706 = vmatprep.subr.mxu0 0.0
        %2707 = vmatpush1.msra.mxu0 0.0
        %2708 = vmatprep.subr.mxu0 0.0
        %2709 = vmatpush1.msra.mxu0 0.0
        %2710 = vmatprep.subr.mxu0 0.0
        %2711 = vmatpush1.msra.mxu0 0.0
        %2712 = vmatprep.subr.mxu0 0.0
        %2713 = vmatpush1.msra.mxu0 0.0
        %2714 = vmatprep.subr.mxu0 0.0
        %2715 = vmatpush1.msra.mxu0 0.0
        %2716 = vmatprep.subr.mxu0 0.0
        %2717 = vmatpush1.msra.mxu0 0.0
        %2718 = vmatprep.subr.mxu0 0.0
        %2719 = vmatpush1.msra.mxu0 0.0
        %2720 = vmatprep.subr.mxu0 0.0
        %2721 = vmatpush1.msra.mxu0 0.0
        %2722 = vmatprep.subr.mxu0 0.0
        %2723 = vmatpush1.msra.mxu0 %v1963
        %2724 = vmatprep.subr.mxu0 0.0
        %2725 = vmatpush2.msra.mxu0 0.0
        %2726 = vmatprep.subr.mxu0 0.0
        %2727 = vmatpush2.msra.mxu0 0.0
        %2728 = vmatprep.subr.mxu0 0.0
        %2729 = vmatpush2.msra.mxu0 0.0
        %2730 = vmatprep.subr.mxu0 0.0
        %2731 = vmatpush2.msra.mxu0 0.0
        %2732 = vmatprep.subr.mxu0 0.0
        %2733 = vmatpush2.msra.mxu0 0.0
        %2734 = vmatprep.subr.mxu0 0.0
        %2735 = vmatpush2.msra.mxu0 0.0
        %2736 = vmatprep.subr.mxu0 0.0
        %2737 = vmatpush2.msra.mxu0 0.0
        %2738 = vmatprep.subr.mxu0 0.0
        %2739 = vmatpush2.msra.mxu0 0.0
        %2740 = vmatprep.subr.mxu0 0.0
        %2741 = vmatpush2.msra.mxu0 0.0
        %2742 = vmatprep.subr.mxu0 0.0
        %2743 = vmatpush2.msra.mxu0 0.0
        %2744 = vmatprep.subr.mxu0 0.0
        %2745 = vmatpush2.msra.mxu0 0.0
        %2746 = vmatprep.subr.mxu0 0.0
        %2747 = vmatpush2.msra.mxu0 0.0
        %2748 = vmatprep.subr.mxu0 0.0
        %2749 = vmatpush2.msra.mxu0 0.0
        %2750 = vmatprep.subr.mxu0 0.0
        %2751 = vmatpush2.msra.mxu0 0.0
        %2752 = vmatprep.subr.mxu0 0.0
        %2753 = vmatpush2.msra.mxu0 0.0
        %2754 = vmatprep.subr.mxu0 0.0
        %2755 = vmatpush2.msra.mxu0 0.0
        %2756 = vmatprep.mubr.f32.mxu0 0.0
        %2757 = vmatmul.mubr.f32.gmra.mxu0 %v2690
        %v2758 = vpop.f32.mrf.mxu0
        %v2759 = vadd.f32 0.0, %v2758
        %v2760 = vpop.f32.mrf.mxu0
        %2761 = vdwg.mxu0
        %v2762 = vadd.f32 %v2520, %v2759
        %2763 = vrot.lane.b32.xlu0 %v2043, 104
        %v2764 = vpop.permute.xlu0 %2763
        %2765 = vrot.lane.b32.xlu0 %v2043, 72
        %v2766 = vpop.permute.xlu0 %2765
        %v2767 = vsel %vm756, %v2764, 0
        %v2769 = vsel %vm756, %v2766, 0
        %2771 = vmatprep.subr.mxu0 0.0
        %2772 = vmatpush1.xpose.msra.mxu0 0.0
        %2773 = vmatprep.subr.mxu0 0.0
        %2774 = vmatpush1.xpose.msra.mxu0 0.0
        %2775 = vmatprep.subr.mxu0 0.0
        %2776 = vmatpush1.xpose.msra.mxu0 0.0
        %2777 = vmatprep.subr.mxu0 0.0
        %2778 = vmatpush1.xpose.msra.mxu0 0.0
        %2779 = vmatprep.subr.mxu0 0.0
        %2780 = vmatpush1.xpose.msra.mxu0 0.0
        %2781 = vmatprep.subr.mxu0 0.0
        %2782 = vmatpush1.xpose.msra.mxu0 0.0
        %2783 = vmatprep.subr.mxu0 0.0
        %2784 = vmatpush1.xpose.msra.mxu0 0.0
        %2785 = vmatprep.subr.mxu0 0.0
        %2786 = vmatpush1.xpose.msra.mxu0 0.0
        %2787 = vmatprep.subr.mxu0 0.0
        %2788 = vmatpush1.xpose.msra.mxu0 0.0
        %2789 = vmatprep.subr.mxu0 0.0
        %2790 = vmatpush1.xpose.msra.mxu0 0.0
        %2791 = vmatprep.subr.mxu0 0.0
        %2792 = vmatpush1.xpose.msra.mxu0 0.0
        %2793 = vmatprep.subr.mxu0 0.0
        %2794 = vmatpush1.xpose.msra.mxu0 0.0
        %2795 = vmatprep.subr.mxu0 0.0
        %2796 = vmatpush1.xpose.msra.mxu0 0.0
        %2797 = vmatprep.subr.mxu0 0.0
        %2798 = vmatpush1.xpose.msra.mxu0 0.0
        %2799 = vmatprep.subr.mxu0 0.0
        %2800 = vmatpush1.xpose.msra.mxu0 0.0
        %2801 = vmatprep.subr.mxu0 0.0
        %2802 = vmatpush1.xpose.msra.mxu0 %v2769
        %2803 = vmatprep.subr.mxu0 0.0
        %2804 = vmatpush2.xpose.msra.mxu0 0.0
        %2805 = vmatprep.subr.mxu0 0.0
        %2806 = vmatpush2.xpose.msra.mxu0 0.0
        %2807 = vmatprep.subr.mxu0 0.0
        %2808 = vmatpush2.xpose.msra.mxu0 0.0
        %2809 = vmatprep.subr.mxu0 0.0
        %2810 = vmatpush2.xpose.msra.mxu0 0.0
        %2811 = vmatprep.subr.mxu0 0.0
        %2812 = vmatpush2.xpose.msra.mxu0 0.0
        %2813 = vmatprep.subr.mxu0 0.0
        %2814 = vmatpush2.xpose.msra.mxu0 0.0
        %2815 = vmatprep.subr.mxu0 0.0
        %2816 = vmatpush2.xpose.msra.mxu0 0.0
        %2817 = vmatprep.subr.mxu0 0.0
        %2818 = vmatpush2.xpose.msra.mxu0 0.0
        %2819 = vmatprep.subr.mxu0 0.0
        %2820 = vmatpush2.xpose.msra.mxu0 0.0
        %2821 = vmatprep.subr.mxu0 0.0
        %2822 = vmatpush2.xpose.msra.mxu0 0.0
        %2823 = vmatprep.subr.mxu0 0.0
        %2824 = vmatpush2.xpose.msra.mxu0 0.0
        %2825 = vmatprep.subr.mxu0 0.0
        %2826 = vmatpush2.xpose.msra.mxu0 0.0
        %2827 = vmatprep.subr.mxu0 0.0
        %2828 = vmatpush2.xpose.msra.mxu0 0.0
        %2829 = vmatprep.subr.mxu0 0.0
        %2830 = vmatpush2.xpose.msra.mxu0 0.0
        %2831 = vmatprep.subr.mxu0 0.0
        %2832 = vmatpush2.xpose.msra.mxu0 0.0
        %2833 = vmatprep.subr.mxu0 0.0
        %2834 = vmatpush2.xpose.msra.mxu0 0.0
        %2835 = vmatprep.mubr.f32.mxu0 0.0
        %2836 = vmatmul.mubr.f32.gmra.mxu0 %v2767
        %v2837 = vpop.f32.mrf.mxu0
        %v2838 = vadd.f32 0.0, %v2837
        %v2839 = vpop.f32.mrf.mxu0
        %2840 = vdwg.mxu0
        %v2841 = vmul.f32 %v2838, 0.35355338
        %v2842 = vsel %vm756, %v2841, -inf
        %2843 = vmax.xlane.f32.xlu0 %v2842
        %v2844 = vpop.xlane.xlu0 %2843
        %v2845 = vsub.f32 %v2841, %v2844
        %v2846 = vmul.f32 %v2845, 1.442695
        %v2847 = vpow.pop %v2846
        %v2848 = vsel %vm756, %v2847, 0.0
        %2849 = vadd.xlane.f32.xlu0 %v2848
        %v2850 = vpop.xlane.xlu0 %2849
        %v2851 = vrcp.pop %v2850
        %v2852 = vmul.f32 %v2847, %v2851
        %2853 = vrot.lane.b32.xlu0 %v2043, 40
        %v2854 = vpop.permute.xlu0 %2853
        %v2857 = vsel %vm756, %v2852, 0
        %2859 = vmatprep.subr.mxu0 0.0
        %2860 = vmatpush1.msra.mxu0 0.0
        %2861 = vmatprep.subr.mxu0 0.0
        %2862 = vmatpush1.msra.mxu0 0.0
        %2863 = vmatprep.subr.mxu0 0.0
        %2864 = vmatpush1.msra.mxu0 0.0
        %2865 = vmatprep.subr.mxu0 0.0
        %2866 = vmatpush1.msra.mxu0 0.0
        %2867 = vmatprep.subr.mxu0 0.0
        %2868 = vmatpush1.msra.mxu0 0.0
        %2869 = vmatprep.subr.mxu0 0.0
        %2870 = vmatpush1.msra.mxu0 0.0
        %2871 = vmatprep.subr.mxu0 0.0
        %2872 = vmatpush1.msra.mxu0 0.0
        %2873 = vmatprep.subr.mxu0 0.0
        %2874 = vmatpush1.msra.mxu0 0.0
        %2875 = vmatprep.subr.mxu0 0.0
        %2876 = vmatpush1.msra.mxu0 0.0
        %2877 = vmatprep.subr.mxu0 0.0
        %2878 = vmatpush1.msra.mxu0 0.0
        %2879 = vmatprep.subr.mxu0 0.0
        %2880 = vmatpush1.msra.mxu0 0.0
        %2881 = vmatprep.subr.mxu0 0.0
        %2882 = vmatpush1.msra.mxu0 0.0
        %2883 = vmatprep.subr.mxu0 0.0
        %2884 = vmatpush1.msra.mxu0 0.0
        %2885 = vmatprep.subr.mxu0 0.0
        %2886 = vmatpush1.msra.mxu0 0.0
        %2887 = vmatprep.subr.mxu0 0.0
        %2888 = vmatpush1.msra.mxu0 0.0
        %2889 = vmatprep.subr.mxu0 0.0
        %2890 = vmatpush1.msra.mxu0 %v2854
        %2891 = vmatprep.subr.mxu0 0.0
        %2892 = vmatpush2.msra.mxu0 0.0
        %2893 = vmatprep.subr.mxu0 0.0
        %2894 = vmatpush2.msra.mxu0 0.0
        %2895 = vmatprep.subr.mxu0 0.0
        %2896 = vmatpush2.msra.mxu0 0.0
        %2897 = vmatprep.subr.mxu0 0.0
        %2898 = vmatpush2.msra.mxu0 0.0
        %2899 = vmatprep.subr.mxu0 0.0
        %2900 = vmatpush2.msra.mxu0 0.0
        %2901 = vmatprep.subr.mxu0 0.0
        %2902 = vmatpush2.msra.mxu0 0.0
        %2903 = vmatprep.subr.mxu0 0.0
        %2904 = vmatpush2.msra.mxu0 0.0
        %2905 = vmatprep.subr.mxu0 0.0
        %2906 = vmatpush2.msra.mxu0 0.0
        %2907 = vmatprep.subr.mxu0 0.0
        %2908 = vmatpush2.msra.mxu0 0.0
        %2909 = vmatprep.subr.mxu0 0.0
        %2910 = vmatpush2.msra.mxu0 0.0
        %2911 = vmatprep.subr.mxu0 0.0
        %2912 = vmatpush2.msra.mxu0 0.0
        %2913 = vmatprep.subr.mxu0 0.0
        %2914 = vmatpush2.msra.mxu0 0.0
        %2915 = vmatprep.subr.mxu0 0.0
        %2916 = vmatpush2.msra.mxu0 0.0
        %2917 = vmatprep.subr.mxu0 0.0
        %2918 = vmatpush2.msra.mxu0 0.0
        %2919 = vmatprep.subr.mxu0 0.0
        %2920 = vmatpush2.msra.mxu0 0.0
        %2921 = vmatprep.subr.mxu0 0.0
        %2922 = vmatpush2.msra.mxu0 0.0
        %2923 = vmatprep.mubr.f32.mxu0 0.0
        %2924 = vmatmul.mubr.f32.gmra.mxu0 %v2857
        %v2925 = vpop.f32.mrf.mxu0
        %v2926 = vadd.f32 0.0, %v2925
        %v2927 = vpop.f32.mrf.mxu0
        %2928 = vdwg.mxu0
        %v2930 = vsel %vm756, %v2926, 0
        %2932 = vmatprep.subr.mxu0 0.0
        %2933 = vmatpush1.msra.mxu0 0.0
        %2934 = vmatprep.subr.mxu0 0.0
        %2935 = vmatpush1.msra.mxu0 0.0
        %2936 = vmatprep.subr.mxu0 0.0
        %2937 = vmatpush1.msra.mxu0 0.0
        %2938 = vmatprep.subr.mxu0 0.0
        %2939 = vmatpush1.msra.mxu0 0.0
        %2940 = vmatprep.subr.mxu0 0.0
        %2941 = vmatpush1.msra.mxu0 0.0
        %2942 = vmatprep.subr.mxu0 0.0
        %2943 = vmatpush1.msra.mxu0 0.0
        %2944 = vmatprep.subr.mxu0 0.0
        %2945 = vmatpush1.msra.mxu0 0.0
        %2946 = vmatprep.subr.mxu0 0.0
        %2947 = vmatpush1.msra.mxu0 0.0
        %2948 = vmatprep.subr.mxu0 0.0
        %2949 = vmatpush1.msra.mxu0 0.0
        %2950 = vmatprep.subr.mxu0 0.0
        %2951 = vmatpush1.msra.mxu0 0.0
        %2952 = vmatprep.subr.mxu0 0.0
        %2953 = vmatpush1.msra.mxu0 0.0
        %2954 = vmatprep.subr.mxu0 0.0
        %2955 = vmatpush1.msra.mxu0 0.0
        %2956 = vmatprep.subr.mxu0 0.0
        %2957 = vmatpush1.msra.mxu0 0.0
        %2958 = vmatprep.subr.mxu0 0.0
        %2959 = vmatpush1.msra.mxu0 0.0
        %2960 = vmatprep.subr.mxu0 0.0
        %2961 = vmatpush1.msra.mxu0 0.0
        %2962 = vmatprep.subr.mxu0 0.0
        %2963 = vmatpush1.msra.mxu0 %v1964
        %2964 = vmatprep.subr.mxu0 0.0
        %2965 = vmatpush2.msra.mxu0 0.0
        %2966 = vmatprep.subr.mxu0 0.0
        %2967 = vmatpush2.msra.mxu0 0.0
        %2968 = vmatprep.subr.mxu0 0.0
        %2969 = vmatpush2.msra.mxu0 0.0
        %2970 = vmatprep.subr.mxu0 0.0
        %2971 = vmatpush2.msra.mxu0 0.0
        %2972 = vmatprep.subr.mxu0 0.0
        %2973 = vmatpush2.msra.mxu0 0.0
        %2974 = vmatprep.subr.mxu0 0.0
        %2975 = vmatpush2.msra.mxu0 0.0
        %2976 = vmatprep.subr.mxu0 0.0
        %2977 = vmatpush2.msra.mxu0 0.0
        %2978 = vmatprep.subr.mxu0 0.0
        %2979 = vmatpush2.msra.mxu0 0.0
        %2980 = vmatprep.subr.mxu0 0.0
        %2981 = vmatpush2.msra.mxu0 0.0
        %2982 = vmatprep.subr.mxu0 0.0
        %2983 = vmatpush2.msra.mxu0 0.0
        %2984 = vmatprep.subr.mxu0 0.0
        %2985 = vmatpush2.msra.mxu0 0.0
        %2986 = vmatprep.subr.mxu0 0.0
        %2987 = vmatpush2.msra.mxu0 0.0
        %2988 = vmatprep.subr.mxu0 0.0
        %2989 = vmatpush2.msra.mxu0 0.0
        %2990 = vmatprep.subr.mxu0 0.0
        %2991 = vmatpush2.msra.mxu0 0.0
        %2992 = vmatprep.subr.mxu0 0.0
        %2993 = vmatpush2.msra.mxu0 0.0
        %2994 = vmatprep.subr.mxu0 0.0
        %2995 = vmatpush2.msra.mxu0 0.0
        %2996 = vmatprep.mubr.f32.mxu0 0.0
        %2997 = vmatmul.mubr.f32.gmra.mxu0 %v2930
        %v2998 = vpop.f32.mrf.mxu0
        %v2999 = vadd.f32 0.0, %v2998
        %v3000 = vpop.f32.mrf.mxu0
        %3001 = vdwg.mxu0
        %v3002 = vadd.f32 %v2762, %v2999
        %v3004 = vlaneseq
        %v3005 = vshrl.u32 %v3004, 7
        %v3006 = vsub.s32 0, %v3005
        %v3007 = vrot.slane %v1966, %v3006
        %v3009 = vadd.f32 %v3002, %v3007
        %s3010 = scalar_lea.vmem %s12, 1
        %v3011 = vld [vmem:[%s3010] sm:$0x1]
        %s3012 = scalar_lea.vmem %s13, 1
        %v3013 = vld [vmem:[%s3012] sm:$0x1]
        %v3014 = vadd.f32 %v1952, %v3009
        %v3015 = vsel %vm679, %v3014, 0.0
        %3016 = vadd.xlane.f32.xlu0 %v3015
        %v3017 = vpop.xlane.xlu0 %3016
        %v3018 = vmul.f32 %v3017, %v1724
        %v3019 = vsub.f32 %v3014, %v3018
        %v3020 = vmul.f32 %v3019, %v3019
        %v3021 = vsel %vm679, %v3020, 0.0
        %3022 = vadd.xlane.f32.xlu0 %v3021
        %v3023 = vpop.xlane.xlu0 %3022
        %v3024 = vmul.f32 %v3023, %v1724
        %v3025 = vadd.f32 %v3024, 1e-05
        %v3026 = vrsqrt.pop %v3025
        %v3027 = vmul.f32 %v3019, %v3026
        %v3029 = vlaneseq
        %v3030 = vshrl.u32 %v3029, 7
        %v3031 = vsub.s32 0, %v3030
        %v3032 = vrot.slane %v3011, %v3031
        %v3034 = vmul.f32 %v3027, %v3032
        %v3036 = vlaneseq
        %v3037 = vshrl.u32 %v3036, 7
        %v3038 = vsub.s32 0, %v3037
        %v3039 = vrot.slane %v3013, %v3038
        %v3041 = vadd.f32 %v3034, %v3039
        %s3042 = scalar_lea.vmem %s8, 32
        %v3043 = vld [vmem:[%s3042] sm:$0xff]
        %v3044 = vld [vmem:[%s3042 + $0x8] sm:$0xff]
        %v3045 = vld [vmem:[%s3042 + $0x10] sm:$0xff]
        %v3046 = vld [vmem:[%s3042 + $0x18] sm:$0xff]
        %s3047 = scalar_lea.vmem %s9, 1
        %v3048 = vld [vmem:[%s3047] sm:$0x1]
        %v3050 = vlaneseq
        %v3051 = vshrl.u32 %v3050, 7
        %v3052 = vsub.s32 0, %v3051
        %v3053 = vrot.slane %v3048, %v3052
        %v3056 = vsel %vm679, %v3041, 0
        %3058 = vmatprep.subr.mxu0 0.0
        %3059 = vmatpush1.msra.mxu0 0.0
        %3060 = vmatprep.subr.mxu0 0.0
        %3061 = vmatpush1.msra.mxu0 0.0
        %3062 = vmatprep.subr.mxu0 0.0
        %3063 = vmatpush1.msra.mxu0 0.0
        %3064 = vmatprep.subr.mxu0 0.0
        %3065 = vmatpush1.msra.mxu0 0.0
        %3066 = vmatprep.subr.mxu0 0.0
        %3067 = vmatpush1.msra.mxu0 0.0
        %3068 = vmatprep.subr.mxu0 0.0
        %3069 = vmatpush1.msra.mxu0 0.0
        %3070 = vmatprep.subr.mxu0 0.0
        %3071 = vmatpush1.msra.mxu0 0.0
        %3072 = vmatprep.subr.mxu0 0.0
        %3073 = vmatpush1.msra.mxu0 0.0
        %3074 = vmatprep.subr.mxu0 0.0
        %3075 = vmatpush1.msra.mxu0 0.0
        %3076 = vmatprep.subr.mxu0 0.0
        %3077 = vmatpush1.msra.mxu0 0.0
        %3078 = vmatprep.subr.mxu0 0.0
        %3079 = vmatpush1.msra.mxu0 0.0
        %3080 = vmatprep.subr.mxu0 0.0
        %3081 = vmatpush1.msra.mxu0 0.0
        %3082 = vmatprep.subr.mxu0 0.0
        %3083 = vmatpush1.msra.mxu0 %v3046
        %3084 = vmatprep.subr.mxu0 0.0
        %3085 = vmatpush1.msra.mxu0 %v3045
        %3086 = vmatprep.subr.mxu0 0.0
        %3087 = vmatpush1.msra.mxu0 %v3044
        %3088 = vmatprep.subr.mxu0 0.0
        %3089 = vmatpush1.msra.mxu0 %v3043
        %3090 = vmatprep.subr.mxu0 0.0
        %3091 = vmatpush2.msra.mxu0 0.0
        %3092 = vmatprep.subr.mxu0 0.0
        %3093 = vmatpush2.msra.mxu0 0.0
        %3094 = vmatprep.subr.mxu0 0.0
        %3095 = vmatpush2.msra.mxu0 0.0
        %3096 = vmatprep.subr.mxu0 0.0
        %3097 = vmatpush2.msra.mxu0 0.0
        %3098 = vmatprep.subr.mxu0 0.0
        %3099 = vmatpush2.msra.mxu0 0.0
        %3100 = vmatprep.subr.mxu0 0.0
        %3101 = vmatpush2.msra.mxu0 0.0
        %3102 = vmatprep.subr.mxu0 0.0
        %3103 = vmatpush2.msra.mxu0 0.0
        %3104 = vmatprep.subr.mxu0 0.0
        %3105 = vmatpush2.msra.mxu0 0.0
        %3106 = vmatprep.subr.mxu0 0.0
        %3107 = vmatpush2.msra.mxu0 0.0
        %3108 = vmatprep.subr.mxu0 0.0
        %3109 = vmatpush2.msra.mxu0 0.0
        %3110 = vmatprep.subr.mxu0 0.0
        %3111 = vmatpush2.msra.mxu0 0.0
        %3112 = vmatprep.subr.mxu0 0.0
        %3113 = vmatpush2.msra.mxu0 0.0
        %3114 = vmatprep.subr.mxu0 0.0
        %3115 = vmatpush2.msra.mxu0 0.0
        %3116 = vmatprep.subr.mxu0 0.0
        %3117 = vmatpush2.msra.mxu0 0.0
        %3118 = vmatprep.subr.mxu0 0.0
        %3119 = vmatpush2.msra.mxu0 0.0
        %3120 = vmatprep.subr.mxu0 0.0
        %3121 = vmatpush2.msra.mxu0 0.0
        %3122 = vmatprep.mubr.f32.mxu0 0.0
        %3123 = vmatmul.mubr.f32.gmra.mxu0 %v3056
        %v3124 = vpop.f32.mrf.mxu0
        %v3125 = vadd.f32 %v3053, %v3124
        %v3126 = vpop.f32.mrf.mxu0
        %3127 = vdwg.mxu0
        %v3128 = vmax.f32 %v3125, 0.0
        %s3129 = scalar_lea.vmem %s10, 64
        %v3130 = vld [vmem:[%s3129] sm:$0xff]
        %v3131 = vld [vmem:[%s3129 + $0x8] sm:$0xff]
        %v3132 = vld [vmem:[%s3129 + $0x10] sm:$0xff]
        %v3133 = vld [vmem:[%s3129 + $0x18] sm:$0xff]
        %v3134 = vld [vmem:[%s3129 + $0x20] sm:$0xff]
        %v3135 = vld [vmem:[%s3129 + $0x28] sm:$0xff]
        %v3136 = vld [vmem:[%s3129 + $0x30] sm:$0xff]
        %v3137 = vld [vmem:[%s3129 + $0x38] sm:$0xff]
        %s3138 = scalar_lea.vmem %s11, 1
        %v3139 = vld [vmem:[%s3138] sm:$0x1]
        %v3141 = vlaneseq
        %v3142 = vshrl.u32 %v3141, 7
        %v3143 = vsub.s32 0, %v3142
        %v3144 = vrot.slane %v3139, %v3143
        %v3147 = vsel %vm1849, %v3128, 0
        %3149 = vmatprep.subr.mxu0 0.0
        %3150 = vmatpush1.msra.mxu0 0.0
        %3151 = vmatprep.subr.mxu0 0.0
        %3152 = vmatpush1.msra.mxu0 0.0
        %3153 = vmatprep.subr.mxu0 0.0
        %3154 = vmatpush1.msra.mxu0 0.0
        %3155 = vmatprep.subr.mxu0 0.0
        %3156 = vmatpush1.msra.mxu0 0.0
        %3157 = vmatprep.subr.mxu0 0.0
        %3158 = vmatpush1.msra.mxu0 0.0
        %3159 = vmatprep.subr.mxu0 0.0
        %3160 = vmatpush1.msra.mxu0 0.0
        %3161 = vmatprep.subr.mxu0 0.0
        %3162 = vmatpush1.msra.mxu0 0.0
        %3163 = vmatprep.subr.mxu0 0.0
        %3164 = vmatpush1.msra.mxu0 0.0
        %3165 = vmatprep.subr.mxu0 0.0
        %3166 = vmatpush1.msra.mxu0 %v3137
        %3167 = vmatprep.subr.mxu0 0.0
        %3168 = vmatpush1.msra.mxu0 %v3136
        %3169 = vmatprep.subr.mxu0 0.0
        %3170 = vmatpush1.msra.mxu0 %v3135
        %3171 = vmatprep.subr.mxu0 0.0
        %3172 = vmatpush1.msra.mxu0 %v3134
        %3173 = vmatprep.subr.mxu0 0.0
        %3174 = vmatpush1.msra.mxu0 %v3133
        %3175 = vmatprep.subr.mxu0 0.0
        %3176 = vmatpush1.msra.mxu0 %v3132
        %3177 = vmatprep.subr.mxu0 0.0
        %3178 = vmatpush1.msra.mxu0 %v3131
        %3179 = vmatprep.subr.mxu0 0.0
        %3180 = vmatpush1.msra.mxu0 %v3130
        %3181 = vmatprep.subr.mxu0 0.0
        %3182 = vmatpush2.msra.mxu0 0.0
        %3183 = vmatprep.subr.mxu0 0.0
        %3184 = vmatpush2.msra.mxu0 0.0
        %3185 = vmatprep.subr.mxu0 0.0
        %3186 = vmatpush2.msra.mxu0 0.0
        %3187 = vmatprep.subr.mxu0 0.0
        %3188 = vmatpush2.msra.mxu0 0.0
        %3189 = vmatprep.subr.mxu0 0.0
        %3190 = vmatpush2.msra.mxu0 0.0
        %3191 = vmatprep.subr.mxu0 0.0
        %3192 = vmatpush2.msra.mxu0 0.0
        %3193 = vmatprep.subr.mxu0 0.0
        %3194 = vmatpush2.msra.mxu0 0.0
        %3195 = vmatprep.subr.mxu0 0.0
        %3196 = vmatpush2.msra.mxu0 0.0
        %3197 = vmatprep.subr.mxu0 0.0
        %3198 = vmatpush2.msra.mxu0 0.0
        %3199 = vmatprep.subr.mxu0 0.0
        %3200 = vmatpush2.msra.mxu0 0.0
        %3201 = vmatprep.subr.mxu0 0.0
        %3202 = vmatpush2.msra.mxu0 0.0
        %3203 = vmatprep.subr.mxu0 0.0
        %3204 = vmatpush2.msra.mxu0 0.0
        %3205 = vmatprep.subr.mxu0 0.0
        %3206 = vmatpush2.msra.mxu0 0.0
        %3207 = vmatprep.subr.mxu0 0.0
        %3208 = vmatpush2.msra.mxu0 0.0
        %3209 = vmatprep.subr.mxu0 0.0
        %3210 = vmatpush2.msra.mxu0 0.0
        %3211 = vmatprep.subr.mxu0 0.0
        %3212 = vmatpush2.msra.mxu0 0.0
        %3213 = vmatprep.mubr.f32.mxu0 0.0
        %3214 = vmatmul.mubr.f32.gmra.mxu0 %v3147
        %v3215 = vpop.f32.mrf.mxu0
        %v3216 = vadd.f32 %v3144, %v3215
        %v3217 = vpop.f32.mrf.mxu0
        %3218 = vdwg.mxu0
        %s3219 = scalar_lea.vmem %s14, 1
        %v3220 = vld [vmem:[%s3219] sm:$0x1]
        %s3221 = scalar_lea.vmem %s15, 1
        %v3222 = vld [vmem:[%s3221] sm:$0x1]
        %v3223 = vadd.f32 %v3041, %v3216
        %v3224 = vsel %vm679, %v3223, 0.0
        %3225 = vadd.xlane.f32.xlu0 %v3224
        %v3226 = vpop.xlane.xlu0 %3225
        %v3227 = vmul.f32 %v3226, %v1724
        %v3228 = vsub.f32 %v3223, %v3227
        %v3229 = vmul.f32 %v3228, %v3228
        %v3230 = vsel %vm679, %v3229, 0.0
        %3231 = vadd.xlane.f32.xlu0 %v3230
        %v3232 = vpop.xlane.xlu0 %3231
        %v3233 = vmul.f32 %v3232, %v1724
        %v3234 = vadd.f32 %v3233, 1e-05
        %v3235 = vrsqrt.pop %v3234
        %v3236 = vmul.f32 %v3228, %v3235
        %v3238 = vlaneseq
        %v3239 = vshrl.u32 %v3238, 7
        %v3240 = vsub.s32 0, %v3239
        %v3241 = vrot.slane %v3220, %v3240
        %v3243 = vmul.f32 %v3236, %v3241
        %v3245 = vlaneseq
        %v3246 = vshrl.u32 %v3245, 7
        %v3247 = vsub.s32 0, %v3246
        %v3248 = vrot.slane %v3222, %v3247
        %v3250 = vadd.f32 %v3243, %v3248
        %v3251 = vsel %vm679, %v3250, 0.0
        %v3252 = vrot.slane %v3251, 4
        %v3253 = vadd.f32 %v3251, %v3252
        %v3254 = vrot.slane %v3253, 2
        %v3255 = vadd.f32 %v3253, %v3254
        %v3256 = vrot.slane %v3255, 1
        %v3257 = vadd.f32 %v3255, %v3256
        %v3258 = vrcp.pop 8.0
        %v3259 = vmul.f32 %v3257, %v3258
        %vm3260 = vcmask 253952
        %3261 = vst.msk [vmem:[%s575] sm:$0x1] %vm3260, %v3259
        %s3262 = sand.u32 %s384, 1
        %s3263 = scalar_lea.sflag [#allocation4], %s3262
        %s3264 = sand.u32 %s384, 1
        %s3265 = scalar_lea.vmem [#allocation10], %s3264
        // Predicated region
        $region101: #{tpu_custom_call.1} parent=83 // pred_check
          %p3266 = pneg %p394
        $region102: #{tpu_custom_call.1} parent=83 // pred_check_branch
          %3268 = sbr.rel (%p3266) target = $region104
        $region103: #{tpu_custom_call.1} parent=83 // pred_region
          %s3270 = ssub.s32 16, 16
          %3271 = vsyncadd %s3263, %s3270
          %s3272 = smul.addr %s35, 16
          %s3273 = scalar_lea.hbm %s16, %s3272
          %s3275 = sshll.u32 %s3265, 4
          %s3276 = int_to_ptr.vmem [resolvable:$true] %s3275
          %3278 = dma.vmem_to_hbm [thread:$0]  %s3276, 16, %s3273, %s3263
        $region104: #{tpu_custom_call.1} parent=83 // pred_fallthru
          _
      $region84: #{tpu_custom_call.1} parent=5 // pred_fallthru
        _
      %p3279 = scmp.le.s32.totalorder 2, %s30
      // Predicated region
      $region105: #{tpu_custom_call.1} parent=5 // pred_check
        %p3280 = pneg %p3279
      $region106: #{tpu_custom_call.1} parent=5 // pred_check_branch
        %3282 = sbr.rel (%p3280) target = $region108
      $region107: #{tpu_custom_call.1} parent=5 // pred_region
        %s3283 = ssub.s32 %s30, 2
        // Predicated region
        $region109: #{tpu_custom_call.1} parent=107 // pred_check
          %p3284 = pneg %p400
        $region110: #{tpu_custom_call.1} parent=107 // pred_check_branch
          %3286 = sbr.rel (%p3284) target = $region112
        $region111: #{tpu_custom_call.1} parent=107 // pred_region
          %s3287 = sand.u32 %s385, 1
          %s3288 = scalar_lea.sflag [#allocation4], %s3287
          %s3289 = sand.u32 %s385, 1
          %s3290 = scalar_lea.vmem [#allocation10], %s3289
          %3291 = dma.done %s3288, 16
        $region112: #{tpu_custom_call.1} parent=107 // pred_fallthru
          _
      $region108: #{tpu_custom_call.1} parent=5 // pred_fallthru
        _
    $region6: #{tpu_custom_call.1} parent=1 // loop_footer
      %s34 = sadd.s32 1, %s30
    $region7: #{tpu_custom_call.1} parent=1 // loop_footer_branch
      %29 = sbr.rel target = $region3
    $region8: #{tpu_custom_call.1} parent=1 // loop_exit
      _
    %3292 = vsyncpa [#allocation3], 1
    %s3293 = scalar_lea.sflag [#allocation3], 1
    %3294 = vsyncpa %s3293, 1
    %3295 = vsyncpa [#allocation6], 1
    %3296 = vsyncpa [#allocation9], 1
    %3297 = vsyncpa [#allocation4], 1
    %s3298 = scalar_lea.sflag [#allocation4], 1
    %3299 = vsyncpa %s3298, 1

</llo_original>
